<compile_context>
chip_gen: v5e
topology: v5e:2x2
jax: 0.10.0
libtpu: 0.0.40
codegen_flags: <defaults>
</compile_context>

<pallas_src>
import jax
import jax.numpy as jnp
from jax.experimental import pallas as pl
from jax.experimental.pallas import tpu as pltpu

# ----------------------------- static geometry -----------------------------
KERNEL_SIZE = 9
STRIDE = 2
NK = 3                       # num_kernel
INPUT_SIZE = 784             # forward() hard-codes 1092 = (4*NK) * 91  =>  input length 784
HIDDEN = 512
NUM_CLASSES = 10
BN_EPS = 1e-5

L1, L2, L3 = 388, 190, 91    # conv output lengths for the (L - 9)//2 + 1 chain from 784
NP1, NP2 = 4, 2              # polyphase splits of act1 / act2 lane layouts
Q1, Q2 = L1 // NP1, L2 // NP2        # 97, 95
FEATURES = 4 * NK * L3               # 1092


# ------------------------------- fused kernel ------------------------------
def _cnn1d_kernel(
    x_ref,                                   # (9, B*388) f32: conv1 im2col of the raw signal
    w0_ref, b0_ref, g0_ref, s0_ref,          # conv1 (1->3):   (3,9)   (3,1)  (3,1)  (3,1)
    w1_ref, b1_ref, g1_ref, s1_ref,          # conv2 (3->6):   (6,27)  (6,1)  ...
    w2_ref, b2_ref, g2_ref, s2_ref,          # conv3 (6->12):  (12,54) (12,1) ...
    wf1_ref, bf1_ref, gf_ref, sf_ref,        # fc1 (1092->512): (1092,512) bf16, (1,512) ...
    wf2_ref, bf2_ref,                        # fc2 (512->10):  (512,10), (1,10)
    out_ref,                                 # (B, 10)
    act1_ref, rhs2_ref, act2_ref, rhs3_ref, feat_ref, flat_ref):
  f32 = jnp.float32
  batch = out_ref.shape[0]

  def bn_lanes(pre, gamma, beta):
    """Training-mode BatchNorm1d; stats per channel over ALL lanes (= batch * positions)."""
    n = float(pre.shape[1])
    mean = jnp.sum(pre, axis=1, keepdims=True) / n
    var = jnp.maximum(jnp.sum(pre * pre, axis=1, keepdims=True) / n - mean * mean, 0.0)
    scale = gamma * jax.lax.rsqrt(var + BN_EPS)
    return pre * scale + (beta - mean * scale)

  # ---- conv1 + ReLU + BN(3): ONE (3,9)@(9, B*388) matmul on the pre-built im2col. ----
  # act1 lane layout: segment (b, p) of width 97 holds output positions l1 = 4*m + p.
  pre1 = jnp.dot(w0_ref[...], x_ref[...], preferred_element_type=f32) + b0_ref[...]
  act1_ref[...] = bn_lanes(jnp.maximum(pre1, 0.0), g0_ref[...], s0_ref[...])

  # ---- in-kernel im2col for conv2: rows 3k..3k+2 = tap k; lane segment (b,p2) width 95. --
  for k in range(KERNEL_SIZE):
    for b in range(batch):
      for p in range(NP2):
        off = 2 * p + k                                    # act1 position = 4*m2 + off
        src = (b * NP1 + off % NP1) * Q1 + off // NP1
        dst = (b * NP2 + p) * Q2
        rhs2_ref[pl.ds(NK * k, NK), pl.ds(dst, Q2)] = act1_ref[:, pl.ds(src, Q2)]
  # ---- conv2 + ReLU + BN(6): ONE (6,27)@(27, B*190) matmul. ----
  pre2 = jnp.dot(w1_ref[...], rhs2_ref[...], preferred_element_type=f32) + b1_ref[...]
  act2_ref[...] = bn_lanes(jnp.maximum(pre2, 0.0), g1_ref[...], s1_ref[...])

  # ---- im2col for conv3: rows 6k..6k+5 = tap k; lane segment b of width 91. ----
  for k in range(KERNEL_SIZE):
    for b in range(batch):
      src = (b * NP2 + k % NP2) * Q2 + k // NP2            # act2 position = 2*l3 + k
      rhs3_ref[pl.ds(2 * NK * k, 2 * NK), pl.ds(b * L3, L3)] = act2_ref[:, pl.ds(src, L3)]
  # ---- conv3 + ReLU + BN(12): ONE (12,54)@(54, B*91) matmul. ----
  pre3 = jnp.dot(w2_ref[...], rhs3_ref[...], preferred_element_type=f32) + b2_ref[...]
  feat_ref[...] = bn_lanes(jnp.maximum(pre3, 0.0), g2_ref[...], s2_ref[...])

  # ---- channel-major flatten (torch .view(-1,1092)): flat[b, c*91 + l] = feat[c, b*91 + l].
  for b in range(batch):
    for c in range(4 * NK):
      flat_ref[pl.ds(b, 1), pl.ds(c * L3, L3)] = feat_ref[pl.ds(c, 1), pl.ds(b * L3, L3)]

  # ---- classifier: ONE (B,1092)@(1092,512) bf16 matmul + ReLU + BN(512) + ONE fc2 dot. ----
  h = jnp.dot(flat_ref[...].astype(jnp.bfloat16), wf1_ref[...], preferred_element_type=f32)
  h = jnp.maximum(h + bf1_ref[...], 0.0)                   # (B, 512) f32
  nb = float(batch)
  mean = jnp.sum(h, axis=0, keepdims=True) / nb
  var = jnp.maximum(jnp.sum(h * h, axis=0, keepdims=True) / nb - mean * mean, 0.0)
  scale = gf_ref[...] * jax.lax.rsqrt(var + BN_EPS)
  h = h * scale + (sf_ref[...] - mean * scale)
  out_ref[...] = jnp.dot(h, wf2_ref[...], preferred_element_type=f32) + bf2_ref[...]


# ------------------------------- parameters --------------------------------
def init_params(key):
  """Deterministic synthetic parameters in the PyTorch module's native layouts."""
  params = {}
  chans = [(1, NK), (NK, 2 * NK), (2 * NK, 4 * NK)]        # (1,3), (3,6), (6,12)
  for i, (cin, cout) in enumerate(chans):
    key, kw, kb = jax.random.split(key, 3)
    params[f"conv{i}_w"] = 0.1 * jax.random.normal(kw, (cout, cin, KERNEL_SIZE), jnp.float32)
    params[f"conv{i}_b"] = 0.01 * jax.random.normal(kb, (cout,), jnp.float32)
    params[f"bn{i}_gamma"] = jnp.ones((cout,), jnp.float32)
    params[f"bn{i}_beta"] = jnp.zeros((cout,), jnp.float32)
  key, k1, k1b, k2, k2b = jax.random.split(key, 5)
  params["fc1_w"] = 0.02 * jax.random.normal(k1, (HIDDEN, FEATURES), jnp.float32)
  params["fc1_b"] = 0.01 * jax.random.normal(k1b, (HIDDEN,), jnp.float32)
  params["bn_fc_gamma"] = jnp.ones((HIDDEN,), jnp.float32)
  params["bn_fc_beta"] = jnp.zeros((HIDDEN,), jnp.float32)
  params["fc2_w"] = 0.02 * jax.random.normal(k2, (NUM_CLASSES, HIDDEN), jnp.float32)
  params["fc2_b"] = 0.01 * jax.random.normal(k2b, (NUM_CLASSES,), jnp.float32)
  return params


def prepare_params(tp):
  """One-time layout / dtype preparation (kept OFF the per-call forward path)."""
  prep = {}
  for i in range(3):
    w = tp[f"conv{i}_w"]                                   # (Cout, Cin, K)
    cout, cin, _ = w.shape
    # Tap-stacked im2col weight: column index = k*Cin + cin  (matches rhs row order).
    prep[f"w{i}"] = jnp.transpose(w, (0, 2, 1)).reshape(cout, KERNEL_SIZE * cin)
    prep[f"b{i}"] = tp[f"conv{i}_b"].reshape(cout, 1)
    prep[f"g{i}"] = tp[f"bn{i}_gamma"].reshape(cout, 1)
    prep[f"s{i}"] = tp[f"bn{i}_beta"].reshape(cout, 1)
  # fc1 weight (512, 1092), input index c*91 + l  ->  (1092, 512) bf16 for the MXU.
  prep["wf1"] = jnp.transpose(tp["fc1_w"]).astype(jnp.bfloat16)
  prep["bf1"] = tp["fc1_b"].reshape(1, HIDDEN)
  prep["gf"] = tp["bn_fc_gamma"].reshape(1, HIDDEN)
  prep["sf"] = tp["bn_fc_beta"].reshape(1, HIDDEN)
  prep["wf2"] = jnp.transpose(tp["fc2_w"])                 # (512, 10)
  prep["bf2"] = tp["fc2_b"].reshape(1, NUM_CLASSES)
  return prep


# --------------------------------- forward ---------------------------------
@jax.jit
def cnn1d_forward(sig, prep):
  """sig: (B, 1, 784) float32 (PyTorch NCW layout).  Returns logits (B, 10)."""
  assert sig.shape[1] == 1 and sig.shape[2] == INPUT_SIZE, sig.shape
  bsz = sig.shape[0]
  # Conv1 im2col of the tiny raw input (pure layout, done once per call in the wrapper):
  #   rhs1[k, (b*4 + p)*97 + m] = sig[b, 0, 8*m + 2*p + k]
  idx = (8 * jnp.arange(Q1)[None, None, :]
         + 2 * jnp.arange(NP1)[None, :, None]
         + jnp.arange(KERNEL_SIZE)[:, None, None])         # (9, 4, 97)
  x_flat = sig.astype(jnp.float32)[:, 0, :]                # (B, 784)
  rhs1 = x_flat[:, idx].transpose(1, 0, 2, 3).reshape(KERNEL_SIZE, bsz * NP1 * Q1)

  flops = 2 * bsz * (L1 * KERNEL_SIZE * 1 * NK
                     + L2 * KERNEL_SIZE * NK * (2 * NK)
                     + L3 * KERNEL_SIZE * (2 * NK) * (4 * NK)
                     + FEATURES * HIDDEN + HIDDEN * NUM_CLASSES)
  bytes_accessed = int(rhs1.size * 4 + prep["wf1"].size * 2 + prep["wf2"].size * 4
                       + bsz * NUM_CLASSES * 4 + 64 * 1024)

  return pl.pallas_call(
      _cnn1d_kernel,
      out_shape=jax.ShapeDtypeStruct((bsz, NUM_CLASSES), jnp.float32),
      scratch_shapes=[
          pltpu.VMEM((NK, bsz * NP1 * Q1), jnp.float32),                 # act1  (3,  B*388)
          pltpu.VMEM((NK * KERNEL_SIZE, bsz * NP2 * Q2), jnp.float32),   # rhs2  (27, B*190)
          pltpu.VMEM((2 * NK, bsz * NP2 * Q2), jnp.float32),             # act2  (6,  B*190)
          pltpu.VMEM((2 * NK * KERNEL_SIZE, bsz * L3), jnp.float32),     # rhs3  (54, B*91)
          pltpu.VMEM((4 * NK, bsz * L3), jnp.float32),                   # feat  (12, B*91)
          pltpu.VMEM((bsz, FEATURES), jnp.float32),                      # flat  (B, 1092)
      ],
      cost_estimate=pl.CostEstimate(flops=flops,
                                    transcendentals=NK + 2 * NK + 4 * NK + HIDDEN,
                                    bytes_accessed=bytes_accessed),
      compiler_params=pltpu.CompilerParams(vmem_limit_bytes=32 * 1024 * 1024),
  )(rhs1,
    prep["w0"], prep["b0"], prep["g0"], prep["s0"],
    prep["w1"], prep["b1"], prep["g1"], prep["s1"],
    prep["w2"], prep["b2"], prep["g2"], prep["s2"],
    prep["wf1"], prep["bf1"], prep["gf"], prep["sf"],
    prep["wf2"], prep["bf2"])


# --------------------------- plain-JAX reference ----------------------------
@jax.jit
def _reference_forward(sig, params):
  """Straightforward XLA implementation of the same forward pass (for self-check)."""
  hp = jax.lax.Precision.HIGHEST
  x = sig.astype(jnp.float32)                              # (B, 1, 784)
  for i in range(3):
    w = params[f"conv{i}_w"]
    lout = (x.shape[-1] - KERNEL_SIZE) // STRIDE + 1
    idx = jnp.arange(lout)[:, None] * STRIDE + jnp.arange(KERNEL_SIZE)[None, :]
    patches = x[:, :, idx]                                 # (B, Cin, Lout, K)
    y = jnp.einsum("bclk,ock->bol", patches, w, precision=hp) + params[f"conv{i}_b"][None, :, None]
    y = jnp.maximum(y, 0.0)
    mean = jnp.mean(y, axis=(0, 2), keepdims=True)
    var = jnp.mean((y - mean) ** 2, axis=(0, 2), keepdims=True)
    x = ((y - mean) * jax.lax.rsqrt(var + BN_EPS) * params[f"bn{i}_gamma"][None, :, None]
         + params[f"bn{i}_beta"][None, :, None])
  feat = x.reshape(x.shape[0], -1)                         # (B, 1092) channel-major
  h = jnp.dot(feat.astype(jnp.bfloat16), params["fc1_w"].T.astype(jnp.bfloat16),
              preferred_element_type=jnp.float32) + params["fc1_b"]
  h = jnp.maximum(h, 0.0)
  mean = jnp.mean(h, axis=0, keepdims=True)
  var = jnp.mean((h - mean) ** 2, axis=0, keepdims=True)
  h = (h - mean) * jax.lax.rsqrt(var + BN_EPS) * params["bn_fc_gamma"] + params["bn_fc_beta"]
  return jnp.dot(h, params["fc2_w"].T, precision=hp,
                 preferred_element_type=jnp.float32) + params["fc2_b"]


# ----------------------------------- main -----------------------------------
if __name__ == "__main__":
  key = jax.random.PRNGKey(0)
  kp, kx = jax.random.split(key)
  params = init_params(kp)
  prep = prepare_params(params)                            # one-time layout/dtype prep

  # forward() hard-codes 1092 = 12 * 91 features, which implies input length 784.
  sig = jax.random.normal(kx, (2, 1, INPUT_SIZE), jnp.float32)      # (B=2, C=1, L=784)

  logits = jax.block_until_ready(cnn1d_forward(sig, prep))
  assert logits.shape == (2, NUM_CLASSES), logits.shape
  assert bool(jnp.all(jnp.isfinite(logits)))

  # Cross-check the fused kernel against the plain-JAX/XLA reference of the same math.
  ref = jax.block_until_ready(_reference_forward(sig, params))
  max_err = float(jnp.max(jnp.abs(logits - ref)))
  assert max_err < 2e-2, f"kernel/reference mismatch: max abs err = {max_err}"

  print("KERNEL_OK")
</pallas_src>

<mosaic_0001>
module attributes {stable_mosaic.version = 11 : i64} {
  func.func @_cnn1d_kernel(%arg0: memref<9x776xf32, #tpu.memory_space<vmem>>, %arg1: memref<3x9xf32, #tpu.memory_space<vmem>>, %arg2: memref<3x1xf32, #tpu.memory_space<vmem>>, %arg3: memref<3x1xf32, #tpu.memory_space<vmem>>, %arg4: memref<3x1xf32, #tpu.memory_space<vmem>>, %arg5: memref<6x27xf32, #tpu.memory_space<vmem>>, %arg6: memref<6x1xf32, #tpu.memory_space<vmem>>, %arg7: memref<6x1xf32, #tpu.memory_space<vmem>>, %arg8: memref<6x1xf32, #tpu.memory_space<vmem>>, %arg9: memref<12x54xf32, #tpu.memory_space<vmem>>, %arg10: memref<12x1xf32, #tpu.memory_space<vmem>>, %arg11: memref<12x1xf32, #tpu.memory_space<vmem>>, %arg12: memref<12x1xf32, #tpu.memory_space<vmem>>, %arg13: memref<1092x512xbf16, #tpu.memory_space<vmem>>, %arg14: memref<1x512xf32, #tpu.memory_space<vmem>>, %arg15: memref<1x512xf32, #tpu.memory_space<vmem>>, %arg16: memref<1x512xf32, #tpu.memory_space<vmem>>, %arg17: memref<512x10xf32, #tpu.memory_space<vmem>>, %arg18: memref<1x10xf32, #tpu.memory_space<vmem>>, %arg19: memref<2x10xf32, #tpu.memory_space<vmem>>, %arg20: memref<3x776xf32, #tpu.memory_space<vmem>>, %arg21: memref<27x380xf32, #tpu.memory_space<vmem>>, %arg22: memref<6x380xf32, #tpu.memory_space<vmem>>, %arg23: memref<54x182xf32, #tpu.memory_space<vmem>>, %arg24: memref<12x182xf32, #tpu.memory_space<vmem>>, %arg25: memref<2x1092xf32, #tpu.memory_space<vmem>>) attributes {dimension_semantics = [], scalar_prefetch = 0 : i64, scratch_operands = 6 : i64, tpu.core_type = #tpu.core_type<tc>} {
    %c0 = arith.constant 0 : index
    %c0_0 = arith.constant 0 : index
    %0 = vector.load %arg1[%c0, %c0_0] : memref<3x9xf32, #tpu.memory_space<vmem>>, vector<3x9xf32>
    %c0_1 = arith.constant 0 : index
    %c0_2 = arith.constant 0 : index
    %1 = vector.load %arg0[%c0_1, %c0_2] : memref<9x776xf32, #tpu.memory_space<vmem>>, vector<9x776xf32>
    %cst = arith.constant dense<0.000000e+00> : vector<3x776xf32>
    %2 = tpu.matmul %0, %1, %cst {dimension_numbers = #tpu.dot_dimension_numbers<[1], [0], [0], [1], [0, 0, 1, 1], [], []>} : vector<3x9xf32>, vector<9x776xf32>, vector<3x776xf32> -> vector<3x776xf32>
    %c0_3 = arith.constant 0 : index
    %c0_4 = arith.constant 0 : index
    %3 = vector.load %arg2[%c0_3, %c0_4] : memref<3x1xf32, #tpu.memory_space<vmem>>, vector<3x1xf32>
    %4 = vector.broadcast %3 : vector<3x1xf32> to vector<3x776xf32>
    %5 = arith.addf %2, %4 : vector<3x776xf32>
    %cst_5 = arith.constant 0.000000e+00 : f32
    %6 = vector.broadcast %cst_5 : f32 to vector<3x776xf32>
    %7 = arith.maximumf %5, %6 : vector<3x776xf32>
    %c0_6 = arith.constant 0 : index
    %c0_7 = arith.constant 0 : index
    %8 = vector.load %arg3[%c0_6, %c0_7] : memref<3x1xf32, #tpu.memory_space<vmem>>, vector<3x1xf32>
    %c0_8 = arith.constant 0 : index
    %c0_9 = arith.constant 0 : index
    %9 = vector.load %arg4[%c0_8, %c0_9] : memref<3x1xf32, #tpu.memory_space<vmem>>, vector<3x1xf32>
    %cst_10 = arith.constant dense<0.000000e+00> : vector<3xf32>
    %10 = vector.multi_reduction <add>, %7, %cst_10 [1] : vector<3x776xf32> to vector<3xf32>
    %11 = vector.shape_cast %10 : vector<3xf32> to vector<3x1xf32>
    %cst_11 = arith.constant 7.760000e+02 : f32
    %12 = vector.broadcast %cst_11 : f32 to vector<3x1xf32>
    %13 = arith.divf %11, %12 : vector<3x1xf32>
    %14 = arith.mulf %7, %7 : vector<3x776xf32>
    %cst_12 = arith.constant dense<0.000000e+00> : vector<3xf32>
    %15 = vector.multi_reduction <add>, %14, %cst_12 [1] : vector<3x776xf32> to vector<3xf32>
    %16 = vector.shape_cast %15 : vector<3xf32> to vector<3x1xf32>
    %cst_13 = arith.constant 7.760000e+02 : f32
    %17 = vector.broadcast %cst_13 : f32 to vector<3x1xf32>
    %18 = arith.divf %16, %17 : vector<3x1xf32>
    %19 = arith.mulf %13, %13 : vector<3x1xf32>
    %20 = arith.subf %18, %19 : vector<3x1xf32>
    %cst_14 = arith.constant 0.000000e+00 : f32
    %21 = vector.broadcast %cst_14 : f32 to vector<3x1xf32>
    %22 = arith.maximumf %20, %21 : vector<3x1xf32>
    %cst_15 = arith.constant 9.99999974E-6 : f32
    %23 = vector.broadcast %cst_15 : f32 to vector<3x1xf32>
    %24 = arith.addf %22, %23 : vector<3x1xf32>
    %25 = math.rsqrt %24 : vector<3x1xf32>
    %26 = arith.mulf %8, %25 : vector<3x1xf32>
    %27 = vector.broadcast %26 : vector<3x1xf32> to vector<3x776xf32>
    %28 = arith.mulf %7, %27 : vector<3x776xf32>
    %29 = arith.mulf %13, %26 : vector<3x1xf32>
    %30 = arith.subf %9, %29 : vector<3x1xf32>
    %31 = vector.broadcast %30 : vector<3x1xf32> to vector<3x776xf32>
    %32 = arith.addf %28, %31 : vector<3x776xf32>
    %c0_16 = arith.constant 0 : index
    %c0_17 = arith.constant 0 : index
    %33 = vector.load %arg20[%c0_16, %c0_17] : memref<3x776xf32, #tpu.memory_space<vmem>>, vector<3x776xf32>
    tpu.vector_store %arg20[%c0_16, %c0_17], %32 {strides = array<i32>} : memref<3x776xf32, #tpu.memory_space<vmem>>, vector<3x776xf32>,
    %c0_18 = arith.constant 0 : index
    %c0_19 = arith.constant 0 : index
    %34 = vector.load %arg20[%c0_18, %c0_19] : memref<3x776xf32, #tpu.memory_space<vmem>>, vector<3x95xf32>
    %c0_20 = arith.constant 0 : index
    %c0_21 = arith.constant 0 : index
    %35 = vector.load %arg21[%c0_20, %c0_21] : memref<27x380xf32, #tpu.memory_space<vmem>>, vector<3x95xf32>
    tpu.vector_store %arg21[%c0_20, %c0_21], %34 {strides = array<i32>} : memref<27x380xf32, #tpu.memory_space<vmem>>, vector<3x95xf32>,
    %c0_22 = arith.constant 0 : index
    %c194 = arith.constant 194 : index
    %36 = vector.load %arg20[%c0_22, %c194] : memref<3x776xf32, #tpu.memory_space<vmem>>, vector<3x95xf32>
    %c0_23 = arith.constant 0 : index
    %c95 = arith.constant 95 : index
    %37 = vector.load %arg21[%c0_23, %c95] : memref<27x380xf32, #tpu.memory_space<vmem>>, vector<3x95xf32>
    tpu.vector_store %arg21[%c0_23, %c95], %36 {strides = array<i32>} : memref<27x380xf32, #tpu.memory_space<vmem>>, vector<3x95xf32>,
    %c0_24 = arith.constant 0 : index
    %c388 = arith.constant 388 : index
    %38 = vector.load %arg20[%c0_24, %c388] : memref<3x776xf32, #tpu.memory_space<vmem>>, vector<3x95xf32>
    %c0_25 = arith.constant 0 : index
    %c190 = arith.constant 190 : index
    %39 = vector.load %arg21[%c0_25, %c190] : memref<27x380xf32, #tpu.memory_space<vmem>>, vector<3x95xf32>
    tpu.vector_store %arg21[%c0_25, %c190], %38 {strides = array<i32>} : memref<27x380xf32, #tpu.memory_space<vmem>>, vector<3x95xf32>,
    %c0_26 = arith.constant 0 : index
    %c582 = arith.constant 582 : index
    %40 = vector.load %arg20[%c0_26, %c582] : memref<3x776xf32, #tpu.memory_space<vmem>>, vector<3x95xf32>
    %c0_27 = arith.constant 0 : index
    %c285 = arith.constant 285 : index
    %41 = vector.load %arg21[%c0_27, %c285] : memref<27x380xf32, #tpu.memory_space<vmem>>, vector<3x95xf32>
    tpu.vector_store %arg21[%c0_27, %c285], %40 {strides = array<i32>} : memref<27x380xf32, #tpu.memory_space<vmem>>, vector<3x95xf32>,
    %c0_28 = arith.constant 0 : index
    %c97 = arith.constant 97 : index
    %42 = vector.load %arg20[%c0_28, %c97] : memref<3x776xf32, #tpu.memory_space<vmem>>, vector<3x95xf32>
    %c3 = arith.constant 3 : index
    %c0_29 = arith.constant 0 : index
    %43 = vector.load %arg21[%c3, %c0_29] : memref<27x380xf32, #tpu.memory_space<vmem>>, vector<3x95xf32>
    tpu.vector_store %arg21[%c3, %c0_29], %42 {strides = array<i32>} : memref<27x380xf32, #tpu.memory_space<vmem>>, vector<3x95xf32>,
    %c0_30 = arith.constant 0 : index
    %c291 = arith.constant 291 : index
    %44 = vector.load %arg20[%c0_30, %c291] : memref<3x776xf32, #tpu.memory_space<vmem>>, vector<3x95xf32>
    %c3_31 = arith.constant 3 : index
    %c95_32 = arith.constant 95 : index
    %45 = vector.load %arg21[%c3_31, %c95_32] : memref<27x380xf32, #tpu.memory_space<vmem>>, vector<3x95xf32>
    tpu.vector_store %arg21[%c3_31, %c95_32], %44 {strides = array<i32>} : memref<27x380xf32, #tpu.memory_space<vmem>>, vector<3x95xf32>,
    %c0_33 = arith.constant 0 : index
    %c485 = arith.constant 485 : index
    %46 = vector.load %arg20[%c0_33, %c485] : memref<3x776xf32, #tpu.memory_space<vmem>>, vector<3x95xf32>
    %c3_34 = arith.constant 3 : index
    %c190_35 = arith.constant 190 : index
    %47 = vector.load %arg21[%c3_34, %c190_35] : memref<27x380xf32, #tpu.memory_space<vmem>>, vector<3x95xf32>
    tpu.vector_store %arg21[%c3_34, %c190_35], %46 {strides = array<i32>} : memref<27x380xf32, #tpu.memory_space<vmem>>, vector<3x95xf32>,
    %c0_36 = arith.constant 0 : index
    %c679 = arith.constant 679 : index
    %48 = vector.load %arg20[%c0_36, %c679] : memref<3x776xf32, #tpu.memory_space<vmem>>, vector<3x95xf32>
    %c3_37 = arith.constant 3 : index
    %c285_38 = arith.constant 285 : index
    %49 = vector.load %arg21[%c3_37, %c285_38] : memref<27x380xf32, #tpu.memory_space<vmem>>, vector<3x95xf32>
    tpu.vector_store %arg21[%c3_37, %c285_38], %48 {strides = array<i32>} : memref<27x380xf32, #tpu.memory_space<vmem>>, vector<3x95xf32>,
    %c0_39 = arith.constant 0 : index
    %c194_40 = arith.constant 194 : index
    %50 = vector.load %arg20[%c0_39, %c194_40] : memref<3x776xf32, #tpu.memory_space<vmem>>, vector<3x95xf32>
    %c6 = arith.constant 6 : index
    %c0_41 = arith.constant 0 : index
    %51 = vector.load %arg21[%c6, %c0_41] : memref<27x380xf32, #tpu.memory_space<vmem>>, vector<3x95xf32>
    tpu.vector_store %arg21[%c6, %c0_41], %50 {strides = array<i32>} : memref<27x380xf32, #tpu.memory_space<vmem>>, vector<3x95xf32>,
    %c0_42 = arith.constant 0 : index
    %c1 = arith.constant 1 : index
    %52 = vector.load %arg20[%c0_42, %c1] : memref<3x776xf32, #tpu.memory_space<vmem>>, vector<3x95xf32>
    %c6_43 = arith.constant 6 : index
    %c95_44 = arith.constant 95 : index
    %53 = vector.load %arg21[%c6_43, %c95_44] : memref<27x380xf32, #tpu.memory_space<vmem>>, vector<3x95xf32>
    tpu.vector_store %arg21[%c6_43, %c95_44], %52 {strides = array<i32>} : memref<27x380xf32, #tpu.memory_space<vmem>>, vector<3x95xf32>,
    %c0_45 = arith.constant 0 : index
    %c582_46 = arith.constant 582 : index
    %54 = vector.load %arg20[%c0_45, %c582_46] : memref<3x776xf32, #tpu.memory_space<vmem>>, vector<3x95xf32>
    %c6_47 = arith.constant 6 : index
    %c190_48 = arith.constant 190 : index
    %55 = vector.load %arg21[%c6_47, %c190_48] : memref<27x380xf32, #tpu.memory_space<vmem>>, vector<3x95xf32>
    tpu.vector_store %arg21[%c6_47, %c190_48], %54 {strides = array<i32>} : memref<27x380xf32, #tpu.memory_space<vmem>>, vector<3x95xf32>,
    %c0_49 = arith.constant 0 : index
    %c389 = arith.constant 389 : index
    %56 = vector.load %arg20[%c0_49, %c389] : memref<3x776xf32, #tpu.memory_space<vmem>>, vector<3x95xf32>
    %c6_50 = arith.constant 6 : index
    %c285_51 = arith.constant 285 : index
    %57 = vector.load %arg21[%c6_50, %c285_51] : memref<27x380xf32, #tpu.memory_space<vmem>>, vector<3x95xf32>
    tpu.vector_store %arg21[%c6_50, %c285_51], %56 {strides = array<i32>} : memref<27x380xf32, #tpu.memory_space<vmem>>, vector<3x95xf32>,
    %c0_52 = arith.constant 0 : index
    %c291_53 = arith.constant 291 : index
    %58 = vector.load %arg20[%c0_52, %c291_53] : memref<3x776xf32, #tpu.memory_space<vmem>>, vector<3x95xf32>
    %c9 = arith.constant 9 : index
    %c0_54 = arith.constant 0 : index
    %59 = vector.load %arg21[%c9, %c0_54] : memref<27x380xf32, #tpu.memory_space<vmem>>, vector<3x95xf32>
    tpu.vector_store %arg21[%c9, %c0_54], %58 {strides = array<i32>} : memref<27x380xf32, #tpu.memory_space<vmem>>, vector<3x95xf32>,
    %c0_55 = arith.constant 0 : index
    %c98 = arith.constant 98 : index
    %60 = vector.load %arg20[%c0_55, %c98] : memref<3x776xf32, #tpu.memory_space<vmem>>, vector<3x95xf32>
    %c9_56 = arith.constant 9 : index
    %c95_57 = arith.constant 95 : index
    %61 = vector.load %arg21[%c9_56, %c95_57] : memref<27x380xf32, #tpu.memory_space<vmem>>, vector<3x95xf32>
    tpu.vector_store %arg21[%c9_56, %c95_57], %60 {strides = array<i32>} : memref<27x380xf32, #tpu.memory_space<vmem>>, vector<3x95xf32>,
    %c0_58 = arith.constant 0 : index
    %c679_59 = arith.constant 679 : index
    %62 = vector.load %arg20[%c0_58, %c679_59] : memref<3x776xf32, #tpu.memory_space<vmem>>, vector<3x95xf32>
    %c9_60 = arith.constant 9 : index
    %c190_61 = arith.constant 190 : index
    %63 = vector.load %arg21[%c9_60, %c190_61] : memref<27x380xf32, #tpu.memory_space<vmem>>, vector<3x95xf32>
    tpu.vector_store %arg21[%c9_60, %c190_61], %62 {strides = array<i32>} : memref<27x380xf32, #tpu.memory_space<vmem>>, vector<3x95xf32>,
    %c0_62 = arith.constant 0 : index
    %c486 = arith.constant 486 : index
    %64 = vector.load %arg20[%c0_62, %c486] : memref<3x776xf32, #tpu.memory_space<vmem>>, vector<3x95xf32>
    %c9_63 = arith.constant 9 : index
    %c285_64 = arith.constant 285 : index
    %65 = vector.load %arg21[%c9_63, %c285_64] : memref<27x380xf32, #tpu.memory_space<vmem>>, vector<3x95xf32>
    tpu.vector_store %arg21[%c9_63, %c285_64], %64 {strides = array<i32>} : memref<27x380xf32, #tpu.memory_space<vmem>>, vector<3x95xf32>,
    %c0_65 = arith.constant 0 : index
    %c1_66 = arith.constant 1 : index
    %66 = vector.load %arg20[%c0_65, %c1_66] : memref<3x776xf32, #tpu.memory_space<vmem>>, vector<3x95xf32>
    %c12 = arith.constant 12 : index
    %c0_67 = arith.constant 0 : index
    %67 = vector.load %arg21[%c12, %c0_67] : memref<27x380xf32, #tpu.memory_space<vmem>>, vector<3x95xf32>
    tpu.vector_store %arg21[%c12, %c0_67], %66 {strides = array<i32>} : memref<27x380xf32, #tpu.memory_space<vmem>>, vector<3x95xf32>,
    %c0_68 = arith.constant 0 : index
    %c195 = arith.constant 195 : index
    %68 = vector.load %arg20[%c0_68, %c195] : memref<3x776xf32, #tpu.memory_space<vmem>>, vector<3x95xf32>
    %c12_69 = arith.constant 12 : index
    %c95_70 = arith.constant 95 : index
    %69 = vector.load %arg21[%c12_69, %c95_70] : memref<27x380xf32, #tpu.memory_space<vmem>>, vector<3x95xf32>
    tpu.vector_store %arg21[%c12_69, %c95_70], %68 {strides = array<i32>} : memref<27x380xf32, #tpu.memory_space<vmem>>, vector<3x95xf32>,
    %c0_71 = arith.constant 0 : index
    %c389_72 = arith.constant 389 : index
    %70 = vector.load %arg20[%c0_71, %c389_72] : memref<3x776xf32, #tpu.memory_space<vmem>>, vector<3x95xf32>
    %c12_73 = arith.constant 12 : index
    %c190_74 = arith.constant 190 : index
    %71 = vector.load %arg21[%c12_73, %c190_74] : memref<27x380xf32, #tpu.memory_space<vmem>>, vector<3x95xf32>
    tpu.vector_store %arg21[%c12_73, %c190_74], %70 {strides = array<i32>} : memref<27x380xf32, #tpu.memory_space<vmem>>, vector<3x95xf32>,
    %c0_75 = arith.constant 0 : index
    %c583 = arith.constant 583 : index
    %72 = vector.load %arg20[%c0_75, %c583] : memref<3x776xf32, #tpu.memory_space<vmem>>, vector<3x95xf32>
    %c12_76 = arith.constant 12 : index
    %c285_77 = arith.constant 285 : index
    %73 = vector.load %arg21[%c12_76, %c285_77] : memref<27x380xf32, #tpu.memory_space<vmem>>, vector<3x95xf32>
    tpu.vector_store %arg21[%c12_76, %c285_77], %72 {strides = array<i32>} : memref<27x380xf32, #tpu.memory_space<vmem>>, vector<3x95xf32>,
    %c0_78 = arith.constant 0 : index
    %c98_79 = arith.constant 98 : index
    %74 = vector.load %arg20[%c0_78, %c98_79] : memref<3x776xf32, #tpu.memory_space<vmem>>, vector<3x95xf32>
    %c15 = arith.constant 15 : index
    %c0_80 = arith.constant 0 : index
    %75 = vector.load %arg21[%c15, %c0_80] : memref<27x380xf32, #tpu.memory_space<vmem>>, vector<3x95xf32>
    tpu.vector_store %arg21[%c15, %c0_80], %74 {strides = array<i32>} : memref<27x380xf32, #tpu.memory_space<vmem>>, vector<3x95xf32>,
    %c0_81 = arith.constant 0 : index
    %c292 = arith.constant 292 : index
    %76 = vector.load %arg20[%c0_81, %c292] : memref<3x776xf32, #tpu.memory_space<vmem>>, vector<3x95xf32>
    %c15_82 = arith.constant 15 : index
    %c95_83 = arith.constant 95 : index
    %77 = vector.load %arg21[%c15_82, %c95_83] : memref<27x380xf32, #tpu.memory_space<vmem>>, vector<3x95xf32>
    tpu.vector_store %arg21[%c15_82, %c95_83], %76 {strides = array<i32>} : memref<27x380xf32, #tpu.memory_space<vmem>>, vector<3x95xf32>,
    %c0_84 = arith.constant 0 : index
    %c486_85 = arith.constant 486 : index
    %78 = vector.load %arg20[%c0_84, %c486_85] : memref<3x776xf32, #tpu.memory_space<vmem>>, vector<3x95xf32>
    %c15_86 = arith.constant 15 : index
    %c190_87 = arith.constant 190 : index
    %79 = vector.load %arg21[%c15_86, %c190_87] : memref<27x380xf32, #tpu.memory_space<vmem>>, vector<3x95xf32>
    tpu.vector_store %arg21[%c15_86, %c190_87], %78 {strides = array<i32>} : memref<27x380xf32, #tpu.memory_space<vmem>>, vector<3x95xf32>,
    %c0_88 = arith.constant 0 : index
    %c680 = arith.constant 680 : index
    %80 = vector.load %arg20[%c0_88, %c680] : memref<3x776xf32, #tpu.memory_space<vmem>>, vector<3x95xf32>
    %c15_89 = arith.constant 15 : index
    %c285_90 = arith.constant 285 : index
    %81 = vector.load %arg21[%c15_89, %c285_90] : memref<27x380xf32, #tpu.memory_space<vmem>>, vector<3x95xf32>
    tpu.vector_store %arg21[%c15_89, %c285_90], %80 {strides = array<i32>} : memref<27x380xf32, #tpu.memory_space<vmem>>, vector<3x95xf32>,
    %c0_91 = arith.constant 0 : index
    %c195_92 = arith.constant 195 : index
    %82 = vector.load %arg20[%c0_91, %c195_92] : memref<3x776xf32, #tpu.memory_space<vmem>>, vector<3x95xf32>
    %c18 = arith.constant 18 : index
    %c0_93 = arith.constant 0 : index
    %83 = vector.load %arg21[%c18, %c0_93] : memref<27x380xf32, #tpu.memory_space<vmem>>, vector<3x95xf32>
    tpu.vector_store %arg21[%c18, %c0_93], %82 {strides = array<i32>} : memref<27x380xf32, #tpu.memory_space<vmem>>, vector<3x95xf32>,
    %c0_94 = arith.constant 0 : index
    %c2 = arith.constant 2 : index
    %84 = vector.load %arg20[%c0_94, %c2] : memref<3x776xf32, #tpu.memory_space<vmem>>, vector<3x95xf32>
    %c18_95 = arith.constant 18 : index
    %c95_96 = arith.constant 95 : index
    %85 = vector.load %arg21[%c18_95, %c95_96] : memref<27x380xf32, #tpu.memory_space<vmem>>, vector<3x95xf32>
    tpu.vector_store %arg21[%c18_95, %c95_96], %84 {strides = array<i32>} : memref<27x380xf32, #tpu.memory_space<vmem>>, vector<3x95xf32>,
    %c0_97 = arith.constant 0 : index
    %c583_98 = arith.constant 583 : index
    %86 = vector.load %arg20[%c0_97, %c583_98] : memref<3x776xf32, #tpu.memory_space<vmem>>, vector<3x95xf32>
    %c18_99 = arith.constant 18 : index
    %c190_100 = arith.constant 190 : index
    %87 = vector.load %arg21[%c18_99, %c190_100] : memref<27x380xf32, #tpu.memory_space<vmem>>, vector<3x95xf32>
    tpu.vector_store %arg21[%c18_99, %c190_100], %86 {strides = array<i32>} : memref<27x380xf32, #tpu.memory_space<vmem>>, vector<3x95xf32>,
    %c0_101 = arith.constant 0 : index
    %c390 = arith.constant 390 : index
    %88 = vector.load %arg20[%c0_101, %c390] : memref<3x776xf32, #tpu.memory_space<vmem>>, vector<3x95xf32>
    %c18_102 = arith.constant 18 : index
    %c285_103 = arith.constant 285 : index
    %89 = vector.load %arg21[%c18_102, %c285_103] : memref<27x380xf32, #tpu.memory_space<vmem>>, vector<3x95xf32>
    tpu.vector_store %arg21[%c18_102, %c285_103], %88 {strides = array<i32>} : memref<27x380xf32, #tpu.memory_space<vmem>>, vector<3x95xf32>,
    %c0_104 = arith.constant 0 : index
    %c292_105 = arith.constant 292 : index
    %90 = vector.load %arg20[%c0_104, %c292_105] : memref<3x776xf32, #tpu.memory_space<vmem>>, vector<3x95xf32>
    %c21 = arith.constant 21 : index
    %c0_106 = arith.constant 0 : index
    %91 = vector.load %arg21[%c21, %c0_106] : memref<27x380xf32, #tpu.memory_space<vmem>>, vector<3x95xf32>
    tpu.vector_store %arg21[%c21, %c0_106], %90 {strides = array<i32>} : memref<27x380xf32, #tpu.memory_space<vmem>>, vector<3x95xf32>,
    %c0_107 = arith.constant 0 : index
    %c99 = arith.constant 99 : index
    %92 = vector.load %arg20[%c0_107, %c99] : memref<3x776xf32, #tpu.memory_space<vmem>>, vector<3x95xf32>
    %c21_108 = arith.constant 21 : index
    %c95_109 = arith.constant 95 : index
    %93 = vector.load %arg21[%c21_108, %c95_109] : memref<27x380xf32, #tpu.memory_space<vmem>>, vector<3x95xf32>
    tpu.vector_store %arg21[%c21_108, %c95_109], %92 {strides = array<i32>} : memref<27x380xf32, #tpu.memory_space<vmem>>, vector<3x95xf32>,
    %c0_110 = arith.constant 0 : index
    %c680_111 = arith.constant 680 : index
    %94 = vector.load %arg20[%c0_110, %c680_111] : memref<3x776xf32, #tpu.memory_space<vmem>>, vector<3x95xf32>
    %c21_112 = arith.constant 21 : index
    %c190_113 = arith.constant 190 : index
    %95 = vector.load %arg21[%c21_112, %c190_113] : memref<27x380xf32, #tpu.memory_space<vmem>>, vector<3x95xf32>
    tpu.vector_store %arg21[%c21_112, %c190_113], %94 {strides = array<i32>} : memref<27x380xf32, #tpu.memory_space<vmem>>, vector<3x95xf32>,
    %c0_114 = arith.constant 0 : index
    %c487 = arith.constant 487 : index
    %96 = vector.load %arg20[%c0_114, %c487] : memref<3x776xf32, #tpu.memory_space<vmem>>, vector<3x95xf32>
    %c21_115 = arith.constant 21 : index
    %c285_116 = arith.constant 285 : index
    %97 = vector.load %arg21[%c21_115, %c285_116] : memref<27x380xf32, #tpu.memory_space<vmem>>, vector<3x95xf32>
    tpu.vector_store %arg21[%c21_115, %c285_116], %96 {strides = array<i32>} : memref<27x380xf32, #tpu.memory_space<vmem>>, vector<3x95xf32>,
    %c0_117 = arith.constant 0 : index
    %c2_118 = arith.constant 2 : index
    %98 = vector.load %arg20[%c0_117, %c2_118] : memref<3x776xf32, #tpu.memory_space<vmem>>, vector<3x95xf32>
    %c24 = arith.constant 24 : index
    %c0_119 = arith.constant 0 : index
    %99 = vector.load %arg21[%c24, %c0_119] : memref<27x380xf32, #tpu.memory_space<vmem>>, vector<3x95xf32>
    tpu.vector_store %arg21[%c24, %c0_119], %98 {strides = array<i32>} : memref<27x380xf32, #tpu.memory_space<vmem>>, vector<3x95xf32>,
    %c0_120 = arith.constant 0 : index
    %c196 = arith.constant 196 : index
    %100 = vector.load %arg20[%c0_120, %c196] : memref<3x776xf32, #tpu.memory_space<vmem>>, vector<3x95xf32>
    %c24_121 = arith.constant 24 : index
    %c95_122 = arith.constant 95 : index
    %101 = vector.load %arg21[%c24_121, %c95_122] : memref<27x380xf32, #tpu.memory_space<vmem>>, vector<3x95xf32>
    tpu.vector_store %arg21[%c24_121, %c95_122], %100 {strides = array<i32>} : memref<27x380xf32, #tpu.memory_space<vmem>>, vector<3x95xf32>,
    %c0_123 = arith.constant 0 : index
    %c390_124 = arith.constant 390 : index
    %102 = vector.load %arg20[%c0_123, %c390_124] : memref<3x776xf32, #tpu.memory_space<vmem>>, vector<3x95xf32>
    %c24_125 = arith.constant 24 : index
    %c190_126 = arith.constant 190 : index
    %103 = vector.load %arg21[%c24_125, %c190_126] : memref<27x380xf32, #tpu.memory_space<vmem>>, vector<3x95xf32>
    tpu.vector_store %arg21[%c24_125, %c190_126], %102 {strides = array<i32>} : memref<27x380xf32, #tpu.memory_space<vmem>>, vector<3x95xf32>,
    %c0_127 = arith.constant 0 : index
    %c584 = arith.constant 584 : index
    %104 = vector.load %arg20[%c0_127, %c584] : memref<3x776xf32, #tpu.memory_space<vmem>>, vector<3x95xf32>
    %c24_128 = arith.constant 24 : index
    %c285_129 = arith.constant 285 : index
    %105 = vector.load %arg21[%c24_128, %c285_129] : memref<27x380xf32, #tpu.memory_space<vmem>>, vector<3x95xf32>
    tpu.vector_store %arg21[%c24_128, %c285_129], %104 {strides = array<i32>} : memref<27x380xf32, #tpu.memory_space<vmem>>, vector<3x95xf32>,
    %c0_130 = arith.constant 0 : index
    %c0_131 = arith.constant 0 : index
    %106 = vector.load %arg5[%c0_130, %c0_131] : memref<6x27xf32, #tpu.memory_space<vmem>>, vector<6x27xf32>
    %c0_132 = arith.constant 0 : index
    %c0_133 = arith.constant 0 : index
    %107 = vector.load %arg21[%c0_132, %c0_133] : memref<27x380xf32, #tpu.memory_space<vmem>>, vector<27x380xf32>
    %cst_134 = arith.constant dense<0.000000e+00> : vector<6x380xf32>
    %108 = tpu.matmul %106, %107, %cst_134 {dimension_numbers = #tpu.dot_dimension_numbers<[1], [0], [0], [1], [0, 0, 1, 1], [], []>} : vector<6x27xf32>, vector<27x380xf32>, vector<6x380xf32> -> vector<6x380xf32>
    %c0_135 = arith.constant 0 : index
    %c0_136 = arith.constant 0 : index
    %109 = vector.load %arg6[%c0_135, %c0_136] : memref<6x1xf32, #tpu.memory_space<vmem>>, vector<6x1xf32>
    %110 = vector.broadcast %109 : vector<6x1xf32> to vector<6x380xf32>
    %111 = arith.addf %108, %110 : vector<6x380xf32>
    %cst_137 = arith.constant 0.000000e+00 : f32
    %112 = vector.broadcast %cst_137 : f32 to vector<6x380xf32>
    %113 = arith.maximumf %111, %112 : vector<6x380xf32>
    %c0_138 = arith.constant 0 : index
    %c0_139 = arith.constant 0 : index
    %114 = vector.load %arg7[%c0_138, %c0_139] : memref<6x1xf32, #tpu.memory_space<vmem>>, vector<6x1xf32>
    %c0_140 = arith.constant 0 : index
    %c0_141 = arith.constant 0 : index
    %115 = vector.load %arg8[%c0_140, %c0_141] : memref<6x1xf32, #tpu.memory_space<vmem>>, vector<6x1xf32>
    %cst_142 = arith.constant dense<0.000000e+00> : vector<6xf32>
    %116 = vector.multi_reduction <add>, %113, %cst_142 [1] : vector<6x380xf32> to vector<6xf32>
    %117 = vector.shape_cast %116 : vector<6xf32> to vector<6x1xf32>
    %cst_143 = arith.constant 3.800000e+02 : f32
    %118 = vector.broadcast %cst_143 : f32 to vector<6x1xf32>
    %119 = arith.divf %117, %118 : vector<6x1xf32>
    %120 = arith.mulf %113, %113 : vector<6x380xf32>
    %cst_144 = arith.constant dense<0.000000e+00> : vector<6xf32>
    %121 = vector.multi_reduction <add>, %120, %cst_144 [1] : vector<6x380xf32> to vector<6xf32>
    %122 = vector.shape_cast %121 : vector<6xf32> to vector<6x1xf32>
    %cst_145 = arith.constant 3.800000e+02 : f32
    %123 = vector.broadcast %cst_145 : f32 to vector<6x1xf32>
    %124 = arith.divf %122, %123 : vector<6x1xf32>
    %125 = arith.mulf %119, %119 : vector<6x1xf32>
    %126 = arith.subf %124, %125 : vector<6x1xf32>
    %cst_146 = arith.constant 0.000000e+00 : f32
    %127 = vector.broadcast %cst_146 : f32 to vector<6x1xf32>
    %128 = arith.maximumf %126, %127 : vector<6x1xf32>
    %cst_147 = arith.constant 9.99999974E-6 : f32
    %129 = vector.broadcast %cst_147 : f32 to vector<6x1xf32>
    %130 = arith.addf %128, %129 : vector<6x1xf32>
    %131 = math.rsqrt %130 : vector<6x1xf32>
    %132 = arith.mulf %114, %131 : vector<6x1xf32>
    %133 = vector.broadcast %132 : vector<6x1xf32> to vector<6x380xf32>
    %134 = arith.mulf %113, %133 : vector<6x380xf32>
    %135 = arith.mulf %119, %132 : vector<6x1xf32>
    %136 = arith.subf %115, %135 : vector<6x1xf32>
    %137 = vector.broadcast %136 : vector<6x1xf32> to vector<6x380xf32>
    %138 = arith.addf %134, %137 : vector<6x380xf32>
    %c0_148 = arith.constant 0 : index
    %c0_149 = arith.constant 0 : index
    %139 = vector.load %arg22[%c0_148, %c0_149] : memref<6x380xf32, #tpu.memory_space<vmem>>, vector<6x380xf32>
    tpu.vector_store %arg22[%c0_148, %c0_149], %138 {strides = array<i32>} : memref<6x380xf32, #tpu.memory_space<vmem>>, vector<6x380xf32>,
    %c0_150 = arith.constant 0 : index
    %c0_151 = arith.constant 0 : index
    %140 = vector.load %arg22[%c0_150, %c0_151] : memref<6x380xf32, #tpu.memory_space<vmem>>, vector<6x91xf32>
    %c0_152 = arith.constant 0 : index
    %c0_153 = arith.constant 0 : index
    %141 = vector.load %arg23[%c0_152, %c0_153] : memref<54x182xf32, #tpu.memory_space<vmem>>, vector<6x91xf32>
    tpu.vector_store %arg23[%c0_152, %c0_153], %140 {strides = array<i32>} : memref<54x182xf32, #tpu.memory_space<vmem>>, vector<6x91xf32>,
    %c0_154 = arith.constant 0 : index
    %c190_155 = arith.constant 190 : index
    %142 = vector.load %arg22[%c0_154, %c190_155] : memref<6x380xf32, #tpu.memory_space<vmem>>, vector<6x91xf32>
    %c0_156 = arith.constant 0 : index
    %c91 = arith.constant 91 : index
    %143 = vector.load %arg23[%c0_156, %c91] : memref<54x182xf32, #tpu.memory_space<vmem>>, vector<6x91xf32>
    tpu.vector_store %arg23[%c0_156, %c91], %142 {strides = array<i32>} : memref<54x182xf32, #tpu.memory_space<vmem>>, vector<6x91xf32>,
    %c0_157 = arith.constant 0 : index
    %c95_158 = arith.constant 95 : index
    %144 = vector.load %arg22[%c0_157, %c95_158] : memref<6x380xf32, #tpu.memory_space<vmem>>, vector<6x91xf32>
    %c6_159 = arith.constant 6 : index
    %c0_160 = arith.constant 0 : index
    %145 = vector.load %arg23[%c6_159, %c0_160] : memref<54x182xf32, #tpu.memory_space<vmem>>, vector<6x91xf32>
    tpu.vector_store %arg23[%c6_159, %c0_160], %144 {strides = array<i32>} : memref<54x182xf32, #tpu.memory_space<vmem>>, vector<6x91xf32>,
    %c0_161 = arith.constant 0 : index
    %c285_162 = arith.constant 285 : index
    %146 = vector.load %arg22[%c0_161, %c285_162] : memref<6x380xf32, #tpu.memory_space<vmem>>, vector<6x91xf32>
    %c6_163 = arith.constant 6 : index
    %c91_164 = arith.constant 91 : index
    %147 = vector.load %arg23[%c6_163, %c91_164] : memref<54x182xf32, #tpu.memory_space<vmem>>, vector<6x91xf32>
    tpu.vector_store %arg23[%c6_163, %c91_164], %146 {strides = array<i32>} : memref<54x182xf32, #tpu.memory_space<vmem>>, vector<6x91xf32>,
    %c0_165 = arith.constant 0 : index
    %c1_166 = arith.constant 1 : index
    %148 = vector.load %arg22[%c0_165, %c1_166] : memref<6x380xf32, #tpu.memory_space<vmem>>, vector<6x91xf32>
    %c12_167 = arith.constant 12 : index
    %c0_168 = arith.constant 0 : index
    %149 = vector.load %arg23[%c12_167, %c0_168] : memref<54x182xf32, #tpu.memory_space<vmem>>, vector<6x91xf32>
    tpu.vector_store %arg23[%c12_167, %c0_168], %148 {strides = array<i32>} : memref<54x182xf32, #tpu.memory_space<vmem>>, vector<6x91xf32>,
    %c0_169 = arith.constant 0 : index
    %c191 = arith.constant 191 : index
    %150 = vector.load %arg22[%c0_169, %c191] : memref<6x380xf32, #tpu.memory_space<vmem>>, vector<6x91xf32>
    %c12_170 = arith.constant 12 : index
    %c91_171 = arith.constant 91 : index
    %151 = vector.load %arg23[%c12_170, %c91_171] : memref<54x182xf32, #tpu.memory_space<vmem>>, vector<6x91xf32>
    tpu.vector_store %arg23[%c12_170, %c91_171], %150 {strides = array<i32>} : memref<54x182xf32, #tpu.memory_space<vmem>>, vector<6x91xf32>,
    %c0_172 = arith.constant 0 : index
    %c96 = arith.constant 96 : index
    %152 = vector.load %arg22[%c0_172, %c96] : memref<6x380xf32, #tpu.memory_space<vmem>>, vector<6x91xf32>
    %c18_173 = arith.constant 18 : index
    %c0_174 = arith.constant 0 : index
    %153 = vector.load %arg23[%c18_173, %c0_174] : memref<54x182xf32, #tpu.memory_space<vmem>>, vector<6x91xf32>
    tpu.vector_store %arg23[%c18_173, %c0_174], %152 {strides = array<i32>} : memref<54x182xf32, #tpu.memory_space<vmem>>, vector<6x91xf32>,
    %c0_175 = arith.constant 0 : index
    %c286 = arith.constant 286 : index
    %154 = vector.load %arg22[%c0_175, %c286] : memref<6x380xf32, #tpu.memory_space<vmem>>, vector<6x91xf32>
    %c18_176 = arith.constant 18 : index
    %c91_177 = arith.constant 91 : index
    %155 = vector.load %arg23[%c18_176, %c91_177] : memref<54x182xf32, #tpu.memory_space<vmem>>, vector<6x91xf32>
    tpu.vector_store %arg23[%c18_176, %c91_177], %154 {strides = array<i32>} : memref<54x182xf32, #tpu.memory_space<vmem>>, vector<6x91xf32>,
    %c0_178 = arith.constant 0 : index
    %c2_179 = arith.constant 2 : index
    %156 = vector.load %arg22[%c0_178, %c2_179] : memref<6x380xf32, #tpu.memory_space<vmem>>, vector<6x91xf32>
    %c24_180 = arith.constant 24 : index
    %c0_181 = arith.constant 0 : index
    %157 = vector.load %arg23[%c24_180, %c0_181] : memref<54x182xf32, #tpu.memory_space<vmem>>, vector<6x91xf32>
    tpu.vector_store %arg23[%c24_180, %c0_181], %156 {strides = array<i32>} : memref<54x182xf32, #tpu.memory_space<vmem>>, vector<6x91xf32>,
    %c0_182 = arith.constant 0 : index
    %c192 = arith.constant 192 : index
    %158 = vector.load %arg22[%c0_182, %c192] : memref<6x380xf32, #tpu.memory_space<vmem>>, vector<6x91xf32>
    %c24_183 = arith.constant 24 : index
    %c91_184 = arith.constant 91 : index
    %159 = vector.load %arg23[%c24_183, %c91_184] : memref<54x182xf32, #tpu.memory_space<vmem>>, vector<6x91xf32>
    tpu.vector_store %arg23[%c24_183, %c91_184], %158 {strides = array<i32>} : memref<54x182xf32, #tpu.memory_space<vmem>>, vector<6x91xf32>,
    %c0_185 = arith.constant 0 : index
    %c97_186 = arith.constant 97 : index
    %160 = vector.load %arg22[%c0_185, %c97_186] : memref<6x380xf32, #tpu.memory_space<vmem>>, vector<6x91xf32>
    %c30 = arith.constant 30 : index
    %c0_187 = arith.constant 0 : index
    %161 = vector.load %arg23[%c30, %c0_187] : memref<54x182xf32, #tpu.memory_space<vmem>>, vector<6x91xf32>
    tpu.vector_store %arg23[%c30, %c0_187], %160 {strides = array<i32>} : memref<54x182xf32, #tpu.memory_space<vmem>>, vector<6x91xf32>,
    %c0_188 = arith.constant 0 : index
    %c287 = arith.constant 287 : index
    %162 = vector.load %arg22[%c0_188, %c287] : memref<6x380xf32, #tpu.memory_space<vmem>>, vector<6x91xf32>
    %c30_189 = arith.constant 30 : index
    %c91_190 = arith.constant 91 : index
    %163 = vector.load %arg23[%c30_189, %c91_190] : memref<54x182xf32, #tpu.memory_space<vmem>>, vector<6x91xf32>
    tpu.vector_store %arg23[%c30_189, %c91_190], %162 {strides = array<i32>} : memref<54x182xf32, #tpu.memory_space<vmem>>, vector<6x91xf32>,
    %c0_191 = arith.constant 0 : index
    %c3_192 = arith.constant 3 : index
    %164 = vector.load %arg22[%c0_191, %c3_192] : memref<6x380xf32, #tpu.memory_space<vmem>>, vector<6x91xf32>
    %c36 = arith.constant 36 : index
    %c0_193 = arith.constant 0 : index
    %165 = vector.load %arg23[%c36, %c0_193] : memref<54x182xf32, #tpu.memory_space<vmem>>, vector<6x91xf32>
    tpu.vector_store %arg23[%c36, %c0_193], %164 {strides = array<i32>} : memref<54x182xf32, #tpu.memory_space<vmem>>, vector<6x91xf32>,
    %c0_194 = arith.constant 0 : index
    %c193 = arith.constant 193 : index
    %166 = vector.load %arg22[%c0_194, %c193] : memref<6x380xf32, #tpu.memory_space<vmem>>, vector<6x91xf32>
    %c36_195 = arith.constant 36 : index
    %c91_196 = arith.constant 91 : index
    %167 = vector.load %arg23[%c36_195, %c91_196] : memref<54x182xf32, #tpu.memory_space<vmem>>, vector<6x91xf32>
    tpu.vector_store %arg23[%c36_195, %c91_196], %166 {strides = array<i32>} : memref<54x182xf32, #tpu.memory_space<vmem>>, vector<6x91xf32>,
    %c0_197 = arith.constant 0 : index
    %c98_198 = arith.constant 98 : index
    %168 = vector.load %arg22[%c0_197, %c98_198] : memref<6x380xf32, #tpu.memory_space<vmem>>, vector<6x91xf32>
    %c42 = arith.constant 42 : index
    %c0_199 = arith.constant 0 : index
    %169 = vector.load %arg23[%c42, %c0_199] : memref<54x182xf32, #tpu.memory_space<vmem>>, vector<6x91xf32>
    tpu.vector_store %arg23[%c42, %c0_199], %168 {strides = array<i32>} : memref<54x182xf32, #tpu.memory_space<vmem>>, vector<6x91xf32>,
    %c0_200 = arith.constant 0 : index
    %c288 = arith.constant 288 : index
    %170 = vector.load %arg22[%c0_200, %c288] : memref<6x380xf32, #tpu.memory_space<vmem>>, vector<6x91xf32>
    %c42_201 = arith.constant 42 : index
    %c91_202 = arith.constant 91 : index
    %171 = vector.load %arg23[%c42_201, %c91_202] : memref<54x182xf32, #tpu.memory_space<vmem>>, vector<6x91xf32>
    tpu.vector_store %arg23[%c42_201, %c91_202], %170 {strides = array<i32>} : memref<54x182xf32, #tpu.memory_space<vmem>>, vector<6x91xf32>,
    %c0_203 = arith.constant 0 : index
    %c4 = arith.constant 4 : index
    %172 = vector.load %arg22[%c0_203, %c4] : memref<6x380xf32, #tpu.memory_space<vmem>>, vector<6x91xf32>
    %c48 = arith.constant 48 : index
    %c0_204 = arith.constant 0 : index
    %173 = vector.load %arg23[%c48, %c0_204] : memref<54x182xf32, #tpu.memory_space<vmem>>, vector<6x91xf32>
    tpu.vector_store %arg23[%c48, %c0_204], %172 {strides = array<i32>} : memref<54x182xf32, #tpu.memory_space<vmem>>, vector<6x91xf32>,
    %c0_205 = arith.constant 0 : index
    %c194_206 = arith.constant 194 : index
    %174 = vector.load %arg22[%c0_205, %c194_206] : memref<6x380xf32, #tpu.memory_space<vmem>>, vector<6x91xf32>
    %c48_207 = arith.constant 48 : index
    %c91_208 = arith.constant 91 : index
    %175 = vector.load %arg23[%c48_207, %c91_208] : memref<54x182xf32, #tpu.memory_space<vmem>>, vector<6x91xf32>
    tpu.vector_store %arg23[%c48_207, %c91_208], %174 {strides = array<i32>} : memref<54x182xf32, #tpu.memory_space<vmem>>, vector<6x91xf32>,
    %c0_209 = arith.constant 0 : index
    %c0_210 = arith.constant 0 : index
    %176 = vector.load %arg9[%c0_209, %c0_210] : memref<12x54xf32, #tpu.memory_space<vmem>>, vector<12x54xf32>
    %c0_211 = arith.constant 0 : index
    %c0_212 = arith.constant 0 : index
    %177 = vector.load %arg23[%c0_211, %c0_212] : memref<54x182xf32, #tpu.memory_space<vmem>>, vector<54x182xf32>
    %cst_213 = arith.constant dense<0.000000e+00> : vector<12x182xf32>
    %178 = tpu.matmul %176, %177, %cst_213 {dimension_numbers = #tpu.dot_dimension_numbers<[1], [0], [0], [1], [0, 0, 1, 1], [], []>} : vector<12x54xf32>, vector<54x182xf32>, vector<12x182xf32> -> vector<12x182xf32>
    %c0_214 = arith.constant 0 : index
    %c0_215 = arith.constant 0 : index
    %179 = vector.load %arg10[%c0_214, %c0_215] : memref<12x1xf32, #tpu.memory_space<vmem>>, vector<12x1xf32>
    %180 = vector.broadcast %179 : vector<12x1xf32> to vector<12x182xf32>
    %181 = arith.addf %178, %180 : vector<12x182xf32>
    %cst_216 = arith.constant 0.000000e+00 : f32
    %182 = vector.broadcast %cst_216 : f32 to vector<12x182xf32>
    %183 = arith.maximumf %181, %182 : vector<12x182xf32>
    %c0_217 = arith.constant 0 : index
    %c0_218 = arith.constant 0 : index
    %184 = vector.load %arg11[%c0_217, %c0_218] : memref<12x1xf32, #tpu.memory_space<vmem>>, vector<12x1xf32>
    %c0_219 = arith.constant 0 : index
    %c0_220 = arith.constant 0 : index
    %185 = vector.load %arg12[%c0_219, %c0_220] : memref<12x1xf32, #tpu.memory_space<vmem>>, vector<12x1xf32>
    %cst_221 = arith.constant dense<0.000000e+00> : vector<12xf32>
    %186 = vector.multi_reduction <add>, %183, %cst_221 [1] : vector<12x182xf32> to vector<12xf32>
    %187 = vector.shape_cast %186 : vector<12xf32> to vector<12x1xf32>
    %cst_222 = arith.constant 1.820000e+02 : f32
    %188 = vector.broadcast %cst_222 : f32 to vector<12x1xf32>
    %189 = arith.divf %187, %188 : vector<12x1xf32>
    %190 = arith.mulf %183, %183 : vector<12x182xf32>
    %cst_223 = arith.constant dense<0.000000e+00> : vector<12xf32>
    %191 = vector.multi_reduction <add>, %190, %cst_223 [1] : vector<12x182xf32> to vector<12xf32>
    %192 = vector.shape_cast %191 : vector<12xf32> to vector<12x1xf32>
    %cst_224 = arith.constant 1.820000e+02 : f32
    %193 = vector.broadcast %cst_224 : f32 to vector<12x1xf32>
    %194 = arith.divf %192, %193 : vector<12x1xf32>
    %195 = arith.mulf %189, %189 : vector<12x1xf32>
    %196 = arith.subf %194, %195 : vector<12x1xf32>
    %cst_225 = arith.constant 0.000000e+00 : f32
    %197 = vector.broadcast %cst_225 : f32 to vector<12x1xf32>
    %198 = arith.maximumf %196, %197 : vector<12x1xf32>
    %cst_226 = arith.constant 9.99999974E-6 : f32
    %199 = vector.broadcast %cst_226 : f32 to vector<12x1xf32>
    %200 = arith.addf %198, %199 : vector<12x1xf32>
    %201 = math.rsqrt %200 : vector<12x1xf32>
    %202 = arith.mulf %184, %201 : vector<12x1xf32>
    %203 = vector.broadcast %202 : vector<12x1xf32> to vector<12x182xf32>
    %204 = arith.mulf %183, %203 : vector<12x182xf32>
    %205 = arith.mulf %189, %202 : vector<12x1xf32>
    %206 = arith.subf %185, %205 : vector<12x1xf32>
    %207 = vector.broadcast %206 : vector<12x1xf32> to vector<12x182xf32>
    %208 = arith.addf %204, %207 : vector<12x182xf32>
    %c0_227 = arith.constant 0 : index
    %c0_228 = arith.constant 0 : index
    %209 = vector.load %arg24[%c0_227, %c0_228] : memref<12x182xf32, #tpu.memory_space<vmem>>, vector<12x182xf32>
    tpu.vector_store %arg24[%c0_227, %c0_228], %208 {strides = array<i32>} : memref<12x182xf32, #tpu.memory_space<vmem>>, vector<12x182xf32>,
    %c0_229 = arith.constant 0 : index
    %c0_230 = arith.constant 0 : index
    %210 = vector.load %arg24[%c0_229, %c0_230] : memref<12x182xf32, #tpu.memory_space<vmem>>, vector<1x91xf32>
    %c0_231 = arith.constant 0 : index
    %c0_232 = arith.constant 0 : index
    %211 = vector.load %arg25[%c0_231, %c0_232] : memref<2x1092xf32, #tpu.memory_space<vmem>>, vector<1x91xf32>
    tpu.vector_store %arg25[%c0_231, %c0_232], %210 {strides = array<i32>} : memref<2x1092xf32, #tpu.memory_space<vmem>>, vector<1x91xf32>,
    %c1_233 = arith.constant 1 : index
    %c0_234 = arith.constant 0 : index
    %212 = vector.load %arg24[%c1_233, %c0_234] : memref<12x182xf32, #tpu.memory_space<vmem>>, vector<1x91xf32>
    %c0_235 = arith.constant 0 : index
    %c91_236 = arith.constant 91 : index
    %213 = vector.load %arg25[%c0_235, %c91_236] : memref<2x1092xf32, #tpu.memory_space<vmem>>, vector<1x91xf32>
    tpu.vector_store %arg25[%c0_235, %c91_236], %212 {strides = array<i32>} : memref<2x1092xf32, #tpu.memory_space<vmem>>, vector<1x91xf32>,
    %c2_237 = arith.constant 2 : index
    %c0_238 = arith.constant 0 : index
    %214 = vector.load %arg24[%c2_237, %c0_238] : memref<12x182xf32, #tpu.memory_space<vmem>>, vector<1x91xf32>
    %c0_239 = arith.constant 0 : index
    %c182 = arith.constant 182 : index
    %215 = vector.load %arg25[%c0_239, %c182] : memref<2x1092xf32, #tpu.memory_space<vmem>>, vector<1x91xf32>
    tpu.vector_store %arg25[%c0_239, %c182], %214 {strides = array<i32>} : memref<2x1092xf32, #tpu.memory_space<vmem>>, vector<1x91xf32>,
    %c3_240 = arith.constant 3 : index
    %c0_241 = arith.constant 0 : index
    %216 = vector.load %arg24[%c3_240, %c0_241] : memref<12x182xf32, #tpu.memory_space<vmem>>, vector<1x91xf32>
    %c0_242 = arith.constant 0 : index
    %c273 = arith.constant 273 : index
    %217 = vector.load %arg25[%c0_242, %c273] : memref<2x1092xf32, #tpu.memory_space<vmem>>, vector<1x91xf32>
    tpu.vector_store %arg25[%c0_242, %c273], %216 {strides = array<i32>} : memref<2x1092xf32, #tpu.memory_space<vmem>>, vector<1x91xf32>,
    %c4_243 = arith.constant 4 : index
    %c0_244 = arith.constant 0 : index
    %218 = vector.load %arg24[%c4_243, %c0_244] : memref<12x182xf32, #tpu.memory_space<vmem>>, vector<1x91xf32>
    %c0_245 = arith.constant 0 : index
    %c364 = arith.constant 364 : index
    %219 = vector.load %arg25[%c0_245, %c364] : memref<2x1092xf32, #tpu.memory_space<vmem>>, vector<1x91xf32>
    tpu.vector_store %arg25[%c0_245, %c364], %218 {strides = array<i32>} : memref<2x1092xf32, #tpu.memory_space<vmem>>, vector<1x91xf32>,
    %c5 = arith.constant 5 : index
    %c0_246 = arith.constant 0 : index
    %220 = vector.load %arg24[%c5, %c0_246] : memref<12x182xf32, #tpu.memory_space<vmem>>, vector<1x91xf32>
    %c0_247 = arith.constant 0 : index
    %c455 = arith.constant 455 : index
    %221 = vector.load %arg25[%c0_247, %c455] : memref<2x1092xf32, #tpu.memory_space<vmem>>, vector<1x91xf32>
    tpu.vector_store %arg25[%c0_247, %c455], %220 {strides = array<i32>} : memref<2x1092xf32, #tpu.memory_space<vmem>>, vector<1x91xf32>,
    %c6_248 = arith.constant 6 : index
    %c0_249 = arith.constant 0 : index
    %222 = vector.load %arg24[%c6_248, %c0_249] : memref<12x182xf32, #tpu.memory_space<vmem>>, vector<1x91xf32>
    %c0_250 = arith.constant 0 : index
    %c546 = arith.constant 546 : index
    %223 = vector.load %arg25[%c0_250, %c546] : memref<2x1092xf32, #tpu.memory_space<vmem>>, vector<1x91xf32>
    tpu.vector_store %arg25[%c0_250, %c546], %222 {strides = array<i32>} : memref<2x1092xf32, #tpu.memory_space<vmem>>, vector<1x91xf32>,
    %c7 = arith.constant 7 : index
    %c0_251 = arith.constant 0 : index
    %224 = vector.load %arg24[%c7, %c0_251] : memref<12x182xf32, #tpu.memory_space<vmem>>, vector<1x91xf32>
    %c0_252 = arith.constant 0 : index
    %c637 = arith.constant 637 : index
    %225 = vector.load %arg25[%c0_252, %c637] : memref<2x1092xf32, #tpu.memory_space<vmem>>, vector<1x91xf32>
    tpu.vector_store %arg25[%c0_252, %c637], %224 {strides = array<i32>} : memref<2x1092xf32, #tpu.memory_space<vmem>>, vector<1x91xf32>,
    %c8 = arith.constant 8 : index
    %c0_253 = arith.constant 0 : index
    %226 = vector.load %arg24[%c8, %c0_253] : memref<12x182xf32, #tpu.memory_space<vmem>>, vector<1x91xf32>
    %c0_254 = arith.constant 0 : index
    %c728 = arith.constant 728 : index
    %227 = vector.load %arg25[%c0_254, %c728] : memref<2x1092xf32, #tpu.memory_space<vmem>>, vector<1x91xf32>
    tpu.vector_store %arg25[%c0_254, %c728], %226 {strides = array<i32>} : memref<2x1092xf32, #tpu.memory_space<vmem>>, vector<1x91xf32>,
    %c9_255 = arith.constant 9 : index
    %c0_256 = arith.constant 0 : index
    %228 = vector.load %arg24[%c9_255, %c0_256] : memref<12x182xf32, #tpu.memory_space<vmem>>, vector<1x91xf32>
    %c0_257 = arith.constant 0 : index
    %c819 = arith.constant 819 : index
    %229 = vector.load %arg25[%c0_257, %c819] : memref<2x1092xf32, #tpu.memory_space<vmem>>, vector<1x91xf32>
    tpu.vector_store %arg25[%c0_257, %c819], %228 {strides = array<i32>} : memref<2x1092xf32, #tpu.memory_space<vmem>>, vector<1x91xf32>,
    %c10 = arith.constant 10 : index
    %c0_258 = arith.constant 0 : index
    %230 = vector.load %arg24[%c10, %c0_258] : memref<12x182xf32, #tpu.memory_space<vmem>>, vector<1x91xf32>
    %c0_259 = arith.constant 0 : index
    %c910 = arith.constant 910 : index
    %231 = vector.load %arg25[%c0_259, %c910] : memref<2x1092xf32, #tpu.memory_space<vmem>>, vector<1x91xf32>
    tpu.vector_store %arg25[%c0_259, %c910], %230 {strides = array<i32>} : memref<2x1092xf32, #tpu.memory_space<vmem>>, vector<1x91xf32>,
    %c11 = arith.constant 11 : index
    %c0_260 = arith.constant 0 : index
    %232 = vector.load %arg24[%c11, %c0_260] : memref<12x182xf32, #tpu.memory_space<vmem>>, vector<1x91xf32>
    %c0_261 = arith.constant 0 : index
    %c1001 = arith.constant 1001 : index
    %233 = vector.load %arg25[%c0_261, %c1001] : memref<2x1092xf32, #tpu.memory_space<vmem>>, vector<1x91xf32>
    tpu.vector_store %arg25[%c0_261, %c1001], %232 {strides = array<i32>} : memref<2x1092xf32, #tpu.memory_space<vmem>>, vector<1x91xf32>,
    %c0_262 = arith.constant 0 : index
    %c91_263 = arith.constant 91 : index
    %234 = vector.load %arg24[%c0_262, %c91_263] : memref<12x182xf32, #tpu.memory_space<vmem>>, vector<1x91xf32>
    %c1_264 = arith.constant 1 : index
    %c0_265 = arith.constant 0 : index
    %235 = vector.load %arg25[%c1_264, %c0_265] : memref<2x1092xf32, #tpu.memory_space<vmem>>, vector<1x91xf32>
    tpu.vector_store %arg25[%c1_264, %c0_265], %234 {strides = array<i32>} : memref<2x1092xf32, #tpu.memory_space<vmem>>, vector<1x91xf32>,
    %c1_266 = arith.constant 1 : index
    %c91_267 = arith.constant 91 : index
    %236 = vector.load %arg24[%c1_266, %c91_267] : memref<12x182xf32, #tpu.memory_space<vmem>>, vector<1x91xf32>
    %c1_268 = arith.constant 1 : index
    %c91_269 = arith.constant 91 : index
    %237 = vector.load %arg25[%c1_268, %c91_269] : memref<2x1092xf32, #tpu.memory_space<vmem>>, vector<1x91xf32>
    tpu.vector_store %arg25[%c1_268, %c91_269], %236 {strides = array<i32>} : memref<2x1092xf32, #tpu.memory_space<vmem>>, vector<1x91xf32>,
    %c2_270 = arith.constant 2 : index
    %c91_271 = arith.constant 91 : index
    %238 = vector.load %arg24[%c2_270, %c91_271] : memref<12x182xf32, #tpu.memory_space<vmem>>, vector<1x91xf32>
    %c1_272 = arith.constant 1 : index
    %c182_273 = arith.constant 182 : index
    %239 = vector.load %arg25[%c1_272, %c182_273] : memref<2x1092xf32, #tpu.memory_space<vmem>>, vector<1x91xf32>
    tpu.vector_store %arg25[%c1_272, %c182_273], %238 {strides = array<i32>} : memref<2x1092xf32, #tpu.memory_space<vmem>>, vector<1x91xf32>,
    %c3_274 = arith.constant 3 : index
    %c91_275 = arith.constant 91 : index
    %240 = vector.load %arg24[%c3_274, %c91_275] : memref<12x182xf32, #tpu.memory_space<vmem>>, vector<1x91xf32>
    %c1_276 = arith.constant 1 : index
    %c273_277 = arith.constant 273 : index
    %241 = vector.load %arg25[%c1_276, %c273_277] : memref<2x1092xf32, #tpu.memory_space<vmem>>, vector<1x91xf32>
    tpu.vector_store %arg25[%c1_276, %c273_277], %240 {strides = array<i32>} : memref<2x1092xf32, #tpu.memory_space<vmem>>, vector<1x91xf32>,
    %c4_278 = arith.constant 4 : index
    %c91_279 = arith.constant 91 : index
    %242 = vector.load %arg24[%c4_278, %c91_279] : memref<12x182xf32, #tpu.memory_space<vmem>>, vector<1x91xf32>
    %c1_280 = arith.constant 1 : index
    %c364_281 = arith.constant 364 : index
    %243 = vector.load %arg25[%c1_280, %c364_281] : memref<2x1092xf32, #tpu.memory_space<vmem>>, vector<1x91xf32>
    tpu.vector_store %arg25[%c1_280, %c364_281], %242 {strides = array<i32>} : memref<2x1092xf32, #tpu.memory_space<vmem>>, vector<1x91xf32>,
    %c5_282 = arith.constant 5 : index
    %c91_283 = arith.constant 91 : index
    %244 = vector.load %arg24[%c5_282, %c91_283] : memref<12x182xf32, #tpu.memory_space<vmem>>, vector<1x91xf32>
    %c1_284 = arith.constant 1 : index
    %c455_285 = arith.constant 455 : index
    %245 = vector.load %arg25[%c1_284, %c455_285] : memref<2x1092xf32, #tpu.memory_space<vmem>>, vector<1x91xf32>
    tpu.vector_store %arg25[%c1_284, %c455_285], %244 {strides = array<i32>} : memref<2x1092xf32, #tpu.memory_space<vmem>>, vector<1x91xf32>,
    %c6_286 = arith.constant 6 : index
    %c91_287 = arith.constant 91 : index
    %246 = vector.load %arg24[%c6_286, %c91_287] : memref<12x182xf32, #tpu.memory_space<vmem>>, vector<1x91xf32>
    %c1_288 = arith.constant 1 : index
    %c546_289 = arith.constant 546 : index
    %247 = vector.load %arg25[%c1_288, %c546_289] : memref<2x1092xf32, #tpu.memory_space<vmem>>, vector<1x91xf32>
    tpu.vector_store %arg25[%c1_288, %c546_289], %246 {strides = array<i32>} : memref<2x1092xf32, #tpu.memory_space<vmem>>, vector<1x91xf32>,
    %c7_290 = arith.constant 7 : index
    %c91_291 = arith.constant 91 : index
    %248 = vector.load %arg24[%c7_290, %c91_291] : memref<12x182xf32, #tpu.memory_space<vmem>>, vector<1x91xf32>
    %c1_292 = arith.constant 1 : index
    %c637_293 = arith.constant 637 : index
    %249 = vector.load %arg25[%c1_292, %c637_293] : memref<2x1092xf32, #tpu.memory_space<vmem>>, vector<1x91xf32>
    tpu.vector_store %arg25[%c1_292, %c637_293], %248 {strides = array<i32>} : memref<2x1092xf32, #tpu.memory_space<vmem>>, vector<1x91xf32>,
    %c8_294 = arith.constant 8 : index
    %c91_295 = arith.constant 91 : index
    %250 = vector.load %arg24[%c8_294, %c91_295] : memref<12x182xf32, #tpu.memory_space<vmem>>, vector<1x91xf32>
    %c1_296 = arith.constant 1 : index
    %c728_297 = arith.constant 728 : index
    %251 = vector.load %arg25[%c1_296, %c728_297] : memref<2x1092xf32, #tpu.memory_space<vmem>>, vector<1x91xf32>
    tpu.vector_store %arg25[%c1_296, %c728_297], %250 {strides = array<i32>} : memref<2x1092xf32, #tpu.memory_space<vmem>>, vector<1x91xf32>,
    %c9_298 = arith.constant 9 : index
    %c91_299 = arith.constant 91 : index
    %252 = vector.load %arg24[%c9_298, %c91_299] : memref<12x182xf32, #tpu.memory_space<vmem>>, vector<1x91xf32>
    %c1_300 = arith.constant 1 : index
    %c819_301 = arith.constant 819 : index
    %253 = vector.load %arg25[%c1_300, %c819_301] : memref<2x1092xf32, #tpu.memory_space<vmem>>, vector<1x91xf32>
    tpu.vector_store %arg25[%c1_300, %c819_301], %252 {strides = array<i32>} : memref<2x1092xf32, #tpu.memory_space<vmem>>, vector<1x91xf32>,
    %c10_302 = arith.constant 10 : index
    %c91_303 = arith.constant 91 : index
    %254 = vector.load %arg24[%c10_302, %c91_303] : memref<12x182xf32, #tpu.memory_space<vmem>>, vector<1x91xf32>
    %c1_304 = arith.constant 1 : index
    %c910_305 = arith.constant 910 : index
    %255 = vector.load %arg25[%c1_304, %c910_305] : memref<2x1092xf32, #tpu.memory_space<vmem>>, vector<1x91xf32>
    tpu.vector_store %arg25[%c1_304, %c910_305], %254 {strides = array<i32>} : memref<2x1092xf32, #tpu.memory_space<vmem>>, vector<1x91xf32>,
    %c11_306 = arith.constant 11 : index
    %c91_307 = arith.constant 91 : index
    %256 = vector.load %arg24[%c11_306, %c91_307] : memref<12x182xf32, #tpu.memory_space<vmem>>, vector<1x91xf32>
    %c1_308 = arith.constant 1 : index
    %c1001_309 = arith.constant 1001 : index
    %257 = vector.load %arg25[%c1_308, %c1001_309] : memref<2x1092xf32, #tpu.memory_space<vmem>>, vector<1x91xf32>
    tpu.vector_store %arg25[%c1_308, %c1001_309], %256 {strides = array<i32>} : memref<2x1092xf32, #tpu.memory_space<vmem>>, vector<1x91xf32>,
    %c0_310 = arith.constant 0 : index
    %c0_311 = arith.constant 0 : index
    %258 = vector.load %arg25[%c0_310, %c0_311] : memref<2x1092xf32, #tpu.memory_space<vmem>>, vector<2x1092xf32>
    %259 = arith.truncf %258 : vector<2x1092xf32> to vector<2x1092xbf16>
    %c0_312 = arith.constant 0 : index
    %c0_313 = arith.constant 0 : index
    %260 = vector.load %arg13[%c0_312, %c0_313] : memref<1092x512xbf16, #tpu.memory_space<vmem>>, vector<1092x512xbf16>
    %cst_314 = arith.constant dense<0.000000e+00> : vector<2x512xf32>
    %261 = tpu.matmul %259, %260, %cst_314 {dimension_numbers = #tpu.dot_dimension_numbers<[1], [0], [0], [1], [0, 0, 1, 1], [], []>} : vector<2x1092xbf16>, vector<1092x512xbf16>, vector<2x512xf32> -> vector<2x512xf32>
    %c0_315 = arith.constant 0 : index
    %c0_316 = arith.constant 0 : index
    %262 = vector.load %arg14[%c0_315, %c0_316] : memref<1x512xf32, #tpu.memory_space<vmem>>, vector<1x512xf32>
    %263 = vector.broadcast %262 : vector<1x512xf32> to vector<2x512xf32>
    %264 = arith.addf %261, %263 : vector<2x512xf32>
    %cst_317 = arith.constant 0.000000e+00 : f32
    %265 = vector.broadcast %cst_317 : f32 to vector<2x512xf32>
    %266 = arith.maximumf %264, %265 : vector<2x512xf32>
    %cst_318 = arith.constant dense<0.000000e+00> : vector<512xf32>
    %267 = vector.multi_reduction <add>, %266, %cst_318 [0] : vector<2x512xf32> to vector<512xf32>
    %268 = vector.shape_cast %267 : vector<512xf32> to vector<1x512xf32>
    %cst_319 = arith.constant 2.000000e+00 : f32
    %269 = vector.broadcast %cst_319 : f32 to vector<1x512xf32>
    %270 = arith.divf %268, %269 : vector<1x512xf32>
    %271 = arith.mulf %266, %266 : vector<2x512xf32>
    %cst_320 = arith.constant dense<0.000000e+00> : vector<512xf32>
    %272 = vector.multi_reduction <add>, %271, %cst_320 [0] : vector<2x512xf32> to vector<512xf32>
    %273 = vector.shape_cast %272 : vector<512xf32> to vector<1x512xf32>
    %cst_321 = arith.constant 2.000000e+00 : f32
    %274 = vector.broadcast %cst_321 : f32 to vector<1x512xf32>
    %275 = arith.divf %273, %274 : vector<1x512xf32>
    %276 = arith.mulf %270, %270 : vector<1x512xf32>
    %277 = arith.subf %275, %276 : vector<1x512xf32>
    %cst_322 = arith.constant 0.000000e+00 : f32
    %278 = vector.broadcast %cst_322 : f32 to vector<1x512xf32>
    %279 = arith.maximumf %277, %278 : vector<1x512xf32>
    %c0_323 = arith.constant 0 : index
    %c0_324 = arith.constant 0 : index
    %280 = vector.load %arg15[%c0_323, %c0_324] : memref<1x512xf32, #tpu.memory_space<vmem>>, vector<1x512xf32>
    %cst_325 = arith.constant 9.99999974E-6 : f32
    %281 = vector.broadcast %cst_325 : f32 to vector<1x512xf32>
    %282 = arith.addf %279, %281 : vector<1x512xf32>
    %283 = math.rsqrt %282 : vector<1x512xf32>
    %284 = arith.mulf %280, %283 : vector<1x512xf32>
    %285 = vector.broadcast %284 : vector<1x512xf32> to vector<2x512xf32>
    %286 = arith.mulf %266, %285 : vector<2x512xf32>
    %c0_326 = arith.constant 0 : index
    %c0_327 = arith.constant 0 : index
    %287 = vector.load %arg16[%c0_326, %c0_327] : memref<1x512xf32, #tpu.memory_space<vmem>>, vector<1x512xf32>
    %288 = arith.mulf %270, %284 : vector<1x512xf32>
    %289 = arith.subf %287, %288 : vector<1x512xf32>
    %290 = vector.broadcast %289 : vector<1x512xf32> to vector<2x512xf32>
    %291 = arith.addf %286, %290 : vector<2x512xf32>
    %c0_328 = arith.constant 0 : index
    %c0_329 = arith.constant 0 : index
    %292 = vector.load %arg17[%c0_328, %c0_329] : memref<512x10xf32, #tpu.memory_space<vmem>>, vector<512x10xf32>
    %cst_330 = arith.constant dense<0.000000e+00> : vector<2x10xf32>
    %293 = tpu.matmul %291, %292, %cst_330 {dimension_numbers = #tpu.dot_dimension_numbers<[1], [0], [0], [1], [0, 0, 1, 1], [], []>} : vector<2x512xf32>, vector<512x10xf32>, vector<2x10xf32> -> vector<2x10xf32>
    %c0_331 = arith.constant 0 : index
    %c0_332 = arith.constant 0 : index
    %294 = vector.load %arg18[%c0_331, %c0_332] : memref<1x10xf32, #tpu.memory_space<vmem>>, vector<1x10xf32>
    %295 = vector.broadcast %294 : vector<1x10xf32> to vector<2x10xf32>
    %296 = arith.addf %293, %295 : vector<2x10xf32>
    %c0_333 = arith.constant 0 : index
    %c0_334 = arith.constant 0 : index
    %297 = vector.load %arg19[%c0_333, %c0_334] : memref<2x10xf32, #tpu.memory_space<vmem>>, vector<2x10xf32>
    tpu.vector_store %arg19[%c0_333, %c0_334], %296 {strides = array<i32>} : memref<2x10xf32, #tpu.memory_space<vmem>>, vector<2x10xf32>,
    return
  }
}

</mosaic_0001>

<llo_original>
// kernel: cnn1d_forward.1
$region0: #{cnn1d_forward.1}
  #allocation0 [shape = 'u32[]', space=smem, size = 0x4, offset = 0x4, fixed_abs, tag = 'smem constant byte address 0x4 - core index']
  #allocation1 [shape = 'u32[72,128]{1,0:T(1,128)}', space=vmem, size = 0x9000, scoped, tag = 'internal scratch']
  #allocation2 [shape = 'f32[3,776]{1,0:T(4,128)}', space=vmem, size = 0x3800, scoped, tag = 'scratch operand']
  #allocation3 [shape = 'f32[27,380]{1,0:T(8,128)}', space=vmem, size = 0xc000, scoped, tag = 'scratch operand']
  #allocation4 [shape = 'f32[6,380]{1,0:T(8,128)}', space=vmem, size = 0x3000, scoped, tag = 'scratch operand']
  #allocation5 [shape = 'f32[54,182]{1,0:T(8,128)}', space=vmem, size = 0xe000, scoped, tag = 'scratch operand']
  #allocation6 [shape = 'f32[12,182]{1,0:T(8,128)}', space=vmem, size = 0x4000, scoped, tag = 'scratch operand']
  #allocation7 [shape = 'f32[2,1092]{1,0:T(2,128)}', space=vmem, size = 0x2400, scoped, tag = 'scratch operand']
  %s0 = inlined_call_operand.vmem [shape: f32[9,776], index: 0, kind: input, shape index: {}]
  %s1 = inlined_call_operand.vmem [shape: f32[3,9], index: 1, kind: input, shape index: {}]
  %s2 = inlined_call_operand.vmem [shape: f32[3,1], index: 2, kind: input, shape index: {}]
  %s3 = inlined_call_operand.vmem [shape: f32[3,1], index: 3, kind: input, shape index: {}]
  %s4 = inlined_call_operand.vmem [shape: f32[3,1], index: 4, kind: input, shape index: {}]
  %s5 = inlined_call_operand.vmem [shape: f32[6,27], index: 5, kind: input, shape index: {}]
  %s6 = inlined_call_operand.vmem [shape: f32[6,1], index: 6, kind: input, shape index: {}]
  %s7 = inlined_call_operand.vmem [shape: f32[6,1], index: 7, kind: input, shape index: {}]
  %s8 = inlined_call_operand.vmem [shape: f32[6,1], index: 8, kind: input, shape index: {}]
  %s9 = inlined_call_operand.vmem [shape: f32[12,54], index: 9, kind: input, shape index: {}]
  %s10 = inlined_call_operand.vmem [shape: f32[12,1], index: 10, kind: input, shape index: {}]
  %s11 = inlined_call_operand.vmem [shape: f32[12,1], index: 11, kind: input, shape index: {}]
  %s12 = inlined_call_operand.vmem [shape: f32[12,1], index: 12, kind: input, shape index: {}]
  %s13 = inlined_call_operand.vmem [shape: bf16[1092,512], index: 13, kind: input, shape index: {}]
  %s14 = inlined_call_operand.vmem [shape: f32[1,512], index: 14, kind: input, shape index: {}]
  %s15 = inlined_call_operand.vmem [shape: f32[1,512], index: 15, kind: input, shape index: {}]
  %s16 = inlined_call_operand.vmem [shape: f32[1,512], index: 16, kind: input, shape index: {}]
  %s17 = inlined_call_operand.vmem [shape: f32[512,10], index: 17, kind: input, shape index: {}]
  %s18 = inlined_call_operand.vmem [shape: f32[1,10], index: 18, kind: input, shape index: {}]
  %s19 = inlined_call_operand.hbm [shape: f32[2,10], index: 19, kind: output, shape index: {}]
  %s20 = sld [smem:[#allocation0]]
  $region86: #{cnn1d_forward.1} parent=0
    _
  %s22 = ssub.s32 1, %s20
  %s23 = scalar_select 0, %s22, %s20
  $region1: #{cnn1d_forward.1} parent=0
    #allocation8 [shape = 'u8[1024]{0}', space=vmem, size = 0x400, scoped, tag = 'output window, operand 0, single buffered']
    #allocation9 [shape = 's32[1]{0}', space=sflag, size = 0x4, scoped, tag = 'scoped memory for cnn1d_forward.1']
    %24 = vsyncpa [#allocation9], 0
    // Predicated region
    $region2: #{cnn1d_forward.1} parent=1 // pred_check
      _
    $region3: #{cnn1d_forward.1} parent=1 // pred_check_branch
      %26 = sbr.rel (0) target = $region5
    $region4: #{cnn1d_forward.1} parent=1 // pred_region
      _
    $region5: #{cnn1d_forward.1} parent=1 // pred_fallthru
      _
    // Predicated region
    $region6: #{cnn1d_forward.1} parent=1 // pred_check
      _
    $region7: #{cnn1d_forward.1} parent=1 // pred_check_branch
      %28 = sbr.rel (0) target = $region9
    $region8: #{cnn1d_forward.1} parent=1 // pred_region
      _
    $region9: #{cnn1d_forward.1} parent=1 // pred_fallthru
      _
    // Predicated region
    $region10: #{cnn1d_forward.1} parent=1 // pred_check
      _
    $region11: #{cnn1d_forward.1} parent=1 // pred_check_branch
      %30 = sbr.rel (0) target = $region13
    $region12: #{cnn1d_forward.1} parent=1 // pred_region
      _
    $region13: #{cnn1d_forward.1} parent=1 // pred_fallthru
      _
    // Predicated region
    $region14: #{cnn1d_forward.1} parent=1 // pred_check
      _
    $region15: #{cnn1d_forward.1} parent=1 // pred_check_branch
      %32 = sbr.rel (0) target = $region17
    $region16: #{cnn1d_forward.1} parent=1 // pred_region
      _
    $region17: #{cnn1d_forward.1} parent=1 // pred_fallthru
      _
    // Predicated region
    $region18: #{cnn1d_forward.1} parent=1 // pred_check
      _
    $region19: #{cnn1d_forward.1} parent=1 // pred_check_branch
      %34 = sbr.rel (0) target = $region21
    $region20: #{cnn1d_forward.1} parent=1 // pred_region
      _
    $region21: #{cnn1d_forward.1} parent=1 // pred_fallthru
      _
    // Predicated region
    $region22: #{cnn1d_forward.1} parent=1 // pred_check
      _
    $region23: #{cnn1d_forward.1} parent=1 // pred_check_branch
      %36 = sbr.rel (0) target = $region25
    $region24: #{cnn1d_forward.1} parent=1 // pred_region
      _
    $region25: #{cnn1d_forward.1} parent=1 // pred_fallthru
      _
    // Predicated region
    $region26: #{cnn1d_forward.1} parent=1 // pred_check
      _
    $region27: #{cnn1d_forward.1} parent=1 // pred_check_branch
      %38 = sbr.rel (0) target = $region29
    $region28: #{cnn1d_forward.1} parent=1 // pred_region
      _
    $region29: #{cnn1d_forward.1} parent=1 // pred_fallthru
      _
    // Predicated region
    $region30: #{cnn1d_forward.1} parent=1 // pred_check
      _
    $region31: #{cnn1d_forward.1} parent=1 // pred_check_branch
      %40 = sbr.rel (0) target = $region33
    $region32: #{cnn1d_forward.1} parent=1 // pred_region
      _
    $region33: #{cnn1d_forward.1} parent=1 // pred_fallthru
      _
    // Predicated region
    $region34: #{cnn1d_forward.1} parent=1 // pred_check
      _
    $region35: #{cnn1d_forward.1} parent=1 // pred_check_branch
      %42 = sbr.rel (0) target = $region37
    $region36: #{cnn1d_forward.1} parent=1 // pred_region
      _
    $region37: #{cnn1d_forward.1} parent=1 // pred_fallthru
      _
    // Predicated region
    $region38: #{cnn1d_forward.1} parent=1 // pred_check
      _
    $region39: #{cnn1d_forward.1} parent=1 // pred_check_branch
      %44 = sbr.rel (0) target = $region41
    $region40: #{cnn1d_forward.1} parent=1 // pred_region
      _
    $region41: #{cnn1d_forward.1} parent=1 // pred_fallthru
      _
    // Predicated region
    $region42: #{cnn1d_forward.1} parent=1 // pred_check
      _
    $region43: #{cnn1d_forward.1} parent=1 // pred_check_branch
      %46 = sbr.rel (0) target = $region45
    $region44: #{cnn1d_forward.1} parent=1 // pred_region
      _
    $region45: #{cnn1d_forward.1} parent=1 // pred_fallthru
      _
    // Predicated region
    $region46: #{cnn1d_forward.1} parent=1 // pred_check
      _
    $region47: #{cnn1d_forward.1} parent=1 // pred_check_branch
      %48 = sbr.rel (0) target = $region49
    $region48: #{cnn1d_forward.1} parent=1 // pred_region
      _
    $region49: #{cnn1d_forward.1} parent=1 // pred_fallthru
      _
    // Predicated region
    $region50: #{cnn1d_forward.1} parent=1 // pred_check
      _
    $region51: #{cnn1d_forward.1} parent=1 // pred_check_branch
      %50 = sbr.rel (0) target = $region53
    $region52: #{cnn1d_forward.1} parent=1 // pred_region
      _
    $region53: #{cnn1d_forward.1} parent=1 // pred_fallthru
      _
    // Predicated region
    $region54: #{cnn1d_forward.1} parent=1 // pred_check
      _
    $region55: #{cnn1d_forward.1} parent=1 // pred_check_branch
      %52 = sbr.rel (0) target = $region57
    $region56: #{cnn1d_forward.1} parent=1 // pred_region
      _
    $region57: #{cnn1d_forward.1} parent=1 // pred_fallthru
      _
    // Predicated region
    $region58: #{cnn1d_forward.1} parent=1 // pred_check
      _
    $region59: #{cnn1d_forward.1} parent=1 // pred_check_branch
      %54 = sbr.rel (0) target = $region61
    $region60: #{cnn1d_forward.1} parent=1 // pred_region
      _
    $region61: #{cnn1d_forward.1} parent=1 // pred_fallthru
      _
    // Predicated region
    $region62: #{cnn1d_forward.1} parent=1 // pred_check
      _
    $region63: #{cnn1d_forward.1} parent=1 // pred_check_branch
      %56 = sbr.rel (0) target = $region65
    $region64: #{cnn1d_forward.1} parent=1 // pred_region
      _
    $region65: #{cnn1d_forward.1} parent=1 // pred_fallthru
      _
    // Predicated region
    $region66: #{cnn1d_forward.1} parent=1 // pred_check
      _
    $region67: #{cnn1d_forward.1} parent=1 // pred_check_branch
      %58 = sbr.rel (0) target = $region69
    $region68: #{cnn1d_forward.1} parent=1 // pred_region
      _
    $region69: #{cnn1d_forward.1} parent=1 // pred_fallthru
      _
    // Predicated region
    $region70: #{cnn1d_forward.1} parent=1 // pred_check
      _
    $region71: #{cnn1d_forward.1} parent=1 // pred_check_branch
      %60 = sbr.rel (0) target = $region73
    $region72: #{cnn1d_forward.1} parent=1 // pred_region
      _
    $region73: #{cnn1d_forward.1} parent=1 // pred_fallthru
      _
    // Predicated region
    $region74: #{cnn1d_forward.1} parent=1 // pred_check
      _
    $region75: #{cnn1d_forward.1} parent=1 // pred_check_branch
      %62 = sbr.rel (0) target = $region77
    $region76: #{cnn1d_forward.1} parent=1 // pred_region
      _
    $region77: #{cnn1d_forward.1} parent=1 // pred_fallthru
      _
    %v64 = vld [vmem:[%s1] sm:$0x7]
    %v65 = vld [vmem:[%s0] sm:$0xff]
    %v66 = vld [vmem:[%s0 + $0x8] sm:$0xff]
    %v67 = vld [vmem:[%s0 + $0x10] sm:$0xff]
    %v68 = vld [vmem:[%s0 + $0x18] sm:$0xff]
    %v69 = vld [vmem:[%s0 + $0x20] sm:$0xff]
    %v70 = vld [vmem:[%s0 + $0x28] sm:$0xff]
    %v71 = vld [vmem:[%s0 + $0x30] sm:$0xff]
    %v72 = vld [vmem:[%s0 + $0x38] sm:$0x1]
    %v73 = vld [vmem:[%s0 + $0x40] sm:$0x1]
    %v74 = vld [vmem:[%s0 + $0x48] sm:$0x1]
    %v75 = vld [vmem:[%s0 + $0x50] sm:$0x1]
    %v76 = vld [vmem:[%s0 + $0x58] sm:$0x1]
    %v77 = vld [vmem:[%s0 + $0x60] sm:$0x1]
    %v78 = vld [vmem:[%s0 + $0x68] sm:$0x1]
    %v79 = vld [vmem:[%s2] sm:$0x7]
    %81 = vset.pattern.permute.xlu0 0
    %82 = vperm.xlu0 %81, %v79
    %v83 = vpop.permute.xlu0 %82
    %vm85 = vcmask 72704
    %v87 = vsel %vm85, %v64, 0
    %vm89 = vcmask 1040384
    %v91 = vsel %vm89, %v72, 0
    %v94 = vsel %vm89, %v73, 0
    %v97 = vsel %vm89, %v74, 0
    %v100 = vsel %vm89, %v75, 0
    %v103 = vsel %vm89, %v76, 0
    %v106 = vsel %vm89, %v77, 0
    %v109 = vsel %vm89, %v78, 0
    %111 = vmatpush.msra.mxu0 0.0
    %112 = vmatpush.msra.mxu0 0.0
    %113 = vmatpush.msra.mxu0 0.0
    %114 = vmatpush.msra.mxu0 0.0
    %115 = vmatpush.msra.mxu0 0.0
    %116 = vmatpush.msra.mxu0 0.0
    %117 = vmatpush.msra.mxu0 0.0
    %118 = vmatpush.msra.mxu0 0.0
    %119 = vmatpush.msra.mxu0 0.0
    %120 = vmatpush.msra.mxu0 0.0
    %121 = vmatpush.msra.mxu0 0.0
    %122 = vmatpush.msra.mxu0 0.0
    %123 = vmatpush.msra.mxu0 0.0
    %124 = vmatpush.msra.mxu0 0.0
    %125 = vmatpush.msra.mxu0 %v91
    %126 = vmatpush.msra.mxu0 %v65
    %127 = vmatmul.f32.gmra.mxu0 %v87
    %v128 = vpop.f32.mrf.mxu0
    %v129 = vadd.f32 %v83, %v128
    %130 = vdwg.mxu0
    %131 = vmatpush.msra.mxu0 0.0
    %132 = vmatpush.msra.mxu0 0.0
    %133 = vmatpush.msra.mxu0 0.0
    %134 = vmatpush.msra.mxu0 0.0
    %135 = vmatpush.msra.mxu0 0.0
    %136 = vmatpush.msra.mxu0 0.0
    %137 = vmatpush.msra.mxu0 0.0
    %138 = vmatpush.msra.mxu0 0.0
    %139 = vmatpush.msra.mxu0 0.0
    %140 = vmatpush.msra.mxu0 0.0
    %141 = vmatpush.msra.mxu0 0.0
    %142 = vmatpush.msra.mxu0 0.0
    %143 = vmatpush.msra.mxu0 0.0
    %144 = vmatpush.msra.mxu0 0.0
    %145 = vmatpush.msra.mxu0 %v94
    %146 = vmatpush.msra.mxu0 %v66
    %147 = vmatmul.f32.gmra.mxu0 %v87
    %v148 = vpop.f32.mrf.mxu0
    %v149 = vadd.f32 %v83, %v148
    %150 = vdwg.mxu0
    %151 = vmatpush.msra.mxu0 0.0
    %152 = vmatpush.msra.mxu0 0.0
    %153 = vmatpush.msra.mxu0 0.0
    %154 = vmatpush.msra.mxu0 0.0
    %155 = vmatpush.msra.mxu0 0.0
    %156 = vmatpush.msra.mxu0 0.0
    %157 = vmatpush.msra.mxu0 0.0
    %158 = vmatpush.msra.mxu0 0.0
    %159 = vmatpush.msra.mxu0 0.0
    %160 = vmatpush.msra.mxu0 0.0
    %161 = vmatpush.msra.mxu0 0.0
    %162 = vmatpush.msra.mxu0 0.0
    %163 = vmatpush.msra.mxu0 0.0
    %164 = vmatpush.msra.mxu0 0.0
    %165 = vmatpush.msra.mxu0 %v97
    %166 = vmatpush.msra.mxu0 %v67
    %167 = vmatmul.f32.gmra.mxu0 %v87
    %v168 = vpop.f32.mrf.mxu0
    %v169 = vadd.f32 %v83, %v168
    %170 = vdwg.mxu0
    %171 = vmatpush.msra.mxu0 0.0
    %172 = vmatpush.msra.mxu0 0.0
    %173 = vmatpush.msra.mxu0 0.0
    %174 = vmatpush.msra.mxu0 0.0
    %175 = vmatpush.msra.mxu0 0.0
    %176 = vmatpush.msra.mxu0 0.0
    %177 = vmatpush.msra.mxu0 0.0
    %178 = vmatpush.msra.mxu0 0.0
    %179 = vmatpush.msra.mxu0 0.0
    %180 = vmatpush.msra.mxu0 0.0
    %181 = vmatpush.msra.mxu0 0.0
    %182 = vmatpush.msra.mxu0 0.0
    %183 = vmatpush.msra.mxu0 0.0
    %184 = vmatpush.msra.mxu0 0.0
    %185 = vmatpush.msra.mxu0 %v100
    %186 = vmatpush.msra.mxu0 %v68
    %187 = vmatmul.f32.gmra.mxu0 %v87
    %v188 = vpop.f32.mrf.mxu0
    %v189 = vadd.f32 %v83, %v188
    %190 = vdwg.mxu0
    %191 = vmatpush.msra.mxu0 0.0
    %192 = vmatpush.msra.mxu0 0.0
    %193 = vmatpush.msra.mxu0 0.0
    %194 = vmatpush.msra.mxu0 0.0
    %195 = vmatpush.msra.mxu0 0.0
    %196 = vmatpush.msra.mxu0 0.0
    %197 = vmatpush.msra.mxu0 0.0
    %198 = vmatpush.msra.mxu0 0.0
    %199 = vmatpush.msra.mxu0 0.0
    %200 = vmatpush.msra.mxu0 0.0
    %201 = vmatpush.msra.mxu0 0.0
    %202 = vmatpush.msra.mxu0 0.0
    %203 = vmatpush.msra.mxu0 0.0
    %204 = vmatpush.msra.mxu0 0.0
    %205 = vmatpush.msra.mxu0 %v103
    %206 = vmatpush.msra.mxu0 %v69
    %207 = vmatmul.f32.gmra.mxu0 %v87
    %v208 = vpop.f32.mrf.mxu0
    %v209 = vadd.f32 %v83, %v208
    %210 = vdwg.mxu0
    %211 = vmatpush.msra.mxu0 0.0
    %212 = vmatpush.msra.mxu0 0.0
    %213 = vmatpush.msra.mxu0 0.0
    %214 = vmatpush.msra.mxu0 0.0
    %215 = vmatpush.msra.mxu0 0.0
    %216 = vmatpush.msra.mxu0 0.0
    %217 = vmatpush.msra.mxu0 0.0
    %218 = vmatpush.msra.mxu0 0.0
    %219 = vmatpush.msra.mxu0 0.0
    %220 = vmatpush.msra.mxu0 0.0
    %221 = vmatpush.msra.mxu0 0.0
    %222 = vmatpush.msra.mxu0 0.0
    %223 = vmatpush.msra.mxu0 0.0
    %224 = vmatpush.msra.mxu0 0.0
    %225 = vmatpush.msra.mxu0 %v106
    %226 = vmatpush.msra.mxu0 %v70
    %227 = vmatmul.f32.gmra.mxu0 %v87
    %v228 = vpop.f32.mrf.mxu0
    %v229 = vadd.f32 %v83, %v228
    %230 = vdwg.mxu0
    %231 = vmatpush.msra.mxu0 0.0
    %232 = vmatpush.msra.mxu0 0.0
    %233 = vmatpush.msra.mxu0 0.0
    %234 = vmatpush.msra.mxu0 0.0
    %235 = vmatpush.msra.mxu0 0.0
    %236 = vmatpush.msra.mxu0 0.0
    %237 = vmatpush.msra.mxu0 0.0
    %238 = vmatpush.msra.mxu0 0.0
    %239 = vmatpush.msra.mxu0 0.0
    %240 = vmatpush.msra.mxu0 0.0
    %241 = vmatpush.msra.mxu0 0.0
    %242 = vmatpush.msra.mxu0 0.0
    %243 = vmatpush.msra.mxu0 0.0
    %244 = vmatpush.msra.mxu0 0.0
    %245 = vmatpush.msra.mxu0 %v109
    %246 = vmatpush.msra.mxu0 %v71
    %247 = vmatmul.f32.gmra.mxu0 %v87
    %v248 = vpop.f32.mrf.mxu0
    %v249 = vadd.f32 %v83, %v248
    %250 = vdwg.mxu0
    %v251 = vmax.f32 %v129, 0.0
    %v252 = vmax.f32 %v149, 0.0
    %v253 = vmax.f32 %v169, 0.0
    %v254 = vmax.f32 %v189, 0.0
    %v255 = vmax.f32 %v209, 0.0
    %v256 = vmax.f32 %v229, 0.0
    %v257 = vmax.f32 %v249, 0.0
    %v258 = vld [vmem:[%s3] sm:$0x7]
    %v259 = vld [vmem:[%s4] sm:$0x7]
    %vm260 = vcmask 1042432
    %v261 = vsel %vm260, %v251, 0.0
    %v262 = vsel %vm260, %v252, 0.0
    %v263 = vadd.f32 %v261, %v262
    %v264 = vsel %vm260, %v253, 0.0
    %v265 = vadd.f32 %v263, %v264
    %v266 = vsel %vm260, %v254, 0.0
    %v267 = vadd.f32 %v265, %v266
    %v268 = vsel %vm260, %v255, 0.0
    %v269 = vadd.f32 %v267, %v268
    %v270 = vsel %vm260, %v256, 0.0
    %v271 = vadd.f32 %v269, %v270
    %vm272 = vcmask 59392
    %v273 = vsel %vm272, %v257, 0.0
    %v274 = vadd.f32 %v271, %v273
    %275 = vadd.xlane.f32.xlu0 %v274
    %v276 = vpop.xlane.xlu0 %275
    %v277 = vrcp.pop 776.0
    %v278 = vmul.f32 776.0, %v277
    %v279 = vsub.f32 1.0, %v278
    %v280 = vmul.f32 %v277, %v279
    %v281 = vadd.f32 %v277, %v280
    %vm282 = vweird.f32 %v277
    %v283 = vsel %vm282, %v277, %v281
    %v284 = vmul.f32 %v276, %v283
    %v285 = vmul.f32 %v251, %v251
    %v286 = vmul.f32 %v252, %v252
    %v287 = vmul.f32 %v253, %v253
    %v288 = vmul.f32 %v254, %v254
    %v289 = vmul.f32 %v255, %v255
    %v290 = vmul.f32 %v256, %v256
    %v291 = vmul.f32 %v257, %v257
    %v292 = vsel %vm260, %v285, 0.0
    %v293 = vsel %vm260, %v286, 0.0
    %v294 = vadd.f32 %v292, %v293
    %v295 = vsel %vm260, %v287, 0.0
    %v296 = vadd.f32 %v294, %v295
    %v297 = vsel %vm260, %v288, 0.0
    %v298 = vadd.f32 %v296, %v297
    %v299 = vsel %vm260, %v289, 0.0
    %v300 = vadd.f32 %v298, %v299
    %v301 = vsel %vm260, %v290, 0.0
    %v302 = vadd.f32 %v300, %v301
    %v303 = vsel %vm272, %v291, 0.0
    %v304 = vadd.f32 %v302, %v303
    %305 = vadd.xlane.f32.xlu0 %v304
    %v306 = vpop.xlane.xlu0 %305
    %v307 = vmul.f32 %v306, %v283
    %v308 = vmul.f32 %v284, %v284
    %v309 = vsub.f32 %v307, %v308
    %v310 = vmax.f32 %v309, 0.0
    %v311 = vadd.f32 %v310, 1e-05
    %v312 = vrsqrt.pop %v311
    %v313 = vmul.f32 %v312, %v311
    %v314 = vmul.f32 %v313, %v312
    %v315 = vmul.f32 0.5, %v314
    %v316 = vsub.f32 1.5, %v315
    %v317 = vmul.f32 %v312, %v316
    %vm318 = vweird.f32 %v311
    %vm319 = vweird.f32 %v312
    %vm320 = vmor %vm318, %vm319
    %v321 = vsel %vm320, %v312, %v317
    %v322 = vmul.f32 %v258, %v321
    %324 = vset.pattern.permute.xlu0 0
    %325 = vperm.xlu0 %324, %v322
    %v326 = vpop.permute.xlu0 %325
    %v328 = vmul.f32 %v251, %v326
    %v329 = vmul.f32 %v252, %v326
    %v330 = vmul.f32 %v253, %v326
    %v331 = vmul.f32 %v254, %v326
    %v332 = vmul.f32 %v255, %v326
    %v333 = vmul.f32 %v256, %v326
    %v334 = vmul.f32 %v257, %v326
    %v335 = vmul.f32 %v284, %v322
    %v336 = vsub.f32 %v259, %v335
    %338 = vset.pattern.permute.xlu0 0
    %339 = vperm.xlu0 %338, %v336
    %v340 = vpop.permute.xlu0 %339
    %v342 = vadd.f32 %v328, %v340
    %v343 = vadd.f32 %v329, %v340
    %v344 = vadd.f32 %v330, %v340
    %v345 = vadd.f32 %v331, %v340
    %v346 = vadd.f32 %v332, %v340
    %v347 = vadd.f32 %v333, %v340
    %v348 = vadd.f32 %v334, %v340
    %v355 = vrot.slane %v343, 4
    %v356 = vrot.slane %v345, 4
    %v357 = vrot.slane %v347, 4
    %vm358 = vcmask 1043456
    %v359 = vsel %vm358, %v342, %v355
    %v360 = vsel %vm358, %v344, %v356
    %v361 = vsel %vm358, %v346, %v357
    %365 = vst [vmem:[#allocation2] sm:$0x77] %v359
    %366 = vst [vmem:[#allocation2 + $0x8] sm:$0x77] %v360
    %367 = vst [vmem:[#allocation2 + $0x10] sm:$0x77] %v361
    %368 = vst.msk [vmem:[#allocation2 + $0x18] sm:$0x7] %vm272, %v348
    %v369 = vld [vmem:[#allocation2] sm:$0x7]
    %vm370 = vcmask 772096
    %371 = vst.msk [vmem:[#allocation3] sm:$0x7] %vm370, %v369
    %v372 = vld [vmem:[#allocation2 + $0x4] sm:$0x77]
    %374 = vst [vmem:[#allocation1] ss:$2 sm:$0xff] %v372
    %v375 = vld.sshfl [vmem:[#allocation1] sm:$0xff pattern:$0x75316420]
    %v376 = vld.sshfl [vmem:[#allocation1 + $0x8] sm:$0xff pattern:$0x75316420]
    %377 = vrot.lane.b32.xlu0 %v375, 29
    %v378 = vpop.permute.xlu0 %377
    %379 = vrot.lane.b32.xlu0 %v376, 29
    %v380 = vpop.permute.xlu0 %379
    %vm381 = vcmask 236544
    %v382 = vsel %vm381, %v378, %v380
    %vm385 = vcmask 1043192
    %386 = vst.msk [vmem:[#allocation3] sm:$0x7] %vm385, %v378
    %vm387 = vcmask 501760
    %388 = vst.msk [vmem:[#allocation3 + $0x8] sm:$0x7] %vm387, %v382
    %v389 = vld [vmem:[#allocation2 + $0xc] sm:$0x7]
    %391 = vst [vmem:[#allocation1] ss:$2 sm:$0xff] %v389
    %v392 = vld.sshfl [vmem:[#allocation1] sm:$0xff pattern:$0x75316420]
    %393 = vrot.lane.b32.xlu0 %v392, 58
    %v394 = vpop.permute.xlu0 %393
    %vm396 = vcmask 1042928
    %397 = vst.msk [vmem:[#allocation3 + $0x8] sm:$0x7] %vm396, %v394
    %vm398 = vcmask 231424
    %399 = vst.msk [vmem:[#allocation3 + $0x10] sm:$0x7] %vm398, %v394
    %v400 = vld [vmem:[#allocation2 + $0x10] sm:$0x77]
    %402 = vst [vmem:[#allocation1] ss:$2 sm:$0xff] %v400
    %v403 = vld.sshfl [vmem:[#allocation1] sm:$0xff pattern:$0x75316420]
    %v404 = vld.sshfl [vmem:[#allocation1 + $0x8] sm:$0xff pattern:$0x75316420]
    %405 = vrot.lane.b32.xlu0 %v403, 87
    %v406 = vpop.permute.xlu0 %405
    %407 = vrot.lane.b32.xlu0 %v404, 87
    %v408 = vpop.permute.xlu0 %407
    %vm409 = vcmask 711680
    %v410 = vsel %vm409, %v406, %v408
    %vm412 = vcmask 1009896
    %413 = vst.msk [vmem:[#allocation3 + $0x10] sm:$0x7] %vm412, %v410
    %v414 = vld [vmem:[#allocation2] sm:$0x77]
    %416 = vst [vmem:[#allocation1] ss:$2 sm:$0xff] %v414
    %v417 = vld.sshfl [vmem:[#allocation1] sm:$0xff pattern:$0x75316420]
    %v418 = vld.sshfl [vmem:[#allocation1 + $0x8] sm:$0xff pattern:$0x75316420]
    %v419 = vrot.slane %v417, 5
    %v420 = vrot.slane %v418, 5
    %421 = vrot.lane.b32.xlu0 %v419, 31
    %v422 = vpop.permute.xlu0 %421
    %423 = vrot.lane.b32.xlu0 %v420, 31
    %v424 = vpop.permute.xlu0 %423
    %vm425 = vcmask 252928
    %v426 = vsel %vm425, %v422, %v424
    %vm428 = vcmask 775171
    %429 = vst.msk [vmem:[#allocation3] sm:$0x38] %vm428, %v426
    %v430 = vld [vmem:[#allocation2 + $0x8] sm:$0x77]
    %432 = vst [vmem:[#allocation1] ss:$2 sm:$0xff] %v430
    %v433 = vld.sshfl [vmem:[#allocation1] sm:$0xff pattern:$0x75316420]
    %v434 = vld.sshfl [vmem:[#allocation1 + $0x8] sm:$0xff pattern:$0x75316420]
    %v435 = vrot.slane %v433, 5
    %v436 = vrot.slane %v434, 5
    %437 = vrot.lane.b32.xlu0 %v435, 60
    %v438 = vpop.permute.xlu0 %437
    %439 = vrot.lane.b32.xlu0 %v436, 60
    %v440 = vpop.permute.xlu0 %439
    %vm441 = vcmask 490496
    %v442 = vsel %vm441, %v438, %v440
    %vm445 = vcmask 1046267
    %446 = vst.msk [vmem:[#allocation3] sm:$0x38] %vm445, %v438
    %vm447 = vcmask 504835
    %448 = vst.msk [vmem:[#allocation3 + $0x8] sm:$0x38] %vm447, %v442
    %v449 = vld [vmem:[#allocation2 + $0xc] sm:$0x77]
    %451 = vst [vmem:[#allocation1] ss:$2 sm:$0xff] %v449
    %v452 = vld.sshfl [vmem:[#allocation1] sm:$0xff pattern:$0x75316420]
    %v453 = vld.sshfl [vmem:[#allocation1 + $0x8] sm:$0xff pattern:$0x75316420]
    %v454 = vrot.slane %v452, 5
    %v455 = vrot.slane %v453, 5
    %456 = vrot.lane.b32.xlu0 %v454, 89
    %v457 = vpop.permute.xlu0 %456
    %458 = vrot.lane.b32.xlu0 %v455, 89
    %v459 = vpop.permute.xlu0 %458
    %vm460 = vcmask 728064
    %v461 = vsel %vm460, %v457, %v459
    %vm464 = vcmask 1046003
    %465 = vst.msk [vmem:[#allocation3 + $0x8] sm:$0x38] %vm464, %v461
    %vm466 = vcmask 234499
    %467 = vst.msk [vmem:[#allocation3 + $0x10] sm:$0x38] %vm466, %v459
    %v468 = vld [vmem:[#allocation2 + $0x14] sm:$0x77]
    %470 = vst [vmem:[#allocation1] ss:$2 sm:$0xff] %v468
    %v471 = vld.sshfl [vmem:[#allocation1] sm:$0xff pattern:$0x75316420]
    %v472 = vld.sshfl [vmem:[#allocation1 + $0x8] sm:$0xff pattern:$0x75316420]
    %v473 = vrot.slane %v471, 5
    %v474 = vrot.slane %v472, 5
    %475 = vrot.lane.b32.xlu0 %v473, 118
    %v476 = vpop.permute.xlu0 %475
    %477 = vrot.lane.b32.xlu0 %v474, 118
    %v478 = vpop.permute.xlu0 %477
    %vm479 = vcmask 965632
    %v480 = vsel %vm479, %v476, %v478
    %vm482 = vcmask 1012971
    %483 = vst.msk [vmem:[#allocation3 + $0x10] sm:$0x38] %vm482, %v480
    %v484 = vld [vmem:[#allocation2 + $0x4] sm:$0x77]
    %486 = vst [vmem:[#allocation1] ss:$2 sm:$0xff] %v484
    %v487 = vld.sshfl [vmem:[#allocation1] sm:$0xff pattern:$0x75316420]
    %v488 = vld.sshfl [vmem:[#allocation1 + $0x8] sm:$0xff pattern:$0x75316420]
    %v489 = vrot.slane %v487, 2
    %v490 = vrot.slane %v488, 2
    %491 = vrot.lane.b32.xlu0 %v489, 62
    %v492 = vpop.permute.xlu0 %491
    %493 = vrot.lane.b32.xlu0 %v490, 62
    %v494 = vpop.permute.xlu0 %493
    %vm495 = vcmask 506880
    %v496 = vsel %vm495, %v492, %v494
    %vm498 = vcmask 777222
    %499 = vst.msk [vmem:[#allocation3] sm:$0xc0] %vm498, %v496
    %vm500 = vcmask 770048
    %501 = vst.msk [vmem:[#allocation3 + $0x18] sm:$0x1] %vm500, %v496
    %v502 = vld [vmem:[#allocation2] sm:$0x7]
    %504 = vst [vmem:[#allocation1] ss:$2 sm:$0xff] %v502
    %v505 = vld.sshfl [vmem:[#allocation1] sm:$0xff pattern:$0x75316420]
    %v506 = vrot.slane %v505, 2
    %507 = vrot.lane.b32.xlu0 %v506, 94
    %v508 = vpop.permute.xlu0 %507
    %vm510 = vcmask 1048318
    %511 = vst.msk [vmem:[#allocation3] sm:$0xc0] %vm510, %v508
    %vm512 = vcmask 506886
    %513 = vst.msk [vmem:[#allocation3 + $0x8] sm:$0xc0] %vm512, %v508
    %vm514 = vcmask 1041144
    %515 = vst.msk [vmem:[#allocation3 + $0x18] sm:$0x1] %vm514, %v508
    %vm516 = vcmask 499712
    %517 = vst.msk [vmem:[#allocation3 + $0x20] sm:$0x1] %vm516, %v508
    %v518 = vld [vmem:[#allocation2 + $0x10] sm:$0x77]
    %520 = vst [vmem:[#allocation1] ss:$2 sm:$0xff] %v518
    %v521 = vld.sshfl [vmem:[#allocation1] sm:$0xff pattern:$0x75316420]
    %v522 = vld.sshfl [vmem:[#allocation1 + $0x8] sm:$0xff pattern:$0x75316420]
    %v523 = vrot.slane %v521, 2
    %v524 = vrot.slane %v522, 2
    %525 = vrot.lane.b32.xlu0 %v523, 120
    %v526 = vpop.permute.xlu0 %525
    %527 = vrot.lane.b32.xlu0 %v524, 120
    %v528 = vpop.permute.xlu0 %527
    %vm529 = vcmask 982016
    %v530 = vsel %vm529, %v526, %v528
    %vm533 = vcmask 1048054
    %534 = vst.msk [vmem:[#allocation3 + $0x8] sm:$0xc0] %vm533, %v530
    %vm535 = vcmask 236550
    %536 = vst.msk [vmem:[#allocation3 + $0x10] sm:$0xc0] %vm535, %v528
    %vm537 = vcmask 1040880
    %538 = vst.msk [vmem:[#allocation3 + $0x20] sm:$0x1] %vm537, %v530
    %vm539 = vcmask 229376
    %540 = vst.msk [vmem:[#allocation3 + $0x28] sm:$0x1] %vm539, %v528
    %v541 = vld [vmem:[#allocation2 + $0xc] sm:$0x7]
    %543 = vst [vmem:[#allocation1] ss:$2 sm:$0xff] %v541
    %v544 = vld.sshfl [vmem:[#allocation1] sm:$0xff pattern:$0x75316420]
    %v545 = vrot.slane %v544, 2
    %546 = vrot.lane.b32.xlu0 %v545, 24
    %v547 = vpop.permute.xlu0 %546
    %vm549 = vcmask 1015022
    %550 = vst.msk [vmem:[#allocation3 + $0x10] sm:$0xc0] %vm549, %v547
    %vm551 = vcmask 1007848
    %552 = vst.msk [vmem:[#allocation3 + $0x28] sm:$0x1] %vm551, %v547
    %v553 = vld [vmem:[#allocation2 + $0x8] sm:$0x77]
    %555 = vst [vmem:[#allocation1] ss:$2 sm:$0xff] %v553
    %v556 = vld.sshfl [vmem:[#allocation1] sm:$0xff pattern:$0x75316420]
    %v557 = vld.sshfl [vmem:[#allocation1 + $0x8] sm:$0xff pattern:$0x75316420]
    %v558 = vrot.slane %v556, 7
    %v559 = vrot.slane %v557, 7
    %560 = vrot.lane.b32.xlu0 %v558, 93
    %v561 = vpop.permute.xlu0 %560
    %562 = vrot.lane.b32.xlu0 %v559, 93
    %v563 = vpop.permute.xlu0 %562
    %vm564 = vcmask 760832
    %v565 = vsel %vm564, %v561, %v563
    %vm567 = vcmask 773121
    %568 = vst.msk [vmem:[#allocation3 + $0x18] sm:$0xe] %vm567, %v565
    %v569 = vld [vmem:[#allocation2] sm:$0x77]
    %571 = vst [vmem:[#allocation1] ss:$2 sm:$0xff] %v569
    %v572 = vld.sshfl [vmem:[#allocation1] sm:$0xff pattern:$0x75316420]
    %v573 = vld.sshfl [vmem:[#allocation1 + $0x8] sm:$0xff pattern:$0x75316420]
    %v574 = vrot.slane %v572, 7
    %v575 = vrot.slane %v573, 7
    %576 = vrot.lane.b32.xlu0 %v574, 125
    %v577 = vpop.permute.xlu0 %576
    %578 = vrot.lane.b32.xlu0 %v575, 125
    %v579 = vpop.permute.xlu0 %578
    %vm580 = vcmask 1022976
    %v581 = vsel %vm580, %v577, %v579
    %vm584 = vcmask 1044217
    %585 = vst.msk [vmem:[#allocation3 + $0x18] sm:$0xe] %vm584, %v581
    %vm586 = vcmask 502785
    %587 = vst.msk [vmem:[#allocation3 + $0x20] sm:$0xe] %vm586, %v579
    %v588 = vld [vmem:[#allocation2 + $0x14] sm:$0x77]
    %590 = vst [vmem:[#allocation1] ss:$2 sm:$0xff] %v588
    %v591 = vld.sshfl [vmem:[#allocation1] sm:$0xff pattern:$0x75316420]
    %v592 = vld.sshfl [vmem:[#allocation1 + $0x8] sm:$0xff pattern:$0x75316420]
    %v593 = vrot.slane %v591, 7
    %v594 = vrot.slane %v592, 7
    %595 = vrot.lane.b32.xlu0 %v593, 23
    %v596 = vpop.permute.xlu0 %595
    %597 = vrot.lane.b32.xlu0 %v594, 23
    %v598 = vpop.permute.xlu0 %597
    %vm599 = vcmask 187392
    %v600 = vsel %vm599, %v596, %v598
    %vm603 = vcmask 1043953
    %604 = vst.msk [vmem:[#allocation3 + $0x20] sm:$0xe] %vm603, %v596
    %vm605 = vcmask 232449
    %606 = vst.msk [vmem:[#allocation3 + $0x28] sm:$0xe] %vm605, %v600
    %v607 = vld [vmem:[#allocation2 + $0xc] sm:$0x77]
    %609 = vst [vmem:[#allocation1] ss:$2 sm:$0xff] %v607
    %v610 = vld.sshfl [vmem:[#allocation1] sm:$0xff pattern:$0x75316420]
    %v611 = vld.sshfl [vmem:[#allocation1 + $0x8] sm:$0xff pattern:$0x75316420]
    %v612 = vrot.slane %v610, 7
    %v613 = vrot.slane %v611, 7
    %614 = vrot.lane.b32.xlu0 %v612, 55
    %v615 = vpop.permute.xlu0 %614
    %616 = vrot.lane.b32.xlu0 %v613, 55
    %v617 = vpop.permute.xlu0 %616
    %vm618 = vcmask 449536
    %v619 = vsel %vm618, %v615, %v617
    %vm621 = vcmask 1010921
    %622 = vst.msk [vmem:[#allocation3 + $0x28] sm:$0xe] %vm621, %v619
    %v623 = vld [vmem:[#allocation2] sm:$0x7]
    %s625 = scalar_lea.vmem [#allocation1], 1
    %626 = vst [vmem:[%s625] ss:$2 sm:$0xff] %v623
    %v627 = vld.sshfl [vmem:[#allocation1] sm:$0xff pattern:$0x75316420]
    %628 = vrot.lane.b32.xlu0 %v627, 127
    %v629 = vpop.permute.xlu0 %628
    %vm631 = vcmask 776196
    %632 = vst.msk [vmem:[#allocation3 + $0x18] sm:$0x70] %vm631, %v629
    %v633 = vld [vmem:[#allocation2 + $0x4] sm:$0x77]
    %s635 = scalar_lea.vmem [#allocation1], 1
    %636 = vst [vmem:[%s635] ss:$2 sm:$0xff] %v633
    %v637 = vld.sshfl [vmem:[#allocation1] sm:$0xff pattern:$0x75316420]
    %v638 = vld.sshfl [vmem:[#allocation1 + $0x8] sm:$0xff pattern:$0x75316420]
    %639 = vrot.lane.b32.xlu0 %v637, 28
    %v640 = vpop.permute.xlu0 %639
    %641 = vrot.lane.b32.xlu0 %v638, 28
    %v642 = vpop.permute.xlu0 %641
    %vm643 = vcmask 228352
    %v644 = vsel %vm643, %v640, %v642
    %vm647 = vcmask 1047292
    %648 = vst.msk [vmem:[#allocation3 + $0x18] sm:$0x70] %vm647, %v640
    %vm649 = vcmask 505860
    %650 = vst.msk [vmem:[#allocation3 + $0x20] sm:$0x70] %vm649, %v644
    %v651 = vld [vmem:[#allocation2 + $0xc] sm:$0x7]
    %s653 = scalar_lea.vmem [#allocation1], 1
    %654 = vst [vmem:[%s653] ss:$2 sm:$0xff] %v651
    %v655 = vld.sshfl [vmem:[#allocation1] sm:$0xff pattern:$0x75316420]
    %656 = vrot.lane.b32.xlu0 %v655, 57
    %v657 = vpop.permute.xlu0 %656
    %vm659 = vcmask 1047028
    %660 = vst.msk [vmem:[#allocation3 + $0x20] sm:$0x70] %vm659, %v657
    %vm661 = vcmask 235524
    %662 = vst.msk [vmem:[#allocation3 + $0x28] sm:$0x70] %vm661, %v657
    %v663 = vld [vmem:[#allocation2 + $0x10] sm:$0x77]
    %s665 = scalar_lea.vmem [#allocation1], 1
    %666 = vst [vmem:[%s665] ss:$2 sm:$0xff] %v663
    %v667 = vld.sshfl [vmem:[#allocation1] sm:$0xff pattern:$0x75316420]
    %v668 = vld.sshfl [vmem:[#allocation1 + $0x8] sm:$0xff pattern:$0x75316420]
    %669 = vrot.lane.b32.xlu0 %v667, 86
    %v670 = vpop.permute.xlu0 %669
    %671 = vrot.lane.b32.xlu0 %v668, 86
    %v672 = vpop.permute.xlu0 %671
    %vm673 = vcmask 703488
    %v674 = vsel %vm673, %v670, %v672
    %vm676 = vcmask 1013996
    %677 = vst.msk [vmem:[#allocation3 + $0x28] sm:$0x70] %vm676, %v674
    %v678 = vld [vmem:[#allocation2] sm:$0x77]
    %680 = vst [vmem:[#allocation1] ss:$2 sm:$0xff] %v678
    %v681 = vld.sshfl [vmem:[#allocation1] sm:$0xff pattern:$0x75316420]
    %v682 = vld.sshfl [vmem:[#allocation1 + $0x8] sm:$0xff pattern:$0x75316420]
    %v683 = vrot.slane %v681, 1
    %v684 = vrot.slane %v682, 1
    %685 = vrot.lane.b32.xlu0 %v683, 30
    %v686 = vpop.permute.xlu0 %685
    %687 = vrot.lane.b32.xlu0 %v684, 30
    %v688 = vpop.permute.xlu0 %687
    %vm689 = vcmask 244736
    %v690 = vsel %vm689, %v686, %v688
    %vm692 = vcmask 777223
    %693 = vst.msk [vmem:[#allocation3 + $0x18] sm:$0x80] %vm692, %v690
    %vm694 = vcmask 771072
    %695 = vst.msk [vmem:[#allocation3 + $0x30] sm:$0x3] %vm694, %v690
    %v696 = vld [vmem:[#allocation2 + $0x8] sm:$0x77]
    %698 = vst [vmem:[#allocation1] ss:$2 sm:$0xff] %v696
    %v699 = vld.sshfl [vmem:[#allocation1] sm:$0xff pattern:$0x75316420]
    %v700 = vld.sshfl [vmem:[#allocation1 + $0x8] sm:$0xff pattern:$0x75316420]
    %v701 = vrot.slane %v699, 1
    %v702 = vrot.slane %v700, 1
    %703 = vrot.lane.b32.xlu0 %v701, 59
    %v704 = vpop.permute.xlu0 %703
    %705 = vrot.lane.b32.xlu0 %v702, 59
    %v706 = vpop.permute.xlu0 %705
    %vm707 = vcmask 482304
    %v708 = vsel %vm707, %v704, %v706
    %vm711 = vcmask 1048319
    %712 = vst.msk [vmem:[#allocation3 + $0x18] sm:$0x80] %vm711, %v704
    %vm713 = vcmask 506887
    %714 = vst.msk [vmem:[#allocation3 + $0x20] sm:$0x80] %vm713, %v708
    %vm715 = vcmask 1042168
    %716 = vst.msk [vmem:[#allocation3 + $0x30] sm:$0x3] %vm715, %v704
    %vm717 = vcmask 500736
    %718 = vst.msk [vmem:[#allocation3 + $0x38] sm:$0x3] %vm717, %v708
    %v719 = vld [vmem:[#allocation2 + $0xc] sm:$0x77]
    %721 = vst [vmem:[#allocation1] ss:$2 sm:$0xff] %v719
    %v722 = vld.sshfl [vmem:[#allocation1] sm:$0xff pattern:$0x75316420]
    %v723 = vld.sshfl [vmem:[#allocation1 + $0x8] sm:$0xff pattern:$0x75316420]
    %v724 = vrot.slane %v722, 1
    %v725 = vrot.slane %v723, 1
    %726 = vrot.lane.b32.xlu0 %v724, 88
    %v727 = vpop.permute.xlu0 %726
    %728 = vrot.lane.b32.xlu0 %v725, 88
    %v729 = vpop.permute.xlu0 %728
    %vm730 = vcmask 719872
    %v731 = vsel %vm730, %v727, %v729
    %vm734 = vcmask 1048055
    %735 = vst.msk [vmem:[#allocation3 + $0x20] sm:$0x80] %vm734, %v731
    %vm736 = vcmask 236551
    %737 = vst.msk [vmem:[#allocation3 + $0x28] sm:$0x80] %vm736, %v729
    %vm738 = vcmask 1041904
    %739 = vst.msk [vmem:[#allocation3 + $0x38] sm:$0x3] %vm738, %v731
    %vm740 = vcmask 230400
    %741 = vst.msk [vmem:[#allocation3 + $0x40] sm:$0x3] %vm740, %v729
    %v742 = vld [vmem:[#allocation2 + $0x14] sm:$0x77]
    %744 = vst [vmem:[#allocation1] ss:$2 sm:$0xff] %v742
    %v745 = vld.sshfl [vmem:[#allocation1] sm:$0xff pattern:$0x75316420]
    %v746 = vld.sshfl [vmem:[#allocation1 + $0x8] sm:$0xff pattern:$0x75316420]
    %v747 = vrot.slane %v745, 1
    %v748 = vrot.slane %v746, 1
    %749 = vrot.lane.b32.xlu0 %v747, 117
    %v750 = vpop.permute.xlu0 %749
    %751 = vrot.lane.b32.xlu0 %v748, 117
    %v752 = vpop.permute.xlu0 %751
    %vm753 = vcmask 957440
    %v754 = vsel %vm753, %v750, %v752
    %vm756 = vcmask 1015023
    %757 = vst.msk [vmem:[#allocation3 + $0x28] sm:$0x80] %vm756, %v754
    %vm758 = vcmask 1008872
    %759 = vst.msk [vmem:[#allocation3 + $0x40] sm:$0x3] %vm758, %v754
    %v760 = vld [vmem:[#allocation2 + $0x4] sm:$0x77]
    %762 = vst [vmem:[#allocation1] ss:$2 sm:$0xff] %v760
    %v763 = vld.sshfl [vmem:[#allocation1] sm:$0xff pattern:$0x75316420]
    %v764 = vld.sshfl [vmem:[#allocation1 + $0x8] sm:$0xff pattern:$0x75316420]
    %v765 = vrot.slane %v763, 6
    %v766 = vrot.slane %v764, 6
    %767 = vrot.lane.b32.xlu0 %v765, 61
    %v768 = vpop.permute.xlu0 %767
    %769 = vrot.lane.b32.xlu0 %v766, 61
    %v770 = vpop.permute.xlu0 %769
    %vm771 = vcmask 498688
    %v772 = vsel %vm771, %v768, %v770
    %vm774 = vcmask 774146
    %775 = vst.msk [vmem:[#allocation3 + $0x30] sm:$0x1c] %vm774, %v772
    %v776 = vld [vmem:[#allocation2] sm:$0x7]
    %778 = vst [vmem:[#allocation1] ss:$2 sm:$0xff] %v776
    %v779 = vld.sshfl [vmem:[#allocation1] sm:$0xff pattern:$0x75316420]
    %v780 = vrot.slane %v779, 6
    %781 = vrot.lane.b32.xlu0 %v780, 93
    %v782 = vpop.permute.xlu0 %781
    %vm784 = vcmask 1045242
    %785 = vst.msk [vmem:[#allocation3 + $0x30] sm:$0x1c] %vm784, %v782
    %vm786 = vcmask 503810
    %787 = vst.msk [vmem:[#allocation3 + $0x38] sm:$0x1c] %vm786, %v782
    %v788 = vld [vmem:[#allocation2 + $0x10] sm:$0x77]
    %790 = vst [vmem:[#allocation1] ss:$2 sm:$0xff] %v788
    %v791 = vld.sshfl [vmem:[#allocation1] sm:$0xff pattern:$0x75316420]
    %v792 = vld.sshfl [vmem:[#allocation1 + $0x8] sm:$0xff pattern:$0x75316420]
    %v793 = vrot.slane %v791, 6
    %v794 = vrot.slane %v792, 6
    %795 = vrot.lane.b32.xlu0 %v793, 119
    %v796 = vpop.permute.xlu0 %795
    %797 = vrot.lane.b32.xlu0 %v794, 119
    %v798 = vpop.permute.xlu0 %797
    %vm799 = vcmask 973824
    %v800 = vsel %vm799, %v796, %v798
    %vm803 = vcmask 1044978
    %804 = vst.msk [vmem:[#allocation3 + $0x38] sm:$0x1c] %vm803, %v800
    %vm805 = vcmask 233474
    %806 = vst.msk [vmem:[#allocation3 + $0x40] sm:$0x1c] %vm805, %v798
    %v807 = vld [vmem:[#allocation2 + $0xc] sm:$0x7]
    %809 = vst [vmem:[#allocation1] ss:$2 sm:$0xff] %v807
    %v810 = vld.sshfl [vmem:[#allocation1] sm:$0xff pattern:$0x75316420]
    %v811 = vrot.slane %v810, 6
    %812 = vrot.lane.b32.xlu0 %v811, 23
    %v813 = vpop.permute.xlu0 %812
    %vm815 = vcmask 1011946
    %816 = vst.msk [vmem:[#allocation3 + $0x40] sm:$0x1c] %vm815, %v813
    %v817 = vld [vmem:[#allocation2 + $0x8] sm:$0x77]
    %819 = vst [vmem:[#allocation1] ss:$2 sm:$0xff] %v817
    %v820 = vld.sshfl [vmem:[#allocation1] sm:$0xff pattern:$0x75316420]
    %v821 = vld.sshfl [vmem:[#allocation1 + $0x8] sm:$0xff pattern:$0x75316420]
    %v822 = vrot.slane %v820, 3
    %v823 = vrot.slane %v821, 3
    %824 = vrot.lane.b32.xlu0 %v822, 92
    %v825 = vpop.permute.xlu0 %824
    %826 = vrot.lane.b32.xlu0 %v823, 92
    %v827 = vpop.permute.xlu0 %826
    %vm828 = vcmask 752640
    %v829 = vsel %vm828, %v825, %v827
    %vm831 = vcmask 777221
    %832 = vst.msk [vmem:[#allocation3 + $0x30] sm:$0xe0] %vm831, %v829
    %v833 = vld [vmem:[#allocation2] sm:$0x77]
    %835 = vst [vmem:[#allocation1] ss:$2 sm:$0xff] %v833
    %v836 = vld.sshfl [vmem:[#allocation1] sm:$0xff pattern:$0x75316420]
    %v837 = vld.sshfl [vmem:[#allocation1 + $0x8] sm:$0xff pattern:$0x75316420]
    %v838 = vrot.slane %v836, 3
    %v839 = vrot.slane %v837, 3
    %840 = vrot.lane.b32.xlu0 %v838, 124
    %v841 = vpop.permute.xlu0 %840
    %842 = vrot.lane.b32.xlu0 %v839, 124
    %v843 = vpop.permute.xlu0 %842
    %vm844 = vcmask 1014784
    %v845 = vsel %vm844, %v841, %v843
    %vm848 = vcmask 1048317
    %849 = vst.msk [vmem:[#allocation3 + $0x30] sm:$0xe0] %vm848, %v845
    %vm850 = vcmask 506885
    %851 = vst.msk [vmem:[#allocation3 + $0x38] sm:$0xe0] %vm850, %v843
    %v852 = vld [vmem:[#allocation2 + $0x14] sm:$0x77]
    %854 = vst [vmem:[#allocation1] ss:$2 sm:$0xff] %v852
    %v855 = vld.sshfl [vmem:[#allocation1] sm:$0xff pattern:$0x75316420]
    %v856 = vld.sshfl [vmem:[#allocation1 + $0x8] sm:$0xff pattern:$0x75316420]
    %v857 = vrot.slane %v855, 3
    %v858 = vrot.slane %v856, 3
    %859 = vrot.lane.b32.xlu0 %v857, 22
    %v860 = vpop.permute.xlu0 %859
    %861 = vrot.lane.b32.xlu0 %v858, 22
    %v862 = vpop.permute.xlu0 %861
    %vm863 = vcmask 179200
    %v864 = vsel %vm863, %v860, %v862
    %vm867 = vcmask 1048053
    %868 = vst.msk [vmem:[#allocation3 + $0x38] sm:$0xe0] %vm867, %v860
    %vm869 = vcmask 236549
    %870 = vst.msk [vmem:[#allocation3 + $0x40] sm:$0xe0] %vm869, %v864
    %v871 = vld [vmem:[#allocation2 + $0xc] sm:$0x77]
    %873 = vst [vmem:[#allocation1] ss:$2 sm:$0xff] %v871
    %v874 = vld.sshfl [vmem:[#allocation1] sm:$0xff pattern:$0x75316420]
    %v875 = vld.sshfl [vmem:[#allocation1 + $0x8] sm:$0xff pattern:$0x75316420]
    %v876 = vrot.slane %v874, 3
    %v877 = vrot.slane %v875, 3
    %878 = vrot.lane.b32.xlu0 %v876, 54
    %v879 = vpop.permute.xlu0 %878
    %880 = vrot.lane.b32.xlu0 %v877, 54
    %v881 = vpop.permute.xlu0 %880
    %vm882 = vcmask 441344
    %v883 = vsel %vm882, %v879, %v881
    %vm885 = vcmask 1015021
    %886 = vst.msk [vmem:[#allocation3 + $0x40] sm:$0xe0] %vm885, %v883
    %v887 = vld [vmem:[#allocation2] sm:$0x7]
    %889 = vst [vmem:[#allocation1] ss:$2 sm:$0xff] %v887
    %v890 = vld.sshfl [vmem:[#allocation1] sm:$0xff pattern:$0x75316420]
    %891 = vrot.lane.b32.xlu0 %v890, 126
    %v892 = vpop.permute.xlu0 %891
    %894 = vst.msk [vmem:[#allocation3 + $0x48] sm:$0x7] %vm370, %v892
    %v895 = vld [vmem:[#allocation2 + $0x4] sm:$0x77]
    %897 = vst [vmem:[#allocation1] ss:$2 sm:$0xff] %v895
    %v898 = vld.sshfl [vmem:[#allocation1] sm:$0xff pattern:$0x75316420]
    %v899 = vld.sshfl [vmem:[#allocation1 + $0x8] sm:$0xff pattern:$0x75316420]
    %900 = vrot.lane.b32.xlu0 %v898, 27
    %v901 = vpop.permute.xlu0 %900
    %902 = vrot.lane.b32.xlu0 %v899, 27
    %v903 = vpop.permute.xlu0 %902
    %vm904 = vcmask 220160
    %v905 = vsel %vm904, %v901, %v903
    %908 = vst.msk [vmem:[#allocation3 + $0x48] sm:$0x7] %vm385, %v901
    %909 = vst.msk [vmem:[#allocation3 + $0x50] sm:$0x7] %vm387, %v905
    %v910 = vld [vmem:[#allocation2 + $0xc] sm:$0x7]
    %912 = vst [vmem:[#allocation1] ss:$2 sm:$0xff] %v910
    %v913 = vld.sshfl [vmem:[#allocation1] sm:$0xff pattern:$0x75316420]
    %914 = vrot.lane.b32.xlu0 %v913, 56
    %v915 = vpop.permute.xlu0 %914
    %917 = vst.msk [vmem:[#allocation3 + $0x50] sm:$0x7] %vm396, %v915
    %918 = vst.msk [vmem:[#allocation3 + $0x58] sm:$0x7] %vm398, %v915
    %v919 = vld [vmem:[#allocation2 + $0x10] sm:$0x77]
    %921 = vst [vmem:[#allocation1] ss:$2 sm:$0xff] %v919
    %v922 = vld.sshfl [vmem:[#allocation1] sm:$0xff pattern:$0x75316420]
    %v923 = vld.sshfl [vmem:[#allocation1 + $0x8] sm:$0xff pattern:$0x75316420]
    %924 = vrot.lane.b32.xlu0 %v922, 85
    %v925 = vpop.permute.xlu0 %924
    %926 = vrot.lane.b32.xlu0 %v923, 85
    %v927 = vpop.permute.xlu0 %926
    %vm928 = vcmask 695296
    %v929 = vsel %vm928, %v925, %v927
    %931 = vst.msk [vmem:[#allocation3 + $0x58] sm:$0x7] %vm412, %v929
    %v932 = vld [vmem:[%s5] sm:$0x3f]
    %v933 = vld [vmem:[#allocation3] sm:$0xff]
    %v934 = vld [vmem:[#allocation3 + $0x8] sm:$0xff]
    %v935 = vld [vmem:[#allocation3 + $0x10] sm:$0xff]
    %v936 = vld [vmem:[#allocation3 + $0x18] sm:$0xff]
    %v937 = vld [vmem:[#allocation3 + $0x20] sm:$0xff]
    %v938 = vld [vmem:[#allocation3 + $0x28] sm:$0xff]
    %v939 = vld [vmem:[#allocation3 + $0x30] sm:$0xff]
    %v940 = vld [vmem:[#allocation3 + $0x38] sm:$0xff]
    %v941 = vld [vmem:[#allocation3 + $0x40] sm:$0xff]
    %v942 = vld [vmem:[#allocation3 + $0x48] sm:$0x7]
    %v943 = vld [vmem:[#allocation3 + $0x50] sm:$0x7]
    %v944 = vld [vmem:[#allocation3 + $0x58] sm:$0x7]
    %v945 = vld [vmem:[%s6] sm:$0x3f]
    %947 = vset.pattern.permute.xlu0 0
    %948 = vperm.xlu0 %947, %v945
    %v949 = vpop.permute.xlu0 %948
    %v952 = vsel %vm904, %v932, 0
    %v955 = vsel %vm260, %v942, 0
    %v958 = vsel %vm260, %v943, 0
    %v961 = vsel %vm260, %v944, 0
    %963 = vmatpush.msra.mxu0 0.0
    %964 = vmatpush.msra.mxu0 0.0
    %965 = vmatpush.msra.mxu0 0.0
    %966 = vmatpush.msra.mxu0 0.0
    %967 = vmatpush.msra.mxu0 0.0
    %968 = vmatpush.msra.mxu0 0.0
    %969 = vmatpush.msra.mxu0 0.0
    %970 = vmatpush.msra.mxu0 0.0
    %971 = vmatpush.msra.mxu0 0.0
    %972 = vmatpush.msra.mxu0 0.0
    %973 = vmatpush.msra.mxu0 0.0
    %974 = vmatpush.msra.mxu0 0.0
    %975 = vmatpush.msra.mxu0 %v955
    %976 = vmatpush.msra.mxu0 %v939
    %977 = vmatpush.msra.mxu0 %v936
    %978 = vmatpush.msra.mxu0 %v933
    %979 = vmatmul.f32.gmra.mxu0 %v952
    %v980 = vpop.f32.mrf.mxu0
    %v981 = vadd.f32 %v949, %v980
    %982 = vdwg.mxu0
    %983 = vmatpush.msra.mxu0 0.0
    %984 = vmatpush.msra.mxu0 0.0
    %985 = vmatpush.msra.mxu0 0.0
    %986 = vmatpush.msra.mxu0 0.0
    %987 = vmatpush.msra.mxu0 0.0
    %988 = vmatpush.msra.mxu0 0.0
    %989 = vmatpush.msra.mxu0 0.0
    %990 = vmatpush.msra.mxu0 0.0
    %991 = vmatpush.msra.mxu0 0.0
    %992 = vmatpush.msra.mxu0 0.0
    %993 = vmatpush.msra.mxu0 0.0
    %994 = vmatpush.msra.mxu0 0.0
    %995 = vmatpush.msra.mxu0 %v958
    %996 = vmatpush.msra.mxu0 %v940
    %997 = vmatpush.msra.mxu0 %v937
    %998 = vmatpush.msra.mxu0 %v934
    %999 = vmatmul.f32.gmra.mxu0 %v952
    %v1000 = vpop.f32.mrf.mxu0
    %v1001 = vadd.f32 %v949, %v1000
    %1002 = vdwg.mxu0
    %1003 = vmatpush.msra.mxu0 0.0
    %1004 = vmatpush.msra.mxu0 0.0
    %1005 = vmatpush.msra.mxu0 0.0
    %1006 = vmatpush.msra.mxu0 0.0
    %1007 = vmatpush.msra.mxu0 0.0
    %1008 = vmatpush.msra.mxu0 0.0
    %1009 = vmatpush.msra.mxu0 0.0
    %1010 = vmatpush.msra.mxu0 0.0
    %1011 = vmatpush.msra.mxu0 0.0
    %1012 = vmatpush.msra.mxu0 0.0
    %1013 = vmatpush.msra.mxu0 0.0
    %1014 = vmatpush.msra.mxu0 0.0
    %1015 = vmatpush.msra.mxu0 %v961
    %1016 = vmatpush.msra.mxu0 %v941
    %1017 = vmatpush.msra.mxu0 %v938
    %1018 = vmatpush.msra.mxu0 %v935
    %1019 = vmatmul.f32.gmra.mxu0 %v952
    %v1020 = vpop.f32.mrf.mxu0
    %v1021 = vadd.f32 %v949, %v1020
    %1022 = vdwg.mxu0
    %v1023 = vmax.f32 %v981, 0.0
    %v1024 = vmax.f32 %v1001, 0.0
    %v1025 = vmax.f32 %v1021, 0.0
    %v1026 = vld [vmem:[%s7] sm:$0x3f]
    %v1027 = vld [vmem:[%s8] sm:$0x3f]
    %vm1028 = vcmask 1045504
    %v1029 = vsel %vm1028, %v1023, 0.0
    %v1030 = vsel %vm1028, %v1024, 0.0
    %v1031 = vadd.f32 %v1029, %v1030
    %vm1032 = vcmask 1012736
    %v1033 = vsel %vm1032, %v1025, 0.0
    %v1034 = vadd.f32 %v1031, %v1033
    %1035 = vadd.xlane.f32.xlu0 %v1034
    %v1036 = vpop.xlane.xlu0 %1035
    %v1037 = vrcp.pop 380.0
    %v1038 = vmul.f32 380.0, %v1037
    %v1039 = vsub.f32 1.0, %v1038
    %v1040 = vmul.f32 %v1037, %v1039
    %v1041 = vadd.f32 %v1037, %v1040
    %vm1042 = vweird.f32 %v1037
    %v1043 = vsel %vm1042, %v1037, %v1041
    %v1044 = vmul.f32 %v1036, %v1043
    %v1045 = vmul.f32 %v1023, %v1023
    %v1046 = vmul.f32 %v1024, %v1024
    %v1047 = vmul.f32 %v1025, %v1025
    %v1048 = vsel %vm1028, %v1045, 0.0
    %v1049 = vsel %vm1028, %v1046, 0.0
    %v1050 = vadd.f32 %v1048, %v1049
    %v1051 = vsel %vm1032, %v1047, 0.0
    %v1052 = vadd.f32 %v1050, %v1051
    %1053 = vadd.xlane.f32.xlu0 %v1052
    %v1054 = vpop.xlane.xlu0 %1053
    %v1055 = vmul.f32 %v1054, %v1043
    %v1056 = vmul.f32 %v1044, %v1044
    %v1057 = vsub.f32 %v1055, %v1056
    %v1058 = vmax.f32 %v1057, 0.0
    %v1059 = vadd.f32 %v1058, 1e-05
    %v1060 = vrsqrt.pop %v1059
    %v1061 = vmul.f32 %v1060, %v1059
    %v1062 = vmul.f32 %v1061, %v1060
    %v1063 = vmul.f32 0.5, %v1062
    %v1064 = vsub.f32 1.5, %v1063
    %v1065 = vmul.f32 %v1060, %v1064
    %vm1066 = vweird.f32 %v1059
    %vm1067 = vweird.f32 %v1060
    %vm1068 = vmor %vm1066, %vm1067
    %v1069 = vsel %vm1068, %v1060, %v1065
    %v1070 = vmul.f32 %v1026, %v1069
    %1072 = vset.pattern.permute.xlu0 0
    %1073 = vperm.xlu0 %1072, %v1070
    %v1074 = vpop.permute.xlu0 %1073
    %v1076 = vmul.f32 %v1023, %v1074
    %v1077 = vmul.f32 %v1024, %v1074
    %v1078 = vmul.f32 %v1025, %v1074
    %v1079 = vmul.f32 %v1044, %v1070
    %v1080 = vsub.f32 %v1027, %v1079
    %1082 = vset.pattern.permute.xlu0 0
    %1083 = vperm.xlu0 %1082, %v1080
    %v1084 = vpop.permute.xlu0 %1083
    %v1086 = vadd.f32 %v1076, %v1084
    %v1087 = vadd.f32 %v1077, %v1084
    %v1088 = vadd.f32 %v1078, %v1084
    %1089 = vst [vmem:[#allocation4] sm:$0x3f] %v1086
    %1090 = vst [vmem:[#allocation4 + $0x8] sm:$0x3f] %v1087
    %1091 = vst.msk [vmem:[#allocation4 + $0x10] sm:$0x3f] %vm1032, %v1088
    %v1092 = vld [vmem:[#allocation4] sm:$0x3f]
    %vm1093 = vcmask 742400
    %1094 = vst.msk [vmem:[#allocation5] sm:$0x3f] %vm1093, %v1092
    %v1095 = vld [vmem:[#allocation4 + $0x8] sm:$0x3f]
    %v1096 = vld [vmem:[#allocation4 + $0x10] sm:$0x3f]
    %1099 = vrot.lane.b32.xlu0 %v1095, 29
    %v1100 = vpop.permute.xlu0 %1099
    %1101 = vrot.lane.b32.xlu0 %v1096, 29
    %v1102 = vpop.permute.xlu0 %1101
    %v1103 = vsel %vm381, %v1100, %v1102
    %vm1106 = vcmask 1046232
    %1107 = vst.msk [vmem:[#allocation5] sm:$0x3f] %vm1106, %v1100
    %vm1108 = vcmask 439296
    %1109 = vst.msk [vmem:[#allocation5 + $0x8] sm:$0x3f] %vm1108, %v1103
    %v1110 = vld [vmem:[#allocation4] sm:$0x3f]
    %v1111 = vld [vmem:[#allocation4 + $0x8] sm:$0x3f]
    %v1114 = vrot.slane %v1110, 2
    %v1115 = vrot.slane %v1111, 2
    %1116 = vrot.lane.b32.xlu0 %v1114, 33
    %v1117 = vpop.permute.xlu0 %1116
    %1118 = vrot.lane.b32.xlu0 %v1115, 33
    %v1119 = vpop.permute.xlu0 %1118
    %vm1120 = vcmask 269312
    %v1121 = vsel %vm1120, %v1117, %v1119
    %vm1123 = vcmask 744454
    %1124 = vst.msk [vmem:[#allocation5] sm:$0xc0] %vm1123, %v1121
    %vm1125 = vcmask 740352
    %1126 = vst.msk [vmem:[#allocation5 + $0x10] sm:$0xf] %vm1125, %v1121
    %v1127 = vld [vmem:[#allocation4 + $0x10] sm:$0x3f]
    %v1129 = vrot.slane %v1127, 2
    %1130 = vrot.lane.b32.xlu0 %v1129, 62
    %v1131 = vpop.permute.xlu0 %1130
    %vm1133 = vcmask 1048286
    %1134 = vst.msk [vmem:[#allocation5] sm:$0xc0] %vm1133, %v1131
    %vm1135 = vcmask 441350
    %1136 = vst.msk [vmem:[#allocation5 + $0x8] sm:$0xc0] %vm1135, %v1131
    %vm1137 = vcmask 1044184
    %1138 = vst.msk [vmem:[#allocation5 + $0x10] sm:$0xf] %vm1137, %v1131
    %vm1139 = vcmask 437248
    %1140 = vst.msk [vmem:[#allocation5 + $0x18] sm:$0xf] %vm1139, %v1131
    %v1141 = vld [vmem:[#allocation4] sm:$0x3f]
    %v1143 = vrot.slane %v1141, 4
    %1144 = vrot.lane.b32.xlu0 %v1143, 127
    %v1145 = vpop.permute.xlu0 %1144
    %vm1147 = vcmask 744452
    %1148 = vst.msk [vmem:[#allocation5 + $0x10] sm:$0xf0] %vm1147, %v1145
    %vm1149 = vcmask 738304
    %1150 = vst.msk [vmem:[#allocation5 + $0x20] sm:$0x3] %vm1149, %v1145
    %v1151 = vld [vmem:[#allocation4 + $0x8] sm:$0x3f]
    %v1152 = vld [vmem:[#allocation4 + $0x10] sm:$0x3f]
    %v1155 = vrot.slane %v1151, 4
    %v1156 = vrot.slane %v1152, 4
    %1157 = vrot.lane.b32.xlu0 %v1155, 28
    %v1158 = vpop.permute.xlu0 %1157
    %1159 = vrot.lane.b32.xlu0 %v1156, 28
    %v1160 = vpop.permute.xlu0 %1159
    %v1161 = vsel %vm643, %v1158, %v1160
    %vm1164 = vcmask 1048284
    %1165 = vst.msk [vmem:[#allocation5 + $0x10] sm:$0xf0] %vm1164, %v1158
    %vm1166 = vcmask 441348
    %1167 = vst.msk [vmem:[#allocation5 + $0x18] sm:$0xf0] %vm1166, %v1161
    %vm1168 = vcmask 1042136
    %1169 = vst.msk [vmem:[#allocation5 + $0x20] sm:$0x3] %vm1168, %v1158
    %vm1170 = vcmask 435200
    %1171 = vst.msk [vmem:[#allocation5 + $0x28] sm:$0x3] %vm1170, %v1161
    %v1172 = vld [vmem:[#allocation4] sm:$0x3f]
    %v1173 = vld [vmem:[#allocation4 + $0x8] sm:$0x3f]
    %v1176 = vrot.slane %v1172, 6
    %v1177 = vrot.slane %v1173, 6
    %1178 = vrot.lane.b32.xlu0 %v1176, 32
    %v1179 = vpop.permute.xlu0 %1178
    %1180 = vrot.lane.b32.xlu0 %v1177, 32
    %v1181 = vpop.permute.xlu0 %1180
    %vm1182 = vcmask 261120
    %v1183 = vsel %vm1182, %v1179, %v1181
    %vm1185 = vcmask 744450
    %1186 = vst.msk [vmem:[#allocation5 + $0x20] sm:$0xfc] %vm1185, %v1183
    %v1187 = vld [vmem:[#allocation4 + $0x10] sm:$0x3f]
    %v1189 = vrot.slane %v1187, 6
    %1190 = vrot.lane.b32.xlu0 %v1189, 61
    %v1191 = vpop.permute.xlu0 %1190
    %vm1193 = vcmask 1048282
    %1194 = vst.msk [vmem:[#allocation5 + $0x20] sm:$0xfc] %vm1193, %v1191
    %vm1195 = vcmask 441346
    %1196 = vst.msk [vmem:[#allocation5 + $0x28] sm:$0xfc] %vm1195, %v1191
    %v1197 = vld [vmem:[#allocation4] sm:$0x3f]
    %1199 = vrot.lane.b32.xlu0 %v1197, 126
    %v1200 = vpop.permute.xlu0 %1199
    %1202 = vst.msk [vmem:[#allocation5 + $0x30] sm:$0x3f] %vm1093, %v1200
    %v1203 = vld [vmem:[#allocation4 + $0x8] sm:$0x3f]
    %v1204 = vld [vmem:[#allocation4 + $0x10] sm:$0x3f]
    %1207 = vrot.lane.b32.xlu0 %v1203, 27
    %v1208 = vpop.permute.xlu0 %1207
    %1209 = vrot.lane.b32.xlu0 %v1204, 27
    %v1210 = vpop.permute.xlu0 %1209
    %v1211 = vsel %vm904, %v1208, %v1210
    %1214 = vst.msk [vmem:[#allocation5 + $0x30] sm:$0x3f] %vm1106, %v1208
    %1215 = vst.msk [vmem:[#allocation5 + $0x38] sm:$0x3f] %vm1108, %v1211
    %v1216 = vld [vmem:[#allocation4] sm:$0x3f]
    %v1217 = vld [vmem:[#allocation4 + $0x8] sm:$0x3f]
    %v1220 = vrot.slane %v1216, 2
    %v1221 = vrot.slane %v1217, 2
    %1222 = vrot.lane.b32.xlu0 %v1220, 31
    %v1223 = vpop.permute.xlu0 %1222
    %1224 = vrot.lane.b32.xlu0 %v1221, 31
    %v1225 = vpop.permute.xlu0 %1224
    %v1226 = vsel %vm425, %v1223, %v1225
    %1228 = vst.msk [vmem:[#allocation5 + $0x30] sm:$0xc0] %vm1123, %v1226
    %1229 = vst.msk [vmem:[#allocation5 + $0x40] sm:$0xf] %vm1125, %v1226
    %v1230 = vld [vmem:[#allocation4 + $0x10] sm:$0x3f]
    %v1232 = vrot.slane %v1230, 2
    %1233 = vrot.lane.b32.xlu0 %v1232, 60
    %v1234 = vpop.permute.xlu0 %1233
    %1236 = vst.msk [vmem:[#allocation5 + $0x30] sm:$0xc0] %vm1133, %v1234
    %1237 = vst.msk [vmem:[#allocation5 + $0x38] sm:$0xc0] %vm1135, %v1234
    %1238 = vst.msk [vmem:[#allocation5 + $0x40] sm:$0xf] %vm1137, %v1234
    %1239 = vst.msk [vmem:[#allocation5 + $0x48] sm:$0xf] %vm1139, %v1234
    %v1240 = vld [vmem:[#allocation4] sm:$0x3f]
    %v1242 = vrot.slane %v1240, 4
    %1243 = vrot.lane.b32.xlu0 %v1242, 125
    %v1244 = vpop.permute.xlu0 %1243
    %1246 = vst.msk [vmem:[#allocation5 + $0x40] sm:$0xf0] %vm1147, %v1244
    %1247 = vst.msk [vmem:[#allocation5 + $0x50] sm:$0x3] %vm1149, %v1244
    %v1248 = vld [vmem:[#allocation4 + $0x8] sm:$0x3f]
    %v1249 = vld [vmem:[#allocation4 + $0x10] sm:$0x3f]
    %v1252 = vrot.slane %v1248, 4
    %v1253 = vrot.slane %v1249, 4
    %1254 = vrot.lane.b32.xlu0 %v1252, 26
    %v1255 = vpop.permute.xlu0 %1254
    %1256 = vrot.lane.b32.xlu0 %v1253, 26
    %v1257 = vpop.permute.xlu0 %1256
    %vm1258 = vcmask 211968
    %v1259 = vsel %vm1258, %v1255, %v1257
    %1262 = vst.msk [vmem:[#allocation5 + $0x40] sm:$0xf0] %vm1164, %v1255
    %1263 = vst.msk [vmem:[#allocation5 + $0x48] sm:$0xf0] %vm1166, %v1259
    %1264 = vst.msk [vmem:[#allocation5 + $0x50] sm:$0x3] %vm1168, %v1255
    %1265 = vst.msk [vmem:[#allocation5 + $0x58] sm:$0x3] %vm1170, %v1259
    %v1266 = vld [vmem:[#allocation4] sm:$0x3f]
    %v1267 = vld [vmem:[#allocation4 + $0x8] sm:$0x3f]
    %v1270 = vrot.slane %v1266, 6
    %v1271 = vrot.slane %v1267, 6
    %1272 = vrot.lane.b32.xlu0 %v1270, 30
    %v1273 = vpop.permute.xlu0 %1272
    %1274 = vrot.lane.b32.xlu0 %v1271, 30
    %v1275 = vpop.permute.xlu0 %1274
    %v1276 = vsel %vm689, %v1273, %v1275
    %1278 = vst.msk [vmem:[#allocation5 + $0x50] sm:$0xfc] %vm1185, %v1276
    %v1279 = vld [vmem:[#allocation4 + $0x10] sm:$0x3f]
    %v1281 = vrot.slane %v1279, 6
    %1282 = vrot.lane.b32.xlu0 %v1281, 59
    %v1283 = vpop.permute.xlu0 %1282
    %1285 = vst.msk [vmem:[#allocation5 + $0x50] sm:$0xfc] %vm1193, %v1283
    %1286 = vst.msk [vmem:[#allocation5 + $0x58] sm:$0xfc] %vm1195, %v1283
    %v1287 = vld [vmem:[#allocation4] sm:$0x3f]
    %1289 = vrot.lane.b32.xlu0 %v1287, 124
    %v1290 = vpop.permute.xlu0 %1289
    %1292 = vst.msk [vmem:[#allocation5 + $0x60] sm:$0x3f] %vm1093, %v1290
    %v1293 = vld [vmem:[#allocation4 + $0x8] sm:$0x3f]
    %v1294 = vld [vmem:[#allocation4 + $0x10] sm:$0x3f]
    %1297 = vrot.lane.b32.xlu0 %v1293, 25
    %v1298 = vpop.permute.xlu0 %1297
    %1299 = vrot.lane.b32.xlu0 %v1294, 25
    %v1300 = vpop.permute.xlu0 %1299
    %vm1301 = vcmask 203776
    %v1302 = vsel %vm1301, %v1298, %v1300
    %1305 = vst.msk [vmem:[#allocation5 + $0x60] sm:$0x3f] %vm1106, %v1298
    %1306 = vst.msk [vmem:[#allocation5 + $0x68] sm:$0x3f] %vm1108, %v1302
    %v1307 = vld [vmem:[%s9] sm:$0xff]
    %v1308 = vld [vmem:[%s9 + $0x8] sm:$0xf]
    %v1309 = vld [vmem:[#allocation5] sm:$0xff]
    %v1310 = vld [vmem:[#allocation5 + $0x8] sm:$0xff]
    %v1311 = vld [vmem:[#allocation5 + $0x10] sm:$0xff]
    %v1312 = vld [vmem:[#allocation5 + $0x18] sm:$0xff]
    %v1313 = vld [vmem:[#allocation5 + $0x20] sm:$0xff]
    %v1314 = vld [vmem:[#allocation5 + $0x28] sm:$0xff]
    %v1315 = vld [vmem:[#allocation5 + $0x30] sm:$0xff]
    %v1316 = vld [vmem:[#allocation5 + $0x38] sm:$0xff]
    %v1317 = vld [vmem:[#allocation5 + $0x40] sm:$0xff]
    %v1318 = vld [vmem:[#allocation5 + $0x48] sm:$0xff]
    %v1319 = vld [vmem:[#allocation5 + $0x50] sm:$0xff]
    %v1320 = vld [vmem:[#allocation5 + $0x58] sm:$0xff]
    %v1321 = vld [vmem:[#allocation5 + $0x60] sm:$0x3f]
    %v1322 = vld [vmem:[#allocation5 + $0x68] sm:$0x3f]
    %v1323 = vld [vmem:[%s10] sm:$0xff]
    %v1324 = vld [vmem:[%s10 + $0x8] sm:$0xf]
    %1326 = vset.pattern.permute.xlu0 0
    %1327 = vperm.xlu0 %1326, %v1323
    %v1328 = vpop.permute.xlu0 %1327
    %1331 = vset.pattern.permute.xlu0 0
    %1332 = vperm.xlu0 %1331, %v1324
    %v1333 = vpop.permute.xlu0 %1332
    %v1336 = vsel %vm882, %v1307, 0
    %v1339 = vsel %vm882, %v1308, 0
    %v1342 = vsel %vm1028, %v1321, 0
    %v1345 = vsel %vm1028, %v1322, 0
    %1347 = vmatpush.msra.mxu0 0.0
    %1348 = vmatpush.msra.mxu0 0.0
    %1349 = vmatpush.msra.mxu0 0.0
    %1350 = vmatpush.msra.mxu0 0.0
    %1351 = vmatpush.msra.mxu0 0.0
    %1352 = vmatpush.msra.mxu0 0.0
    %1353 = vmatpush.msra.mxu0 0.0
    %1354 = vmatpush.msra.mxu0 0.0
    %1355 = vmatpush.msra.mxu0 0.0
    %1356 = vmatpush.msra.mxu0 %v1342
    %1357 = vmatpush.msra.mxu0 %v1319
    %1358 = vmatpush.msra.mxu0 %v1317
    %1359 = vmatpush.msra.mxu0 %v1315
    %1360 = vmatpush.msra.mxu0 %v1313
    %1361 = vmatpush.msra.mxu0 %v1311
    %1362 = vmatpush.msra.mxu0 %v1309
    %1363 = vmatmul.f32.gmra.mxu0 %v1336
    %v1364 = vpop.f32.mrf.mxu0
    %v1365 = vadd.f32 %v1328, %v1364
    %1366 = vmatmul.f32.gmra.mxu0 %v1339
    %v1367 = vpop.f32.mrf.mxu0
    %v1368 = vadd.f32 %v1333, %v1367
    %1369 = vdwg.mxu0
    %1370 = vmatpush.msra.mxu0 0.0
    %1371 = vmatpush.msra.mxu0 0.0
    %1372 = vmatpush.msra.mxu0 0.0
    %1373 = vmatpush.msra.mxu0 0.0
    %1374 = vmatpush.msra.mxu0 0.0
    %1375 = vmatpush.msra.mxu0 0.0
    %1376 = vmatpush.msra.mxu0 0.0
    %1377 = vmatpush.msra.mxu0 0.0
    %1378 = vmatpush.msra.mxu0 0.0
    %1379 = vmatpush.msra.mxu0 %v1345
    %1380 = vmatpush.msra.mxu0 %v1320
    %1381 = vmatpush.msra.mxu0 %v1318
    %1382 = vmatpush.msra.mxu0 %v1316
    %1383 = vmatpush.msra.mxu0 %v1314
    %1384 = vmatpush.msra.mxu0 %v1312
    %1385 = vmatpush.msra.mxu0 %v1310
    %1386 = vmatmul.f32.gmra.mxu0 %v1336
    %v1387 = vpop.f32.mrf.mxu0
    %v1388 = vadd.f32 %v1328, %v1387
    %1389 = vmatmul.f32.gmra.mxu0 %v1339
    %v1390 = vpop.f32.mrf.mxu0
    %v1391 = vadd.f32 %v1333, %v1390
    %1392 = vdwg.mxu0
    %v1393 = vmax.f32 %v1365, 0.0
    %v1394 = vmax.f32 %v1388, 0.0
    %v1395 = vmax.f32 %v1368, 0.0
    %v1396 = vmax.f32 %v1391, 0.0
    %v1397 = vld [vmem:[%s11] sm:$0xff]
    %v1398 = vld [vmem:[%s11 + $0x8] sm:$0xf]
    %v1399 = vld [vmem:[%s12] sm:$0xff]
    %v1400 = vld [vmem:[%s12 + $0x8] sm:$0xf]
    %v1401 = vsel %vm882, %v1394, 0.0
    %v1402 = vadd.f32 %v1393, %v1401
    %1403 = vadd.xlane.f32.xlu0 %v1402
    %v1404 = vpop.xlane.xlu0 %1403
    %v1405 = vsel %vm358, %v1395, 0.0
    %v1406 = vsel %vm1139, %v1396, 0.0
    %v1407 = vadd.f32 %v1405, %v1406
    %1408 = vadd.xlane.f32.xlu0 %v1407
    %v1409 = vpop.xlane.xlu0 %1408
    %v1410 = vrcp.pop 182.0
    %v1411 = vmul.f32 182.0, %v1410
    %v1412 = vsub.f32 1.0, %v1411
    %v1413 = vmul.f32 %v1410, %v1412
    %v1414 = vadd.f32 %v1410, %v1413
    %vm1415 = vweird.f32 %v1410
    %v1416 = vsel %vm1415, %v1410, %v1414
    %v1417 = vmul.f32 %v1404, %v1416
    %v1418 = vmul.f32 %v1409, %v1416
    %v1419 = vmul.f32 %v1393, %v1393
    %v1420 = vmul.f32 %v1394, %v1394
    %v1421 = vmul.f32 %v1395, %v1395
    %v1422 = vmul.f32 %v1396, %v1396
    %v1423 = vsel %vm882, %v1420, 0.0
    %v1424 = vadd.f32 %v1419, %v1423
    %1425 = vadd.xlane.f32.xlu0 %v1424
    %v1426 = vpop.xlane.xlu0 %1425
    %v1427 = vsel %vm358, %v1421, 0.0
    %v1428 = vsel %vm1139, %v1422, 0.0
    %v1429 = vadd.f32 %v1427, %v1428
    %1430 = vadd.xlane.f32.xlu0 %v1429
    %v1431 = vpop.xlane.xlu0 %1430
    %v1432 = vmul.f32 %v1426, %v1416
    %v1433 = vmul.f32 %v1431, %v1416
    %v1434 = vmul.f32 %v1417, %v1417
    %v1435 = vmul.f32 %v1418, %v1418
    %v1436 = vsub.f32 %v1432, %v1434
    %v1437 = vsub.f32 %v1433, %v1435
    %v1438 = vmax.f32 %v1436, 0.0
    %v1439 = vmax.f32 %v1437, 0.0
    %v1440 = vadd.f32 %v1438, 1e-05
    %v1441 = vadd.f32 %v1439, 1e-05
    %v1442 = vrsqrt.pop %v1440
    %v1443 = vmul.f32 %v1442, %v1440
    %v1444 = vmul.f32 %v1443, %v1442
    %v1445 = vmul.f32 0.5, %v1444
    %v1446 = vsub.f32 1.5, %v1445
    %v1447 = vmul.f32 %v1442, %v1446
    %vm1448 = vweird.f32 %v1440
    %vm1449 = vweird.f32 %v1442
    %vm1450 = vmor %vm1448, %vm1449
    %v1451 = vsel %vm1450, %v1442, %v1447
    %v1452 = vrsqrt.pop %v1441
    %v1453 = vmul.f32 %v1452, %v1441
    %v1454 = vmul.f32 %v1453, %v1452
    %v1455 = vmul.f32 0.5, %v1454
    %v1456 = vsub.f32 1.5, %v1455
    %v1457 = vmul.f32 %v1452, %v1456
    %vm1458 = vweird.f32 %v1441
    %vm1459 = vweird.f32 %v1452
    %vm1460 = vmor %vm1458, %vm1459
    %v1461 = vsel %vm1460, %v1452, %v1457
    %v1462 = vmul.f32 %v1397, %v1451
    %v1463 = vmul.f32 %v1398, %v1461
    %1465 = vset.pattern.permute.xlu0 0
    %1466 = vperm.xlu0 %1465, %v1462
    %v1467 = vpop.permute.xlu0 %1466
    %1470 = vset.pattern.permute.xlu0 0
    %1471 = vperm.xlu0 %1470, %v1463
    %v1472 = vpop.permute.xlu0 %1471
    %v1474 = vmul.f32 %v1393, %v1467
    %v1475 = vmul.f32 %v1394, %v1467
    %v1476 = vmul.f32 %v1395, %v1472
    %v1477 = vmul.f32 %v1396, %v1472
    %v1478 = vmul.f32 %v1417, %v1462
    %v1479 = vmul.f32 %v1418, %v1463
    %v1480 = vsub.f32 %v1399, %v1478
    %v1481 = vsub.f32 %v1400, %v1479
    %1483 = vset.pattern.permute.xlu0 0
    %1484 = vperm.xlu0 %1483, %v1480
    %v1485 = vpop.permute.xlu0 %1484
    %1488 = vset.pattern.permute.xlu0 0
    %1489 = vperm.xlu0 %1488, %v1481
    %v1490 = vpop.permute.xlu0 %1489
    %v1492 = vadd.f32 %v1474, %v1485
    %v1493 = vadd.f32 %v1475, %v1485
    %v1494 = vadd.f32 %v1476, %v1490
    %v1495 = vadd.f32 %v1477, %v1490
    %1496 = vst [vmem:[#allocation6] sm:$0xff] %v1492
    %1497 = vst.msk [vmem:[#allocation6 + $0x8] sm:$0xff] %vm882, %v1493
    %1498 = vst [vmem:[#allocation6 + $0x10] sm:$0xf] %v1494
    %1499 = vst.msk [vmem:[#allocation6 + $0x18] sm:$0xf] %vm1139, %v1495
    %v1500 = vld [vmem:[#allocation6] ss:$0 sm:$0xff]
    %vm1501 = vcmask 737280
    %1502 = vst.msk [vmem:[#allocation7] sm:$0x1] %vm1501, %v1500
    %v1503 = vld [vmem:[#allocation6 + $0x1] ss:$0 sm:$0xff]
    %1505 = vrot.lane.b32.xlu0 %v1503, 91
    %v1506 = vpop.permute.xlu0 %1505
    %v1507 = vrot.slane %v1506, 6
    %vm1508 = vcmask 744448
    %v1509 = vsel %vm1508, %v1507, %v1506
    %vm1511 = vcmask 1041112
    %vm1512 = vcmask 436226
    %vm1513 = vmor %vm1512, %vm1511
    %1514 = vst.msk [vmem:[#allocation7] sm:$0x5] %vm1513, %v1509
    %v1515 = vld [vmem:[#allocation6 + $0x2] ss:$0 sm:$0xff]
    %1517 = vrot.lane.b32.xlu0 %v1515, 54
    %v1518 = vpop.permute.xlu0 %1517
    %v1519 = vrot.slane %v1518, 6
    %v1520 = vsel %vm882, %v1519, %v1518
    %vm1522 = vcmask 1040816
    %vm1523 = vcmask 133122
    %vm1524 = vmor %vm1523, %vm1522
    %1525 = vst.msk [vmem:[#allocation7 + $0x2] sm:$0x5] %vm1524, %v1520
    %v1526 = vld [vmem:[#allocation6 + $0x3] ss:$0 sm:$0xff]
    %1528 = vrot.lane.b32.xlu0 %v1526, 17
    %v1529 = vpop.permute.xlu0 %1528
    %vm1531 = vcmask 876680
    %1532 = vst.msk [vmem:[#allocation7 + $0x4] sm:$0x1] %vm1531, %v1529
    %v1533 = vld [vmem:[#allocation6 + $0x4] ss:$0 sm:$0xff]
    %1535 = vrot.lane.b32.xlu0 %v1533, 108
    %v1536 = vpop.permute.xlu0 %1535
    %v1537 = vrot.slane %v1536, 6
    %vm1538 = vcmask 883712
    %v1539 = vsel %vm1538, %v1537, %v1536
    %vm1541 = vcmask 1041248
    %vm1542 = vcmask 575490
    %vm1543 = vmor %vm1542, %vm1541
    %1544 = vst.msk [vmem:[#allocation7 + $0x4] sm:$0x5] %vm1543, %v1539
    %v1545 = vld [vmem:[#allocation6 + $0x5] ss:$0 sm:$0xff]
    %1547 = vrot.lane.b32.xlu0 %v1545, 71
    %v1548 = vpop.permute.xlu0 %1547
    %v1549 = vrot.slane %v1548, 6
    %vm1550 = vcmask 580608
    %v1551 = vsel %vm1550, %v1549, %v1548
    %vm1553 = vcmask 1040952
    %vm1554 = vcmask 272386
    %vm1555 = vmor %vm1554, %vm1553
    %1556 = vst.msk [vmem:[#allocation7 + $0x6] sm:$0x5] %vm1555, %v1551
    %v1557 = vld [vmem:[#allocation6 + $0x6] ss:$0 sm:$0xff]
    %1559 = vrot.lane.b32.xlu0 %v1557, 34
    %v1560 = vpop.permute.xlu0 %1559
    %vm1562 = vcmask 1016080
    %1563 = vst.msk [vmem:[#allocation7 + $0x8] sm:$0x1] %vm1562, %v1560
    %v1564 = vld [vmem:[#allocation6 + $0x7] ss:$0 sm:$0xff]
    %1566 = vrot.lane.b32.xlu0 %v1564, 125
    %v1567 = vpop.permute.xlu0 %1566
    %v1568 = vrot.slane %v1567, 6
    %v1569 = vsel %vm580, %v1568, %v1567
    %vm1571 = vcmask 1041384
    %vm1572 = vcmask 714754
    %vm1573 = vmor %vm1572, %vm1571
    %1574 = vst.msk [vmem:[#allocation7 + $0x8] sm:$0x5] %vm1573, %v1569
    %v1575 = vld [vmem:[#allocation6 + $0x10] ss:$0 sm:$0xff]
    %1577 = vrot.lane.b32.xlu0 %v1575, 88
    %v1578 = vpop.permute.xlu0 %1577
    %v1579 = vrot.slane %v1578, 6
    %v1580 = vsel %vm730, %v1579, %v1578
    %vm1582 = vcmask 1041088
    %vm1583 = vcmask 411650
    %vm1584 = vmor %vm1583, %vm1582
    %1585 = vst.msk [vmem:[#allocation7 + $0xa] sm:$0x5] %vm1584, %v1580
    %v1586 = vld [vmem:[#allocation6 + $0x11] ss:$0 sm:$0xff]
    %1588 = vrot.lane.b32.xlu0 %v1586, 51
    %v1589 = vpop.permute.xlu0 %1588
    %v1590 = vrot.slane %v1589, 6
    %vm1591 = vcmask 416768
    %v1592 = vsel %vm1591, %v1590, %v1589
    %vm1594 = vcmask 1040792
    %vm1595 = vcmask 108546
    %vm1596 = vmor %vm1595, %vm1594
    %1597 = vst.msk [vmem:[#allocation7 + $0xc] sm:$0x5] %vm1596, %v1592
    %v1598 = vld [vmem:[#allocation6 + $0x12] ss:$0 sm:$0xff]
    %1600 = vrot.lane.b32.xlu0 %v1598, 14
    %v1601 = vpop.permute.xlu0 %1600
    %vm1603 = vcmask 852080
    %1604 = vst.msk [vmem:[#allocation7 + $0xe] sm:$0x1] %vm1603, %v1601
    %v1605 = vld [vmem:[#allocation6 + $0x13] ss:$0 sm:$0xff]
    %1607 = vrot.lane.b32.xlu0 %v1605, 105
    %v1608 = vpop.permute.xlu0 %1607
    %v1609 = vrot.slane %v1608, 6
    %vm1610 = vcmask 859136
    %v1611 = vsel %vm1610, %v1609, %v1608
    %vm1613 = vcmask 1041224
    %vm1614 = vcmask 550914
    %vm1615 = vmor %vm1614, %vm1613
    %1616 = vst.msk [vmem:[#allocation7 + $0xe] sm:$0x5] %vm1615, %v1611
    %v1617 = vld [vmem:[#allocation6] ss:$0 sm:$0xff]
    %v1618 = vld [vmem:[#allocation6 + $0x8] ss:$0 sm:$0xff]
    %v1621 = vrot.slane %v1618, 6
    %vm1622 = vcmask 1041408
    %v1623 = vsel %vm1622, %v1617, %v1621
    %1624 = vrot.lane.b32.xlu0 %v1623, 37
    %v1625 = vpop.permute.xlu0 %1624
    %v1626 = vrot.slane %v1625, 2
    %vm1627 = vcmask 302080
    %v1628 = vsel %vm1627, %v1625, %v1626
    %1630 = vst.msk [vmem:[#allocation7 + $0x1] sm:$0x1] %vm1501, %v1628
    %v1631 = vld [vmem:[#allocation6 + $0x1] ss:$0 sm:$0xff]
    %v1632 = vld [vmem:[#allocation6 + $0x9] ss:$0 sm:$0xff]
    %v1635 = vrot.slane %v1632, 6
    %v1636 = vsel %vm1622, %v1631, %v1635
    %1638 = vst.msk [vmem:[#allocation7 + $0x1] sm:$0x5] %vm1513, %v1636
    %v1639 = vld [vmem:[#allocation6 + $0x2] ss:$0 sm:$0xff]
    %v1640 = vld [vmem:[#allocation6 + $0xa] ss:$0 sm:$0xff]
    %v1643 = vrot.slane %v1640, 6
    %v1644 = vsel %vm1622, %v1639, %v1643
    %1645 = vrot.lane.b32.xlu0 %v1644, 91
    %v1646 = vpop.permute.xlu0 %1645
    %v1647 = vrot.slane %v1646, 2
    %v1648 = vsel %vm1508, %v1646, %v1647
    %1650 = vst.msk [vmem:[#allocation7 + $0x3] sm:$0x5] %vm1524, %v1648
    %v1651 = vld [vmem:[#allocation6 + $0x3] ss:$0 sm:$0xff]
    %v1652 = vld [vmem:[#allocation6 + $0xb] ss:$0 sm:$0xff]
    %v1655 = vrot.slane %v1652, 6
    %v1656 = vsel %vm1622, %v1651, %v1655
    %1657 = vrot.lane.b32.xlu0 %v1656, 54
    %v1658 = vpop.permute.xlu0 %1657
    %v1659 = vrot.slane %v1658, 2
    %v1660 = vsel %vm882, %v1658, %v1659
    %1662 = vst.msk [vmem:[#allocation7 + $0x5] sm:$0x1] %vm1531, %v1660
    %v1663 = vld [vmem:[#allocation6 + $0x4] ss:$0 sm:$0xff]
    %v1664 = vld [vmem:[#allocation6 + $0xc] ss:$0 sm:$0xff]
    %v1667 = vrot.slane %v1664, 6
    %v1668 = vsel %vm1622, %v1663, %v1667
    %1669 = vrot.lane.b32.xlu0 %v1668, 17
    %v1670 = vpop.permute.xlu0 %1669
    %v1671 = vrot.slane %v1670, 6
    %vm1672 = vcmask 138240
    %v1673 = vsel %vm1672, %v1671, %v1670
    %1675 = vst.msk [vmem:[#allocation7 + $0x5] sm:$0x5] %vm1543, %v1673
    %v1676 = vld [vmem:[#allocation6 + $0x5] ss:$0 sm:$0xff]
    %v1677 = vld [vmem:[#allocation6 + $0xd] ss:$0 sm:$0xff]
    %v1680 = vrot.slane %v1677, 6
    %v1681 = vsel %vm1622, %v1676, %v1680
    %1682 = vrot.lane.b32.xlu0 %v1681, 108
    %v1683 = vpop.permute.xlu0 %1682
    %v1684 = vrot.slane %v1683, 2
    %v1685 = vsel %vm1538, %v1683, %v1684
    %1687 = vst.msk [vmem:[#allocation7 + $0x7] sm:$0x5] %vm1555, %v1685
    %v1688 = vld [vmem:[#allocation6 + $0x6] ss:$0 sm:$0xff]
    %v1689 = vld [vmem:[#allocation6 + $0xe] ss:$0 sm:$0xff]
    %v1692 = vrot.slane %v1689, 6
    %v1693 = vsel %vm1622, %v1688, %v1692
    %1694 = vrot.lane.b32.xlu0 %v1693, 71
    %v1695 = vpop.permute.xlu0 %1694
    %v1696 = vrot.slane %v1695, 2
    %v1697 = vsel %vm1550, %v1695, %v1696
    %1699 = vst.msk [vmem:[#allocation7 + $0x9] sm:$0x1] %vm1562, %v1697
    %v1700 = vld [vmem:[#allocation6 + $0x7] ss:$0 sm:$0xff]
    %v1701 = vld [vmem:[#allocation6 + $0xf] ss:$0 sm:$0xff]
    %v1704 = vrot.slane %v1701, 6
    %v1705 = vsel %vm1622, %v1700, %v1704
    %1706 = vrot.lane.b32.xlu0 %v1705, 34
    %v1707 = vpop.permute.xlu0 %1706
    %v1708 = vrot.slane %v1707, 6
    %vm1709 = vcmask 277504
    %v1710 = vsel %vm1709, %v1708, %v1707
    %1712 = vst.msk [vmem:[#allocation7 + $0x9] sm:$0x5] %vm1573, %v1710
    %v1713 = vld [vmem:[#allocation6 + $0x10] ss:$0 sm:$0xff]
    %v1714 = vld [vmem:[#allocation6 + $0x18] ss:$0 sm:$0xff]
    %v1717 = vrot.slane %v1714, 6
    %v1718 = vsel %vm1622, %v1713, %v1717
    %1719 = vrot.lane.b32.xlu0 %v1718, 125
    %v1720 = vpop.permute.xlu0 %1719
    %v1721 = vrot.slane %v1720, 2
    %v1722 = vsel %vm580, %v1720, %v1721
    %1724 = vst.msk [vmem:[#allocation7 + $0xb] sm:$0x5] %vm1584, %v1722
    %v1725 = vld [vmem:[#allocation6 + $0x11] ss:$0 sm:$0xff]
    %v1726 = vld [vmem:[#allocation6 + $0x19] ss:$0 sm:$0xff]
    %v1729 = vrot.slane %v1726, 6
    %v1730 = vsel %vm1622, %v1725, %v1729
    %1731 = vrot.lane.b32.xlu0 %v1730, 88
    %v1732 = vpop.permute.xlu0 %1731
    %v1733 = vrot.slane %v1732, 2
    %v1734 = vsel %vm730, %v1732, %v1733
    %1736 = vst.msk [vmem:[#allocation7 + $0xd] sm:$0x5] %vm1596, %v1734
    %v1737 = vld [vmem:[#allocation6 + $0x12] ss:$0 sm:$0xff]
    %v1738 = vld [vmem:[#allocation6 + $0x1a] ss:$0 sm:$0xff]
    %v1741 = vrot.slane %v1738, 6
    %v1742 = vsel %vm1622, %v1737, %v1741
    %1743 = vrot.lane.b32.xlu0 %v1742, 51
    %v1744 = vpop.permute.xlu0 %1743
    %v1745 = vrot.slane %v1744, 2
    %v1746 = vsel %vm1591, %v1744, %v1745
    %1748 = vst.msk [vmem:[#allocation7 + $0xf] sm:$0x1] %vm1603, %v1746
    %v1749 = vld [vmem:[#allocation6 + $0x13] ss:$0 sm:$0xff]
    %v1750 = vld [vmem:[#allocation6 + $0x1b] ss:$0 sm:$0xff]
    %v1753 = vrot.slane %v1750, 6
    %v1754 = vsel %vm1622, %v1749, %v1753
    %1755 = vrot.lane.b32.xlu0 %v1754, 14
    %v1756 = vpop.permute.xlu0 %1755
    %v1757 = vrot.slane %v1756, 6
    %vm1758 = vcmask 113664
    %v1759 = vsel %vm1758, %v1757, %v1756
    %1761 = vst.msk [vmem:[#allocation7 + $0xf] sm:$0x5] %vm1615, %v1759
    %v1762 = vld [vmem:[#allocation7] sm:$0xff]
    %v1763 = vld [vmem:[#allocation7 + $0x8] sm:$0xff]
    %v1764 = vld [vmem:[#allocation7 + $0x10] sm:$0x3]
    %1768 = vst [vmem:[#allocation1] ss:$4 sm:$0xff] %v1762
    %s1769 = scalar_lea.vmem [#allocation1], 32
    %1770 = vst [vmem:[%s1769] ss:$4 sm:$0xff] %v1763
    %v1771 = vld.sshfl [vmem:[#allocation1] sm:$0xff pattern:$0x73625140]
    %v1772 = vld.sshfl [vmem:[#allocation1 + $0x8] sm:$0xff pattern:$0x73625140]
    %v1773 = vld.sshfl [vmem:[#allocation1 + $0x10] sm:$0xff pattern:$0x73625140]
    %v1774 = vld.sshfl [vmem:[#allocation1 + $0x18] sm:$0xff pattern:$0x73625140]
    %v1775 = vld.sshfl [vmem:[#allocation1 + $0x20] sm:$0xff pattern:$0x73625140]
    %v1776 = vld.sshfl [vmem:[#allocation1 + $0x28] sm:$0xff pattern:$0x73625140]
    %v1777 = vld.sshfl [vmem:[#allocation1 + $0x30] sm:$0xff pattern:$0x73625140]
    %v1778 = vld.sshfl [vmem:[#allocation1 + $0x38] sm:$0xff pattern:$0x73625140]
    %1779 = vst [vmem:[#allocation1] ss:$4 sm:$0xff] %v1764
    %v1780 = vld.sshfl [vmem:[#allocation1] sm:$0xff pattern:$0x73625140]
    %v1790 = vpack.c.bf16 %v1771, %v1771
    %v1791 = vpack.c.bf16 %v1772, %v1772
    %v1792 = vpack.c.bf16 %v1773, %v1773
    %v1793 = vpack.c.bf16 %v1774, %v1774
    %v1794 = vpack.c.bf16 %v1775, %v1775
    %v1795 = vpack.c.bf16 %v1776, %v1776
    %v1796 = vpack.c.bf16 %v1777, %v1777
    %v1797 = vpack.c.bf16 %v1778, %v1778
    %v1798 = vpack.c.bf16 %v1780, %v1780
    %v1799 = vld [vmem:[%s13] sm:$0xff]
    %v1800 = vld [vmem:[%s13 + $0x8] sm:$0xff]
    %v1801 = vld [vmem:[%s13 + $0x10] sm:$0xff]
    %v1802 = vld [vmem:[%s13 + $0x18] sm:$0xff]
    %v1803 = vld [vmem:[%s13 + $0x20] sm:$0xff]
    %v1804 = vld [vmem:[%s13 + $0x28] sm:$0xff]
    %v1805 = vld [vmem:[%s13 + $0x30] sm:$0xff]
    %v1806 = vld [vmem:[%s13 + $0x38] sm:$0xff]
    %v1807 = vld [vmem:[%s13 + $0x40] sm:$0xff]
    %v1808 = vld [vmem:[%s13 + $0x48] sm:$0xff]
    %v1809 = vld [vmem:[%s13 + $0x50] sm:$0xff]
    %v1810 = vld [vmem:[%s13 + $0x58] sm:$0xff]
    %v1811 = vld [vmem:[%s13 + $0x60] sm:$0xff]
    %v1812 = vld [vmem:[%s13 + $0x68] sm:$0xff]
    %v1813 = vld [vmem:[%s13 + $0x70] sm:$0xff]
    %v1814 = vld [vmem:[%s13 + $0x78] sm:$0xff]
    %v1815 = vld [vmem:[%s13 + $0x80] sm:$0xff]
    %v1816 = vld [vmem:[%s13 + $0x88] sm:$0xff]
    %v1817 = vld [vmem:[%s13 + $0x90] sm:$0xff]
    %v1818 = vld [vmem:[%s13 + $0x98] sm:$0xff]
    %v1819 = vld [vmem:[%s13 + $0xa0] sm:$0xff]
    %v1820 = vld [vmem:[%s13 + $0xa8] sm:$0xff]
    %v1821 = vld [vmem:[%s13 + $0xb0] sm:$0xff]
    %v1822 = vld [vmem:[%s13 + $0xb8] sm:$0xff]
    %v1823 = vld [vmem:[%s13 + $0xc0] sm:$0xff]
    %v1824 = vld [vmem:[%s13 + $0xc8] sm:$0xff]
    %v1825 = vld [vmem:[%s13 + $0xd0] sm:$0xff]
    %v1826 = vld [vmem:[%s13 + $0xd8] sm:$0xff]
    %v1827 = vld [vmem:[%s13 + $0xe0] sm:$0xff]
    %v1828 = vld [vmem:[%s13 + $0xe8] sm:$0xff]
    %v1829 = vld [vmem:[%s13 + $0xf0] sm:$0xff]
    %v1830 = vld [vmem:[%s13 + $0xf8] sm:$0xff]
    %v1831 = vld [vmem:[%s13 + $0x100] sm:$0xff]
    %v1832 = vld [vmem:[%s13 + $0x108] sm:$0xff]
    %v1833 = vld [vmem:[%s13 + $0x110] sm:$0xff]
    %v1834 = vld [vmem:[%s13 + $0x118] sm:$0xff]
    %v1835 = vld [vmem:[%s13 + $0x120] sm:$0xff]
    %v1836 = vld [vmem:[%s13 + $0x128] sm:$0xff]
    %v1837 = vld [vmem:[%s13 + $0x130] sm:$0xff]
    %v1838 = vld [vmem:[%s13 + $0x138] sm:$0xff]
    %v1839 = vld [vmem:[%s13 + $0x140] sm:$0xff]
    %v1840 = vld [vmem:[%s13 + $0x148] sm:$0xff]
    %v1841 = vld [vmem:[%s13 + $0x150] sm:$0xff]
    %v1842 = vld [vmem:[%s13 + $0x158] sm:$0xff]
    %v1843 = vld [vmem:[%s13 + $0x160] sm:$0xff]
    %v1844 = vld [vmem:[%s13 + $0x168] sm:$0xff]
    %v1845 = vld [vmem:[%s13 + $0x170] sm:$0xff]
    %v1846 = vld [vmem:[%s13 + $0x178] sm:$0xff]
    %v1847 = vld [vmem:[%s13 + $0x180] sm:$0xff]
    %v1848 = vld [vmem:[%s13 + $0x188] sm:$0xff]
    %v1849 = vld [vmem:[%s13 + $0x190] sm:$0xff]
    %v1850 = vld [vmem:[%s13 + $0x198] sm:$0xff]
    %v1851 = vld [vmem:[%s13 + $0x1a0] sm:$0xff]
    %v1852 = vld [vmem:[%s13 + $0x1a8] sm:$0xff]
    %v1853 = vld [vmem:[%s13 + $0x1b0] sm:$0xff]
    %v1854 = vld [vmem:[%s13 + $0x1b8] sm:$0xff]
    %v1855 = vld [vmem:[%s13 + $0x1c0] sm:$0xff]
    %v1856 = vld [vmem:[%s13 + $0x1c8] sm:$0xff]
    %v1857 = vld [vmem:[%s13 + $0x1d0] sm:$0xff]
    %v1858 = vld [vmem:[%s13 + $0x1d8] sm:$0xff]
    %v1859 = vld [vmem:[%s13 + $0x1e0] sm:$0xff]
    %v1860 = vld [vmem:[%s13 + $0x1e8] sm:$0xff]
    %v1861 = vld [vmem:[%s13 + $0x1f0] sm:$0xff]
    %v1862 = vld [vmem:[%s13 + $0x1f8] sm:$0xff]
    %v1863 = vld [vmem:[%s13 + $0x200] sm:$0xff]
    %v1864 = vld [vmem:[%s13 + $0x208] sm:$0xff]
    %v1865 = vld [vmem:[%s13 + $0x210] sm:$0xff]
    %v1866 = vld [vmem:[%s13 + $0x218] sm:$0xff]
    %v1867 = vld [vmem:[%s13 + $0x220] sm:$0xff]
    %v1868 = vld [vmem:[%s13 + $0x228] sm:$0xff]
    %v1869 = vld [vmem:[%s13 + $0x230] sm:$0xff]
    %v1870 = vld [vmem:[%s13 + $0x238] sm:$0xff]
    %v1871 = vld [vmem:[%s13 + $0x240] sm:$0xff]
    %v1872 = vld [vmem:[%s13 + $0x248] sm:$0xff]
    %v1873 = vld [vmem:[%s13 + $0x250] sm:$0xff]
    %v1874 = vld [vmem:[%s13 + $0x258] sm:$0xff]
    %v1875 = vld [vmem:[%s13 + $0x260] sm:$0xff]
    %v1876 = vld [vmem:[%s13 + $0x268] sm:$0xff]
    %v1877 = vld [vmem:[%s13 + $0x270] sm:$0xff]
    %v1878 = vld [vmem:[%s13 + $0x278] sm:$0xff]
    %v1879 = vld [vmem:[%s13 + $0x280] sm:$0xff]
    %v1880 = vld [vmem:[%s13 + $0x288] sm:$0xff]
    %v1881 = vld [vmem:[%s13 + $0x290] sm:$0xff]
    %v1882 = vld [vmem:[%s13 + $0x298] sm:$0xff]
    %v1883 = vld [vmem:[%s13 + $0x2a0] sm:$0xff]
    %v1884 = vld [vmem:[%s13 + $0x2a8] sm:$0xff]
    %v1885 = vld [vmem:[%s13 + $0x2b0] sm:$0xff]
    %v1886 = vld [vmem:[%s13 + $0x2b8] sm:$0xff]
    %v1887 = vld [vmem:[%s13 + $0x2c0] sm:$0xff]
    %v1888 = vld [vmem:[%s13 + $0x2c8] sm:$0xff]
    %v1889 = vld [vmem:[%s13 + $0x2d0] sm:$0xff]
    %v1890 = vld [vmem:[%s13 + $0x2d8] sm:$0xff]
    %v1891 = vld [vmem:[%s13 + $0x2e0] sm:$0xff]
    %v1892 = vld [vmem:[%s13 + $0x2e8] sm:$0xff]
    %v1893 = vld [vmem:[%s13 + $0x2f0] sm:$0xff]
    %v1894 = vld [vmem:[%s13 + $0x2f8] sm:$0xff]
    %v1895 = vld [vmem:[%s13 + $0x300] sm:$0xff]
    %v1896 = vld [vmem:[%s13 + $0x308] sm:$0xff]
    %v1897 = vld [vmem:[%s13 + $0x310] sm:$0xff]
    %v1898 = vld [vmem:[%s13 + $0x318] sm:$0xff]
    %v1899 = vld [vmem:[%s13 + $0x320] sm:$0xff]
    %v1900 = vld [vmem:[%s13 + $0x328] sm:$0xff]
    %v1901 = vld [vmem:[%s13 + $0x330] sm:$0xff]
    %v1902 = vld [vmem:[%s13 + $0x338] sm:$0xff]
    %v1903 = vld [vmem:[%s13 + $0x340] sm:$0xff]
    %v1904 = vld [vmem:[%s13 + $0x348] sm:$0xff]
    %v1905 = vld [vmem:[%s13 + $0x350] sm:$0xff]
    %v1906 = vld [vmem:[%s13 + $0x358] sm:$0xff]
    %v1907 = vld [vmem:[%s13 + $0x360] sm:$0xff]
    %v1908 = vld [vmem:[%s13 + $0x368] sm:$0xff]
    %v1909 = vld [vmem:[%s13 + $0x370] sm:$0xff]
    %v1910 = vld [vmem:[%s13 + $0x378] sm:$0xff]
    %v1911 = vld [vmem:[%s13 + $0x380] sm:$0xff]
    %v1912 = vld [vmem:[%s13 + $0x388] sm:$0xff]
    %v1913 = vld [vmem:[%s13 + $0x390] sm:$0xff]
    %v1914 = vld [vmem:[%s13 + $0x398] sm:$0xff]
    %v1915 = vld [vmem:[%s13 + $0x3a0] sm:$0xff]
    %v1916 = vld [vmem:[%s13 + $0x3a8] sm:$0xff]
    %v1917 = vld [vmem:[%s13 + $0x3b0] sm:$0xff]
    %v1918 = vld [vmem:[%s13 + $0x3b8] sm:$0xff]
    %v1919 = vld [vmem:[%s13 + $0x3c0] sm:$0xff]
    %v1920 = vld [vmem:[%s13 + $0x3c8] sm:$0xff]
    %v1921 = vld [vmem:[%s13 + $0x3d0] sm:$0xff]
    %v1922 = vld [vmem:[%s13 + $0x3d8] sm:$0xff]
    %v1923 = vld [vmem:[%s13 + $0x3e0] sm:$0xff]
    %v1924 = vld [vmem:[%s13 + $0x3e8] sm:$0xff]
    %v1925 = vld [vmem:[%s13 + $0x3f0] sm:$0xff]
    %v1926 = vld [vmem:[%s13 + $0x3f8] sm:$0xff]
    %v1927 = vld [vmem:[%s13 + $0x400] sm:$0xff]
    %v1928 = vld [vmem:[%s13 + $0x408] sm:$0xff]
    %v1929 = vld [vmem:[%s13 + $0x410] sm:$0xff]
    %v1930 = vld [vmem:[%s13 + $0x418] sm:$0xff]
    %v1931 = vld [vmem:[%s13 + $0x420] sm:$0xff]
    %v1932 = vld [vmem:[%s13 + $0x428] sm:$0xff]
    %v1933 = vld [vmem:[%s13 + $0x430] sm:$0xff]
    %v1934 = vld [vmem:[%s13 + $0x438] sm:$0xff]
    %v1935 = vld [vmem:[%s13 + $0x440] sm:$0xff]
    %v1936 = vld [vmem:[%s13 + $0x448] sm:$0xff]
    %v1937 = vld [vmem:[%s13 + $0x450] sm:$0xff]
    %v1938 = vld [vmem:[%s13 + $0x458] sm:$0xff]
    %v1939 = vld [vmem:[%s13 + $0x460] sm:$0xff]
    %v1940 = vld [vmem:[%s13 + $0x468] sm:$0xff]
    %v1941 = vld [vmem:[%s13 + $0x470] sm:$0xff]
    %v1942 = vld [vmem:[%s13 + $0x478] sm:$0xff]
    %v1943 = vld [vmem:[%s13 + $0x480] sm:$0xff]
    %v1944 = vld [vmem:[%s13 + $0x488] sm:$0xff]
    %v1945 = vld [vmem:[%s13 + $0x490] sm:$0xff]
    %v1946 = vld [vmem:[%s13 + $0x498] sm:$0xff]
    %v1947 = vld [vmem:[%s13 + $0x4a0] sm:$0xff]
    %v1948 = vld [vmem:[%s13 + $0x4a8] sm:$0xff]
    %v1949 = vld [vmem:[%s13 + $0x4b0] sm:$0xff]
    %v1950 = vld [vmem:[%s13 + $0x4b8] sm:$0xff]
    %v1951 = vld [vmem:[%s13 + $0x4c0] sm:$0xff]
    %v1952 = vld [vmem:[%s13 + $0x4c8] sm:$0xff]
    %v1953 = vld [vmem:[%s13 + $0x4d0] sm:$0xff]
    %v1954 = vld [vmem:[%s13 + $0x4d8] sm:$0xff]
    %v1955 = vld [vmem:[%s13 + $0x4e0] sm:$0xff]
    %v1956 = vld [vmem:[%s13 + $0x4e8] sm:$0xff]
    %v1957 = vld [vmem:[%s13 + $0x4f0] sm:$0xff]
    %v1958 = vld [vmem:[%s13 + $0x4f8] sm:$0xff]
    %v1959 = vld [vmem:[%s13 + $0x500] sm:$0xff]
    %v1960 = vld [vmem:[%s13 + $0x508] sm:$0xff]
    %v1961 = vld [vmem:[%s13 + $0x510] sm:$0xff]
    %v1962 = vld [vmem:[%s13 + $0x518] sm:$0xff]
    %v1963 = vld [vmem:[%s13 + $0x520] sm:$0xff]
    %v1964 = vld [vmem:[%s13 + $0x528] sm:$0xff]
    %v1965 = vld [vmem:[%s13 + $0x530] sm:$0xff]
    %v1966 = vld [vmem:[%s13 + $0x538] sm:$0xff]
    %v1967 = vld [vmem:[%s13 + $0x540] sm:$0xff]
    %v1968 = vld [vmem:[%s13 + $0x548] sm:$0xff]
    %v1969 = vld [vmem:[%s13 + $0x550] sm:$0xff]
    %v1970 = vld [vmem:[%s13 + $0x558] sm:$0xff]
    %v1971 = vld [vmem:[%s13 + $0x560] sm:$0xff]
    %v1972 = vld [vmem:[%s13 + $0x568] sm:$0xff]
    %v1973 = vld [vmem:[%s13 + $0x570] sm:$0xff]
    %v1974 = vld [vmem:[%s13 + $0x578] sm:$0xff]
    %v1975 = vld [vmem:[%s13 + $0x580] sm:$0xff]
    %v1976 = vld [vmem:[%s13 + $0x588] sm:$0xff]
    %v1977 = vld [vmem:[%s13 + $0x590] sm:$0xff]
    %v1978 = vld [vmem:[%s13 + $0x598] sm:$0xff]
    %v1979 = vld [vmem:[%s13 + $0x5a0] sm:$0xff]
    %v1980 = vld [vmem:[%s13 + $0x5a8] sm:$0xff]
    %v1981 = vld [vmem:[%s13 + $0x5b0] sm:$0xff]
    %v1982 = vld [vmem:[%s13 + $0x5b8] sm:$0xff]
    %v1983 = vld [vmem:[%s13 + $0x5c0] sm:$0xff]
    %v1984 = vld [vmem:[%s13 + $0x5c8] sm:$0xff]
    %v1985 = vld [vmem:[%s13 + $0x5d0] sm:$0xff]
    %v1986 = vld [vmem:[%s13 + $0x5d8] sm:$0xff]
    %v1987 = vld [vmem:[%s13 + $0x5e0] sm:$0xff]
    %v1988 = vld [vmem:[%s13 + $0x5e8] sm:$0xff]
    %v1989 = vld [vmem:[%s13 + $0x5f0] sm:$0xff]
    %v1990 = vld [vmem:[%s13 + $0x5f8] sm:$0xff]
    %v1991 = vld [vmem:[%s13 + $0x600] sm:$0xff]
    %v1992 = vld [vmem:[%s13 + $0x608] sm:$0xff]
    %v1993 = vld [vmem:[%s13 + $0x610] sm:$0xff]
    %v1994 = vld [vmem:[%s13 + $0x618] sm:$0xff]
    %v1995 = vld [vmem:[%s13 + $0x620] sm:$0xff]
    %v1996 = vld [vmem:[%s13 + $0x628] sm:$0xff]
    %v1997 = vld [vmem:[%s13 + $0x630] sm:$0xff]
    %v1998 = vld [vmem:[%s13 + $0x638] sm:$0xff]
    %v1999 = vld [vmem:[%s13 + $0x640] sm:$0xff]
    %v2000 = vld [vmem:[%s13 + $0x648] sm:$0xff]
    %v2001 = vld [vmem:[%s13 + $0x650] sm:$0xff]
    %v2002 = vld [vmem:[%s13 + $0x658] sm:$0xff]
    %v2003 = vld [vmem:[%s13 + $0x660] sm:$0xff]
    %v2004 = vld [vmem:[%s13 + $0x668] sm:$0xff]
    %v2005 = vld [vmem:[%s13 + $0x670] sm:$0xff]
    %v2006 = vld [vmem:[%s13 + $0x678] sm:$0xff]
    %v2007 = vld [vmem:[%s13 + $0x680] sm:$0xff]
    %v2008 = vld [vmem:[%s13 + $0x688] sm:$0xff]
    %v2009 = vld [vmem:[%s13 + $0x690] sm:$0xff]
    %v2010 = vld [vmem:[%s13 + $0x698] sm:$0xff]
    %v2011 = vld [vmem:[%s13 + $0x6a0] sm:$0xff]
    %v2012 = vld [vmem:[%s13 + $0x6a8] sm:$0xff]
    %v2013 = vld [vmem:[%s13 + $0x6b0] sm:$0xff]
    %v2014 = vld [vmem:[%s13 + $0x6b8] sm:$0xff]
    %v2015 = vld [vmem:[%s13 + $0x6c0] sm:$0xff]
    %v2016 = vld [vmem:[%s13 + $0x6c8] sm:$0xff]
    %v2017 = vld [vmem:[%s13 + $0x6d0] sm:$0xff]
    %v2018 = vld [vmem:[%s13 + $0x6d8] sm:$0xff]
    %v2019 = vld [vmem:[%s13 + $0x6e0] sm:$0xff]
    %v2020 = vld [vmem:[%s13 + $0x6e8] sm:$0xff]
    %v2021 = vld [vmem:[%s13 + $0x6f0] sm:$0xff]
    %v2022 = vld [vmem:[%s13 + $0x6f8] sm:$0xff]
    %v2023 = vld [vmem:[%s13 + $0x700] sm:$0xff]
    %v2024 = vld [vmem:[%s13 + $0x708] sm:$0xff]
    %v2025 = vld [vmem:[%s13 + $0x710] sm:$0xff]
    %v2026 = vld [vmem:[%s13 + $0x718] sm:$0xff]
    %v2027 = vld [vmem:[%s13 + $0x720] sm:$0xff]
    %v2028 = vld [vmem:[%s13 + $0x728] sm:$0xff]
    %v2029 = vld [vmem:[%s13 + $0x730] sm:$0xff]
    %v2030 = vld [vmem:[%s13 + $0x738] sm:$0xff]
    %v2031 = vld [vmem:[%s13 + $0x740] sm:$0xff]
    %v2032 = vld [vmem:[%s13 + $0x748] sm:$0xff]
    %v2033 = vld [vmem:[%s13 + $0x750] sm:$0xff]
    %v2034 = vld [vmem:[%s13 + $0x758] sm:$0xff]
    %v2035 = vld [vmem:[%s13 + $0x760] sm:$0xff]
    %v2036 = vld [vmem:[%s13 + $0x768] sm:$0xff]
    %v2037 = vld [vmem:[%s13 + $0x770] sm:$0xff]
    %v2038 = vld [vmem:[%s13 + $0x778] sm:$0xff]
    %v2039 = vld [vmem:[%s13 + $0x780] sm:$0xff]
    %v2040 = vld [vmem:[%s13 + $0x788] sm:$0xff]
    %v2041 = vld [vmem:[%s13 + $0x790] sm:$0xff]
    %v2042 = vld [vmem:[%s13 + $0x798] sm:$0xff]
    %v2043 = vld [vmem:[%s13 + $0x7a0] sm:$0xff]
    %v2044 = vld [vmem:[%s13 + $0x7a8] sm:$0xff]
    %v2045 = vld [vmem:[%s13 + $0x7b0] sm:$0xff]
    %v2046 = vld [vmem:[%s13 + $0x7b8] sm:$0xff]
    %v2047 = vld [vmem:[%s13 + $0x7c0] sm:$0xff]
    %v2048 = vld [vmem:[%s13 + $0x7c8] sm:$0xff]
    %v2049 = vld [vmem:[%s13 + $0x7d0] sm:$0xff]
    %v2050 = vld [vmem:[%s13 + $0x7d8] sm:$0xff]
    %v2051 = vld [vmem:[%s13 + $0x7e0] sm:$0xff]
    %v2052 = vld [vmem:[%s13 + $0x7e8] sm:$0xff]
    %v2053 = vld [vmem:[%s13 + $0x7f0] sm:$0xff]
    %v2054 = vld [vmem:[%s13 + $0x7f8] sm:$0xff]
    %v2055 = vld [vmem:[%s13 + $0x800] sm:$0xff]
    %v2056 = vld [vmem:[%s13 + $0x808] sm:$0xff]
    %v2057 = vld [vmem:[%s13 + $0x810] sm:$0xff]
    %v2058 = vld [vmem:[%s13 + $0x818] sm:$0xff]
    %v2059 = vld [vmem:[%s13 + $0x820] sm:$0xff]
    %v2060 = vld [vmem:[%s13 + $0x828] sm:$0xff]
    %v2061 = vld [vmem:[%s13 + $0x830] sm:$0xff]
    %v2062 = vld [vmem:[%s13 + $0x838] sm:$0xff]
    %v2063 = vld [vmem:[%s13 + $0x840] sm:$0xff]
    %v2064 = vld [vmem:[%s13 + $0x848] sm:$0xff]
    %v2065 = vld [vmem:[%s13 + $0x850] sm:$0xff]
    %v2066 = vld [vmem:[%s13 + $0x858] sm:$0xff]
    %v2067 = vld [vmem:[%s13 + $0x860] sm:$0xff]
    %v2068 = vld [vmem:[%s13 + $0x868] sm:$0xff]
    %v2069 = vld [vmem:[%s13 + $0x870] sm:$0xff]
    %v2070 = vld [vmem:[%s13 + $0x878] sm:$0xff]
    %v2071 = vld [vmem:[%s13 + $0x880] sm:$0x33]
    %v2072 = vld [vmem:[%s13 + $0x888] sm:$0x33]
    %v2073 = vld [vmem:[%s14] sm:$0xf]
    %v2075 = vperm.slane %v2073, 0
    %v2076 = vperm.slane %v2073, 1
    %v2077 = vperm.slane %v2073, 2
    %v2078 = vperm.slane %v2073, 3
    %v2357 = vunpack.c.l.b16 %v1799
    %v2358 = vunpack.c.h.b16 %v1799
    %v2359 = vunpack.c.l.b16 %v1800
    %v2360 = vunpack.c.h.b16 %v1800
    %v2361 = vunpack.c.l.b16 %v1801
    %v2362 = vunpack.c.h.b16 %v1801
    %v2363 = vunpack.c.l.b16 %v1802
    %v2364 = vunpack.c.h.b16 %v1802
    %v2365 = vunpack.c.l.b16 %v1803
    %v2366 = vunpack.c.h.b16 %v1803
    %v2367 = vunpack.c.l.b16 %v1804
    %v2368 = vunpack.c.h.b16 %v1804
    %v2369 = vunpack.c.l.b16 %v1805
    %v2370 = vunpack.c.h.b16 %v1805
    %v2371 = vunpack.c.l.b16 %v1806
    %v2372 = vunpack.c.h.b16 %v1806
    %v2373 = vunpack.c.l.b16 %v1807
    %v2374 = vunpack.c.h.b16 %v1807
    %v2375 = vunpack.c.l.b16 %v1808
    %v2376 = vunpack.c.h.b16 %v1808
    %v2377 = vunpack.c.l.b16 %v1809
    %v2378 = vunpack.c.h.b16 %v1809
    %v2379 = vunpack.c.l.b16 %v1810
    %v2380 = vunpack.c.h.b16 %v1810
    %v2381 = vunpack.c.l.b16 %v1811
    %v2382 = vunpack.c.h.b16 %v1811
    %v2383 = vunpack.c.l.b16 %v1812
    %v2384 = vunpack.c.h.b16 %v1812
    %v2385 = vunpack.c.l.b16 %v1813
    %v2386 = vunpack.c.h.b16 %v1813
    %v2387 = vunpack.c.l.b16 %v1814
    %v2388 = vunpack.c.h.b16 %v1814
    %v2389 = vunpack.c.l.b16 %v1815
    %v2390 = vunpack.c.h.b16 %v1815
    %v2391 = vunpack.c.l.b16 %v1816
    %v2392 = vunpack.c.h.b16 %v1816
    %v2393 = vunpack.c.l.b16 %v1817
    %v2394 = vunpack.c.h.b16 %v1817
    %v2395 = vunpack.c.l.b16 %v1818
    %v2396 = vunpack.c.h.b16 %v1818
    %v2397 = vunpack.c.l.b16 %v1819
    %v2398 = vunpack.c.h.b16 %v1819
    %v2399 = vunpack.c.l.b16 %v1820
    %v2400 = vunpack.c.h.b16 %v1820
    %v2401 = vunpack.c.l.b16 %v1821
    %v2402 = vunpack.c.h.b16 %v1821
    %v2403 = vunpack.c.l.b16 %v1822
    %v2404 = vunpack.c.h.b16 %v1822
    %v2405 = vunpack.c.l.b16 %v1823
    %v2406 = vunpack.c.h.b16 %v1823
    %v2407 = vunpack.c.l.b16 %v1824
    %v2408 = vunpack.c.h.b16 %v1824
    %v2409 = vunpack.c.l.b16 %v1825
    %v2410 = vunpack.c.h.b16 %v1825
    %v2411 = vunpack.c.l.b16 %v1826
    %v2412 = vunpack.c.h.b16 %v1826
    %v2413 = vunpack.c.l.b16 %v1827
    %v2414 = vunpack.c.h.b16 %v1827
    %v2415 = vunpack.c.l.b16 %v1828
    %v2416 = vunpack.c.h.b16 %v1828
    %v2417 = vunpack.c.l.b16 %v1829
    %v2418 = vunpack.c.h.b16 %v1829
    %v2419 = vunpack.c.l.b16 %v1830
    %v2420 = vunpack.c.h.b16 %v1830
    %v2421 = vunpack.c.l.b16 %v1831
    %v2422 = vunpack.c.h.b16 %v1831
    %v2423 = vunpack.c.l.b16 %v1832
    %v2424 = vunpack.c.h.b16 %v1832
    %v2425 = vunpack.c.l.b16 %v1833
    %v2426 = vunpack.c.h.b16 %v1833
    %v2427 = vunpack.c.l.b16 %v1834
    %v2428 = vunpack.c.h.b16 %v1834
    %v2429 = vunpack.c.l.b16 %v1835
    %v2430 = vunpack.c.h.b16 %v1835
    %v2431 = vunpack.c.l.b16 %v1836
    %v2432 = vunpack.c.h.b16 %v1836
    %v2433 = vunpack.c.l.b16 %v1837
    %v2434 = vunpack.c.h.b16 %v1837
    %v2435 = vunpack.c.l.b16 %v1838
    %v2436 = vunpack.c.h.b16 %v1838
    %v2437 = vunpack.c.l.b16 %v1839
    %v2438 = vunpack.c.h.b16 %v1839
    %v2439 = vunpack.c.l.b16 %v1840
    %v2440 = vunpack.c.h.b16 %v1840
    %v2441 = vunpack.c.l.b16 %v1841
    %v2442 = vunpack.c.h.b16 %v1841
    %v2443 = vunpack.c.l.b16 %v1842
    %v2444 = vunpack.c.h.b16 %v1842
    %v2445 = vunpack.c.l.b16 %v1843
    %v2446 = vunpack.c.h.b16 %v1843
    %v2447 = vunpack.c.l.b16 %v1844
    %v2448 = vunpack.c.h.b16 %v1844
    %v2449 = vunpack.c.l.b16 %v1845
    %v2450 = vunpack.c.h.b16 %v1845
    %v2451 = vunpack.c.l.b16 %v1846
    %v2452 = vunpack.c.h.b16 %v1846
    %v2453 = vunpack.c.l.b16 %v1847
    %v2454 = vunpack.c.h.b16 %v1847
    %v2455 = vunpack.c.l.b16 %v1848
    %v2456 = vunpack.c.h.b16 %v1848
    %v2457 = vunpack.c.l.b16 %v1849
    %v2458 = vunpack.c.h.b16 %v1849
    %v2459 = vunpack.c.l.b16 %v1850
    %v2460 = vunpack.c.h.b16 %v1850
    %v2461 = vunpack.c.l.b16 %v1851
    %v2462 = vunpack.c.h.b16 %v1851
    %v2463 = vunpack.c.l.b16 %v1852
    %v2464 = vunpack.c.h.b16 %v1852
    %v2465 = vunpack.c.l.b16 %v1853
    %v2466 = vunpack.c.h.b16 %v1853
    %v2467 = vunpack.c.l.b16 %v1854
    %v2468 = vunpack.c.h.b16 %v1854
    %v2469 = vunpack.c.l.b16 %v1855
    %v2470 = vunpack.c.h.b16 %v1855
    %v2471 = vunpack.c.l.b16 %v1856
    %v2472 = vunpack.c.h.b16 %v1856
    %v2473 = vunpack.c.l.b16 %v1857
    %v2474 = vunpack.c.h.b16 %v1857
    %v2475 = vunpack.c.l.b16 %v1858
    %v2476 = vunpack.c.h.b16 %v1858
    %v2477 = vunpack.c.l.b16 %v1859
    %v2478 = vunpack.c.h.b16 %v1859
    %v2479 = vunpack.c.l.b16 %v1860
    %v2480 = vunpack.c.h.b16 %v1860
    %v2481 = vunpack.c.l.b16 %v1861
    %v2482 = vunpack.c.h.b16 %v1861
    %v2483 = vunpack.c.l.b16 %v1862
    %v2484 = vunpack.c.h.b16 %v1862
    %v2485 = vunpack.c.l.b16 %v1863
    %v2486 = vunpack.c.h.b16 %v1863
    %v2487 = vunpack.c.l.b16 %v1864
    %v2488 = vunpack.c.h.b16 %v1864
    %v2489 = vunpack.c.l.b16 %v1865
    %v2490 = vunpack.c.h.b16 %v1865
    %v2491 = vunpack.c.l.b16 %v1866
    %v2492 = vunpack.c.h.b16 %v1866
    %v2493 = vunpack.c.l.b16 %v1867
    %v2494 = vunpack.c.h.b16 %v1867
    %v2495 = vunpack.c.l.b16 %v1868
    %v2496 = vunpack.c.h.b16 %v1868
    %v2497 = vunpack.c.l.b16 %v1869
    %v2498 = vunpack.c.h.b16 %v1869
    %v2499 = vunpack.c.l.b16 %v1870
    %v2500 = vunpack.c.h.b16 %v1870
    %v2501 = vunpack.c.l.b16 %v1871
    %v2502 = vunpack.c.h.b16 %v1871
    %v2503 = vunpack.c.l.b16 %v1872
    %v2504 = vunpack.c.h.b16 %v1872
    %v2505 = vunpack.c.l.b16 %v1873
    %v2506 = vunpack.c.h.b16 %v1873
    %v2507 = vunpack.c.l.b16 %v1874
    %v2508 = vunpack.c.h.b16 %v1874
    %v2509 = vunpack.c.l.b16 %v1875
    %v2510 = vunpack.c.h.b16 %v1875
    %v2511 = vunpack.c.l.b16 %v1876
    %v2512 = vunpack.c.h.b16 %v1876
    %v2513 = vunpack.c.l.b16 %v1877
    %v2514 = vunpack.c.h.b16 %v1877
    %v2515 = vunpack.c.l.b16 %v1878
    %v2516 = vunpack.c.h.b16 %v1878
    %v2517 = vunpack.c.l.b16 %v1879
    %v2518 = vunpack.c.h.b16 %v1879
    %v2519 = vunpack.c.l.b16 %v1880
    %v2520 = vunpack.c.h.b16 %v1880
    %v2521 = vunpack.c.l.b16 %v1881
    %v2522 = vunpack.c.h.b16 %v1881
    %v2523 = vunpack.c.l.b16 %v1882
    %v2524 = vunpack.c.h.b16 %v1882
    %v2525 = vunpack.c.l.b16 %v1883
    %v2526 = vunpack.c.h.b16 %v1883
    %v2527 = vunpack.c.l.b16 %v1884
    %v2528 = vunpack.c.h.b16 %v1884
    %v2529 = vunpack.c.l.b16 %v1885
    %v2530 = vunpack.c.h.b16 %v1885
    %v2531 = vunpack.c.l.b16 %v1886
    %v2532 = vunpack.c.h.b16 %v1886
    %v2533 = vunpack.c.l.b16 %v1887
    %v2534 = vunpack.c.h.b16 %v1887
    %v2535 = vunpack.c.l.b16 %v1888
    %v2536 = vunpack.c.h.b16 %v1888
    %v2537 = vunpack.c.l.b16 %v1889
    %v2538 = vunpack.c.h.b16 %v1889
    %v2539 = vunpack.c.l.b16 %v1890
    %v2540 = vunpack.c.h.b16 %v1890
    %v2541 = vunpack.c.l.b16 %v1891
    %v2542 = vunpack.c.h.b16 %v1891
    %v2543 = vunpack.c.l.b16 %v1892
    %v2544 = vunpack.c.h.b16 %v1892
    %v2545 = vunpack.c.l.b16 %v1893
    %v2546 = vunpack.c.h.b16 %v1893
    %v2547 = vunpack.c.l.b16 %v1894
    %v2548 = vunpack.c.h.b16 %v1894
    %v2549 = vunpack.c.l.b16 %v1895
    %v2550 = vunpack.c.h.b16 %v1895
    %v2551 = vunpack.c.l.b16 %v1896
    %v2552 = vunpack.c.h.b16 %v1896
    %v2553 = vunpack.c.l.b16 %v1897
    %v2554 = vunpack.c.h.b16 %v1897
    %v2555 = vunpack.c.l.b16 %v1898
    %v2556 = vunpack.c.h.b16 %v1898
    %v2557 = vunpack.c.l.b16 %v1899
    %v2558 = vunpack.c.h.b16 %v1899
    %v2559 = vunpack.c.l.b16 %v1900
    %v2560 = vunpack.c.h.b16 %v1900
    %v2561 = vunpack.c.l.b16 %v1901
    %v2562 = vunpack.c.h.b16 %v1901
    %v2563 = vunpack.c.l.b16 %v1902
    %v2564 = vunpack.c.h.b16 %v1902
    %v2565 = vunpack.c.l.b16 %v1903
    %v2566 = vunpack.c.h.b16 %v1903
    %v2567 = vunpack.c.l.b16 %v1904
    %v2568 = vunpack.c.h.b16 %v1904
    %v2569 = vunpack.c.l.b16 %v1905
    %v2570 = vunpack.c.h.b16 %v1905
    %v2571 = vunpack.c.l.b16 %v1906
    %v2572 = vunpack.c.h.b16 %v1906
    %v2573 = vunpack.c.l.b16 %v1907
    %v2574 = vunpack.c.h.b16 %v1907
    %v2575 = vunpack.c.l.b16 %v1908
    %v2576 = vunpack.c.h.b16 %v1908
    %v2577 = vunpack.c.l.b16 %v1909
    %v2578 = vunpack.c.h.b16 %v1909
    %v2579 = vunpack.c.l.b16 %v1910
    %v2580 = vunpack.c.h.b16 %v1910
    %v2581 = vunpack.c.l.b16 %v1911
    %v2582 = vunpack.c.h.b16 %v1911
    %v2583 = vunpack.c.l.b16 %v1912
    %v2584 = vunpack.c.h.b16 %v1912
    %v2585 = vunpack.c.l.b16 %v1913
    %v2586 = vunpack.c.h.b16 %v1913
    %v2587 = vunpack.c.l.b16 %v1914
    %v2588 = vunpack.c.h.b16 %v1914
    %v2589 = vunpack.c.l.b16 %v1915
    %v2590 = vunpack.c.h.b16 %v1915
    %v2591 = vunpack.c.l.b16 %v1916
    %v2592 = vunpack.c.h.b16 %v1916
    %v2593 = vunpack.c.l.b16 %v1917
    %v2594 = vunpack.c.h.b16 %v1917
    %v2595 = vunpack.c.l.b16 %v1918
    %v2596 = vunpack.c.h.b16 %v1918
    %v2597 = vunpack.c.l.b16 %v1919
    %v2598 = vunpack.c.h.b16 %v1919
    %v2599 = vunpack.c.l.b16 %v1920
    %v2600 = vunpack.c.h.b16 %v1920
    %v2601 = vunpack.c.l.b16 %v1921
    %v2602 = vunpack.c.h.b16 %v1921
    %v2603 = vunpack.c.l.b16 %v1922
    %v2604 = vunpack.c.h.b16 %v1922
    %v2605 = vunpack.c.l.b16 %v1923
    %v2606 = vunpack.c.h.b16 %v1923
    %v2607 = vunpack.c.l.b16 %v1924
    %v2608 = vunpack.c.h.b16 %v1924
    %v2609 = vunpack.c.l.b16 %v1925
    %v2610 = vunpack.c.h.b16 %v1925
    %v2611 = vunpack.c.l.b16 %v1926
    %v2612 = vunpack.c.h.b16 %v1926
    %v2613 = vunpack.c.l.b16 %v1927
    %v2614 = vunpack.c.h.b16 %v1927
    %v2615 = vunpack.c.l.b16 %v1928
    %v2616 = vunpack.c.h.b16 %v1928
    %v2617 = vunpack.c.l.b16 %v1929
    %v2618 = vunpack.c.h.b16 %v1929
    %v2619 = vunpack.c.l.b16 %v1930
    %v2620 = vunpack.c.h.b16 %v1930
    %v2621 = vunpack.c.l.b16 %v1931
    %v2622 = vunpack.c.h.b16 %v1931
    %v2623 = vunpack.c.l.b16 %v1932
    %v2624 = vunpack.c.h.b16 %v1932
    %v2625 = vunpack.c.l.b16 %v1933
    %v2626 = vunpack.c.h.b16 %v1933
    %v2627 = vunpack.c.l.b16 %v1934
    %v2628 = vunpack.c.h.b16 %v1934
    %v2629 = vunpack.c.l.b16 %v1935
    %v2630 = vunpack.c.h.b16 %v1935
    %v2631 = vunpack.c.l.b16 %v1936
    %v2632 = vunpack.c.h.b16 %v1936
    %v2633 = vunpack.c.l.b16 %v1937
    %v2634 = vunpack.c.h.b16 %v1937
    %v2635 = vunpack.c.l.b16 %v1938
    %v2636 = vunpack.c.h.b16 %v1938
    %v2637 = vunpack.c.l.b16 %v1939
    %v2638 = vunpack.c.h.b16 %v1939
    %v2639 = vunpack.c.l.b16 %v1940
    %v2640 = vunpack.c.h.b16 %v1940
    %v2641 = vunpack.c.l.b16 %v1941
    %v2642 = vunpack.c.h.b16 %v1941
    %v2643 = vunpack.c.l.b16 %v1942
    %v2644 = vunpack.c.h.b16 %v1942
    %v2645 = vunpack.c.l.b16 %v1943
    %v2646 = vunpack.c.h.b16 %v1943
    %v2647 = vunpack.c.l.b16 %v1944
    %v2648 = vunpack.c.h.b16 %v1944
    %v2649 = vunpack.c.l.b16 %v1945
    %v2650 = vunpack.c.h.b16 %v1945
    %v2651 = vunpack.c.l.b16 %v1946
    %v2652 = vunpack.c.h.b16 %v1946
    %v2653 = vunpack.c.l.b16 %v1947
    %v2654 = vunpack.c.h.b16 %v1947
    %v2655 = vunpack.c.l.b16 %v1948
    %v2656 = vunpack.c.h.b16 %v1948
    %v2657 = vunpack.c.l.b16 %v1949
    %v2658 = vunpack.c.h.b16 %v1949
    %v2659 = vunpack.c.l.b16 %v1950
    %v2660 = vunpack.c.h.b16 %v1950
    %v2661 = vunpack.c.l.b16 %v1951
    %v2662 = vunpack.c.h.b16 %v1951
    %v2663 = vunpack.c.l.b16 %v1952
    %v2664 = vunpack.c.h.b16 %v1952
    %v2665 = vunpack.c.l.b16 %v1953
    %v2666 = vunpack.c.h.b16 %v1953
    %v2667 = vunpack.c.l.b16 %v1954
    %v2668 = vunpack.c.h.b16 %v1954
    %v2669 = vunpack.c.l.b16 %v1955
    %v2670 = vunpack.c.h.b16 %v1955
    %v2671 = vunpack.c.l.b16 %v1956
    %v2672 = vunpack.c.h.b16 %v1956
    %v2673 = vunpack.c.l.b16 %v1957
    %v2674 = vunpack.c.h.b16 %v1957
    %v2675 = vunpack.c.l.b16 %v1958
    %v2676 = vunpack.c.h.b16 %v1958
    %v2677 = vunpack.c.l.b16 %v1959
    %v2678 = vunpack.c.h.b16 %v1959
    %v2679 = vunpack.c.l.b16 %v1960
    %v2680 = vunpack.c.h.b16 %v1960
    %v2681 = vunpack.c.l.b16 %v1961
    %v2682 = vunpack.c.h.b16 %v1961
    %v2683 = vunpack.c.l.b16 %v1962
    %v2684 = vunpack.c.h.b16 %v1962
    %v2685 = vunpack.c.l.b16 %v1963
    %v2686 = vunpack.c.h.b16 %v1963
    %v2687 = vunpack.c.l.b16 %v1964
    %v2688 = vunpack.c.h.b16 %v1964
    %v2689 = vunpack.c.l.b16 %v1965
    %v2690 = vunpack.c.h.b16 %v1965
    %v2691 = vunpack.c.l.b16 %v1966
    %v2692 = vunpack.c.h.b16 %v1966
    %v2693 = vunpack.c.l.b16 %v1967
    %v2694 = vunpack.c.h.b16 %v1967
    %v2695 = vunpack.c.l.b16 %v1968
    %v2696 = vunpack.c.h.b16 %v1968
    %v2697 = vunpack.c.l.b16 %v1969
    %v2698 = vunpack.c.h.b16 %v1969
    %v2699 = vunpack.c.l.b16 %v1970
    %v2700 = vunpack.c.h.b16 %v1970
    %v2701 = vunpack.c.l.b16 %v1971
    %v2702 = vunpack.c.h.b16 %v1971
    %v2703 = vunpack.c.l.b16 %v1972
    %v2704 = vunpack.c.h.b16 %v1972
    %v2705 = vunpack.c.l.b16 %v1973
    %v2706 = vunpack.c.h.b16 %v1973
    %v2707 = vunpack.c.l.b16 %v1974
    %v2708 = vunpack.c.h.b16 %v1974
    %v2709 = vunpack.c.l.b16 %v1975
    %v2710 = vunpack.c.h.b16 %v1975
    %v2711 = vunpack.c.l.b16 %v1976
    %v2712 = vunpack.c.h.b16 %v1976
    %v2713 = vunpack.c.l.b16 %v1977
    %v2714 = vunpack.c.h.b16 %v1977
    %v2715 = vunpack.c.l.b16 %v1978
    %v2716 = vunpack.c.h.b16 %v1978
    %v2717 = vunpack.c.l.b16 %v1979
    %v2718 = vunpack.c.h.b16 %v1979
    %v2719 = vunpack.c.l.b16 %v1980
    %v2720 = vunpack.c.h.b16 %v1980
    %v2721 = vunpack.c.l.b16 %v1981
    %v2722 = vunpack.c.h.b16 %v1981
    %v2723 = vunpack.c.l.b16 %v1982
    %v2724 = vunpack.c.h.b16 %v1982
    %v2725 = vunpack.c.l.b16 %v1983
    %v2726 = vunpack.c.h.b16 %v1983
    %v2727 = vunpack.c.l.b16 %v1984
    %v2728 = vunpack.c.h.b16 %v1984
    %v2729 = vunpack.c.l.b16 %v1985
    %v2730 = vunpack.c.h.b16 %v1985
    %v2731 = vunpack.c.l.b16 %v1986
    %v2732 = vunpack.c.h.b16 %v1986
    %v2733 = vunpack.c.l.b16 %v1987
    %v2734 = vunpack.c.h.b16 %v1987
    %v2735 = vunpack.c.l.b16 %v1988
    %v2736 = vunpack.c.h.b16 %v1988
    %v2737 = vunpack.c.l.b16 %v1989
    %v2738 = vunpack.c.h.b16 %v1989
    %v2739 = vunpack.c.l.b16 %v1990
    %v2740 = vunpack.c.h.b16 %v1990
    %v2741 = vunpack.c.l.b16 %v1991
    %v2742 = vunpack.c.h.b16 %v1991
    %v2743 = vunpack.c.l.b16 %v1992
    %v2744 = vunpack.c.h.b16 %v1992
    %v2745 = vunpack.c.l.b16 %v1993
    %v2746 = vunpack.c.h.b16 %v1993
    %v2747 = vunpack.c.l.b16 %v1994
    %v2748 = vunpack.c.h.b16 %v1994
    %v2749 = vunpack.c.l.b16 %v1995
    %v2750 = vunpack.c.h.b16 %v1995
    %v2751 = vunpack.c.l.b16 %v1996
    %v2752 = vunpack.c.h.b16 %v1996
    %v2753 = vunpack.c.l.b16 %v1997
    %v2754 = vunpack.c.h.b16 %v1997
    %v2755 = vunpack.c.l.b16 %v1998
    %v2756 = vunpack.c.h.b16 %v1998
    %v2757 = vunpack.c.l.b16 %v1999
    %v2758 = vunpack.c.h.b16 %v1999
    %v2759 = vunpack.c.l.b16 %v2000
    %v2760 = vunpack.c.h.b16 %v2000
    %v2761 = vunpack.c.l.b16 %v2001
    %v2762 = vunpack.c.h.b16 %v2001
    %v2763 = vunpack.c.l.b16 %v2002
    %v2764 = vunpack.c.h.b16 %v2002
    %v2765 = vunpack.c.l.b16 %v2003
    %v2766 = vunpack.c.h.b16 %v2003
    %v2767 = vunpack.c.l.b16 %v2004
    %v2768 = vunpack.c.h.b16 %v2004
    %v2769 = vunpack.c.l.b16 %v2005
    %v2770 = vunpack.c.h.b16 %v2005
    %v2771 = vunpack.c.l.b16 %v2006
    %v2772 = vunpack.c.h.b16 %v2006
    %v2773 = vunpack.c.l.b16 %v2007
    %v2774 = vunpack.c.h.b16 %v2007
    %v2775 = vunpack.c.l.b16 %v2008
    %v2776 = vunpack.c.h.b16 %v2008
    %v2777 = vunpack.c.l.b16 %v2009
    %v2778 = vunpack.c.h.b16 %v2009
    %v2779 = vunpack.c.l.b16 %v2010
    %v2780 = vunpack.c.h.b16 %v2010
    %v2781 = vunpack.c.l.b16 %v2011
    %v2782 = vunpack.c.h.b16 %v2011
    %v2783 = vunpack.c.l.b16 %v2012
    %v2784 = vunpack.c.h.b16 %v2012
    %v2785 = vunpack.c.l.b16 %v2013
    %v2786 = vunpack.c.h.b16 %v2013
    %v2787 = vunpack.c.l.b16 %v2014
    %v2788 = vunpack.c.h.b16 %v2014
    %v2789 = vunpack.c.l.b16 %v2015
    %v2790 = vunpack.c.h.b16 %v2015
    %v2791 = vunpack.c.l.b16 %v2016
    %v2792 = vunpack.c.h.b16 %v2016
    %v2793 = vunpack.c.l.b16 %v2017
    %v2794 = vunpack.c.h.b16 %v2017
    %v2795 = vunpack.c.l.b16 %v2018
    %v2796 = vunpack.c.h.b16 %v2018
    %v2797 = vunpack.c.l.b16 %v2019
    %v2798 = vunpack.c.h.b16 %v2019
    %v2799 = vunpack.c.l.b16 %v2020
    %v2800 = vunpack.c.h.b16 %v2020
    %v2801 = vunpack.c.l.b16 %v2021
    %v2802 = vunpack.c.h.b16 %v2021
    %v2803 = vunpack.c.l.b16 %v2022
    %v2804 = vunpack.c.h.b16 %v2022
    %v2805 = vunpack.c.l.b16 %v2023
    %v2806 = vunpack.c.h.b16 %v2023
    %v2807 = vunpack.c.l.b16 %v2024
    %v2808 = vunpack.c.h.b16 %v2024
    %v2809 = vunpack.c.l.b16 %v2025
    %v2810 = vunpack.c.h.b16 %v2025
    %v2811 = vunpack.c.l.b16 %v2026
    %v2812 = vunpack.c.h.b16 %v2026
    %v2813 = vunpack.c.l.b16 %v2027
    %v2814 = vunpack.c.h.b16 %v2027
    %v2815 = vunpack.c.l.b16 %v2028
    %v2816 = vunpack.c.h.b16 %v2028
    %v2817 = vunpack.c.l.b16 %v2029
    %v2818 = vunpack.c.h.b16 %v2029
    %v2819 = vunpack.c.l.b16 %v2030
    %v2820 = vunpack.c.h.b16 %v2030
    %v2821 = vunpack.c.l.b16 %v2031
    %v2822 = vunpack.c.h.b16 %v2031
    %v2823 = vunpack.c.l.b16 %v2032
    %v2824 = vunpack.c.h.b16 %v2032
    %v2825 = vunpack.c.l.b16 %v2033
    %v2826 = vunpack.c.h.b16 %v2033
    %v2827 = vunpack.c.l.b16 %v2034
    %v2828 = vunpack.c.h.b16 %v2034
    %v2829 = vunpack.c.l.b16 %v2035
    %v2830 = vunpack.c.h.b16 %v2035
    %v2831 = vunpack.c.l.b16 %v2036
    %v2832 = vunpack.c.h.b16 %v2036
    %v2833 = vunpack.c.l.b16 %v2037
    %v2834 = vunpack.c.h.b16 %v2037
    %v2835 = vunpack.c.l.b16 %v2038
    %v2836 = vunpack.c.h.b16 %v2038
    %v2837 = vunpack.c.l.b16 %v2039
    %v2838 = vunpack.c.h.b16 %v2039
    %v2839 = vunpack.c.l.b16 %v2040
    %v2840 = vunpack.c.h.b16 %v2040
    %v2841 = vunpack.c.l.b16 %v2041
    %v2842 = vunpack.c.h.b16 %v2041
    %v2843 = vunpack.c.l.b16 %v2042
    %v2844 = vunpack.c.h.b16 %v2042
    %v2845 = vunpack.c.l.b16 %v2043
    %v2846 = vunpack.c.h.b16 %v2043
    %v2847 = vunpack.c.l.b16 %v2044
    %v2848 = vunpack.c.h.b16 %v2044
    %v2849 = vunpack.c.l.b16 %v2045
    %v2850 = vunpack.c.h.b16 %v2045
    %v2851 = vunpack.c.l.b16 %v2046
    %v2852 = vunpack.c.h.b16 %v2046
    %v2853 = vunpack.c.l.b16 %v2047
    %v2854 = vunpack.c.h.b16 %v2047
    %v2855 = vunpack.c.l.b16 %v2048
    %v2856 = vunpack.c.h.b16 %v2048
    %v2857 = vunpack.c.l.b16 %v2049
    %v2858 = vunpack.c.h.b16 %v2049
    %v2859 = vunpack.c.l.b16 %v2050
    %v2860 = vunpack.c.h.b16 %v2050
    %v2861 = vunpack.c.l.b16 %v2051
    %v2862 = vunpack.c.h.b16 %v2051
    %v2863 = vunpack.c.l.b16 %v2052
    %v2864 = vunpack.c.h.b16 %v2052
    %v2865 = vunpack.c.l.b16 %v2053
    %v2866 = vunpack.c.h.b16 %v2053
    %v2867 = vunpack.c.l.b16 %v2054
    %v2868 = vunpack.c.h.b16 %v2054
    %v2869 = vunpack.c.l.b16 %v2055
    %v2870 = vunpack.c.h.b16 %v2055
    %v2871 = vunpack.c.l.b16 %v2056
    %v2872 = vunpack.c.h.b16 %v2056
    %v2873 = vunpack.c.l.b16 %v2057
    %v2874 = vunpack.c.h.b16 %v2057
    %v2875 = vunpack.c.l.b16 %v2058
    %v2876 = vunpack.c.h.b16 %v2058
    %v2877 = vunpack.c.l.b16 %v2059
    %v2878 = vunpack.c.h.b16 %v2059
    %v2879 = vunpack.c.l.b16 %v2060
    %v2880 = vunpack.c.h.b16 %v2060
    %v2881 = vunpack.c.l.b16 %v2061
    %v2882 = vunpack.c.h.b16 %v2061
    %v2883 = vunpack.c.l.b16 %v2062
    %v2884 = vunpack.c.h.b16 %v2062
    %v2885 = vunpack.c.l.b16 %v2063
    %v2886 = vunpack.c.h.b16 %v2063
    %v2887 = vunpack.c.l.b16 %v2064
    %v2888 = vunpack.c.h.b16 %v2064
    %v2889 = vunpack.c.l.b16 %v2065
    %v2890 = vunpack.c.h.b16 %v2065
    %v2891 = vunpack.c.l.b16 %v2066
    %v2892 = vunpack.c.h.b16 %v2066
    %v2893 = vunpack.c.l.b16 %v2067
    %v2894 = vunpack.c.h.b16 %v2067
    %v2895 = vunpack.c.l.b16 %v2068
    %v2896 = vunpack.c.h.b16 %v2068
    %v2897 = vunpack.c.l.b16 %v2069
    %v2898 = vunpack.c.h.b16 %v2069
    %v2899 = vunpack.c.l.b16 %v2070
    %v2900 = vunpack.c.h.b16 %v2070
    %v2901 = vunpack.c.l.b16 %v2071
    %v2902 = vunpack.c.h.b16 %v2071
    %v2903 = vunpack.c.l.b16 %v2072
    %v2904 = vunpack.c.h.b16 %v2072
    %v2905 = vpack.c.b16 %v2361, %v2357
    %v2906 = vpack.c.b16 %v2362, %v2358
    %v2907 = vpack.c.b16 %v2363, %v2359
    %v2908 = vpack.c.b16 %v2364, %v2360
    %v2909 = vpack.c.b16 %v2369, %v2365
    %v2910 = vpack.c.b16 %v2370, %v2366
    %v2911 = vpack.c.b16 %v2371, %v2367
    %v2912 = vpack.c.b16 %v2372, %v2368
    %v2913 = vpack.c.b16 %v2377, %v2373
    %v2914 = vpack.c.b16 %v2378, %v2374
    %v2915 = vpack.c.b16 %v2379, %v2375
    %v2916 = vpack.c.b16 %v2380, %v2376
    %v2917 = vpack.c.b16 %v2385, %v2381
    %v2918 = vpack.c.b16 %v2386, %v2382
    %v2919 = vpack.c.b16 %v2387, %v2383
    %v2920 = vpack.c.b16 %v2388, %v2384
    %v2921 = vpack.c.b16 %v2393, %v2389
    %v2922 = vpack.c.b16 %v2394, %v2390
    %v2923 = vpack.c.b16 %v2395, %v2391
    %v2924 = vpack.c.b16 %v2396, %v2392
    %v2925 = vpack.c.b16 %v2401, %v2397
    %v2926 = vpack.c.b16 %v2402, %v2398
    %v2927 = vpack.c.b16 %v2403, %v2399
    %v2928 = vpack.c.b16 %v2404, %v2400
    %v2929 = vpack.c.b16 %v2409, %v2405
    %v2930 = vpack.c.b16 %v2410, %v2406
    %v2931 = vpack.c.b16 %v2411, %v2407
    %v2932 = vpack.c.b16 %v2412, %v2408
    %v2933 = vpack.c.b16 %v2417, %v2413
    %v2934 = vpack.c.b16 %v2418, %v2414
    %v2935 = vpack.c.b16 %v2419, %v2415
    %v2936 = vpack.c.b16 %v2420, %v2416
    %v2937 = vpack.c.b16 %v2425, %v2421
    %v2938 = vpack.c.b16 %v2426, %v2422
    %v2939 = vpack.c.b16 %v2427, %v2423
    %v2940 = vpack.c.b16 %v2428, %v2424
    %v2941 = vpack.c.b16 %v2433, %v2429
    %v2942 = vpack.c.b16 %v2434, %v2430
    %v2943 = vpack.c.b16 %v2435, %v2431
    %v2944 = vpack.c.b16 %v2436, %v2432
    %v2945 = vpack.c.b16 %v2441, %v2437
    %v2946 = vpack.c.b16 %v2442, %v2438
    %v2947 = vpack.c.b16 %v2443, %v2439
    %v2948 = vpack.c.b16 %v2444, %v2440
    %v2949 = vpack.c.b16 %v2449, %v2445
    %v2950 = vpack.c.b16 %v2450, %v2446
    %v2951 = vpack.c.b16 %v2451, %v2447
    %v2952 = vpack.c.b16 %v2452, %v2448
    %v2953 = vpack.c.b16 %v2457, %v2453
    %v2954 = vpack.c.b16 %v2458, %v2454
    %v2955 = vpack.c.b16 %v2459, %v2455
    %v2956 = vpack.c.b16 %v2460, %v2456
    %v2957 = vpack.c.b16 %v2465, %v2461
    %v2958 = vpack.c.b16 %v2466, %v2462
    %v2959 = vpack.c.b16 %v2467, %v2463
    %v2960 = vpack.c.b16 %v2468, %v2464
    %v2961 = vpack.c.b16 %v2473, %v2469
    %v2962 = vpack.c.b16 %v2474, %v2470
    %v2963 = vpack.c.b16 %v2475, %v2471
    %v2964 = vpack.c.b16 %v2476, %v2472
    %v2965 = vpack.c.b16 %v2481, %v2477
    %v2966 = vpack.c.b16 %v2482, %v2478
    %v2967 = vpack.c.b16 %v2483, %v2479
    %v2968 = vpack.c.b16 %v2484, %v2480
    %v2969 = vpack.c.b16 %v2489, %v2485
    %v2970 = vpack.c.b16 %v2490, %v2486
    %v2971 = vpack.c.b16 %v2491, %v2487
    %v2972 = vpack.c.b16 %v2492, %v2488
    %v2973 = vpack.c.b16 %v2497, %v2493
    %v2974 = vpack.c.b16 %v2498, %v2494
    %v2975 = vpack.c.b16 %v2499, %v2495
    %v2976 = vpack.c.b16 %v2500, %v2496
    %v2977 = vpack.c.b16 %v2505, %v2501
    %v2978 = vpack.c.b16 %v2506, %v2502
    %v2979 = vpack.c.b16 %v2507, %v2503
    %v2980 = vpack.c.b16 %v2508, %v2504
    %v2981 = vpack.c.b16 %v2513, %v2509
    %v2982 = vpack.c.b16 %v2514, %v2510
    %v2983 = vpack.c.b16 %v2515, %v2511
    %v2984 = vpack.c.b16 %v2516, %v2512
    %v2985 = vpack.c.b16 %v2521, %v2517
    %v2986 = vpack.c.b16 %v2522, %v2518
    %v2987 = vpack.c.b16 %v2523, %v2519
    %v2988 = vpack.c.b16 %v2524, %v2520
    %v2989 = vpack.c.b16 %v2529, %v2525
    %v2990 = vpack.c.b16 %v2530, %v2526
    %v2991 = vpack.c.b16 %v2531, %v2527
    %v2992 = vpack.c.b16 %v2532, %v2528
    %v2993 = vpack.c.b16 %v2537, %v2533
    %v2994 = vpack.c.b16 %v2538, %v2534
    %v2995 = vpack.c.b16 %v2539, %v2535
    %v2996 = vpack.c.b16 %v2540, %v2536
    %v2997 = vpack.c.b16 %v2545, %v2541
    %v2998 = vpack.c.b16 %v2546, %v2542
    %v2999 = vpack.c.b16 %v2547, %v2543
    %v3000 = vpack.c.b16 %v2548, %v2544
    %v3001 = vpack.c.b16 %v2553, %v2549
    %v3002 = vpack.c.b16 %v2554, %v2550
    %v3003 = vpack.c.b16 %v2555, %v2551
    %v3004 = vpack.c.b16 %v2556, %v2552
    %v3005 = vpack.c.b16 %v2561, %v2557
    %v3006 = vpack.c.b16 %v2562, %v2558
    %v3007 = vpack.c.b16 %v2563, %v2559
    %v3008 = vpack.c.b16 %v2564, %v2560
    %v3009 = vpack.c.b16 %v2569, %v2565
    %v3010 = vpack.c.b16 %v2570, %v2566
    %v3011 = vpack.c.b16 %v2571, %v2567
    %v3012 = vpack.c.b16 %v2572, %v2568
    %v3013 = vpack.c.b16 %v2577, %v2573
    %v3014 = vpack.c.b16 %v2578, %v2574
    %v3015 = vpack.c.b16 %v2579, %v2575
    %v3016 = vpack.c.b16 %v2580, %v2576
    %v3017 = vpack.c.b16 %v2585, %v2581
    %v3018 = vpack.c.b16 %v2586, %v2582
    %v3019 = vpack.c.b16 %v2587, %v2583
    %v3020 = vpack.c.b16 %v2588, %v2584
    %v3021 = vpack.c.b16 %v2593, %v2589
    %v3022 = vpack.c.b16 %v2594, %v2590
    %v3023 = vpack.c.b16 %v2595, %v2591
    %v3024 = vpack.c.b16 %v2596, %v2592
    %v3025 = vpack.c.b16 %v2601, %v2597
    %v3026 = vpack.c.b16 %v2602, %v2598
    %v3027 = vpack.c.b16 %v2603, %v2599
    %v3028 = vpack.c.b16 %v2604, %v2600
    %v3029 = vpack.c.b16 %v2609, %v2605
    %v3030 = vpack.c.b16 %v2610, %v2606
    %v3031 = vpack.c.b16 %v2611, %v2607
    %v3032 = vpack.c.b16 %v2612, %v2608
    %v3033 = vpack.c.b16 %v2617, %v2613
    %v3034 = vpack.c.b16 %v2618, %v2614
    %v3035 = vpack.c.b16 %v2619, %v2615
    %v3036 = vpack.c.b16 %v2620, %v2616
    %v3037 = vpack.c.b16 %v2625, %v2621
    %v3038 = vpack.c.b16 %v2626, %v2622
    %v3039 = vpack.c.b16 %v2627, %v2623
    %v3040 = vpack.c.b16 %v2628, %v2624
    %v3041 = vpack.c.b16 %v2633, %v2629
    %v3042 = vpack.c.b16 %v2634, %v2630
    %v3043 = vpack.c.b16 %v2635, %v2631
    %v3044 = vpack.c.b16 %v2636, %v2632
    %v3045 = vpack.c.b16 %v2641, %v2637
    %v3046 = vpack.c.b16 %v2642, %v2638
    %v3047 = vpack.c.b16 %v2643, %v2639
    %v3048 = vpack.c.b16 %v2644, %v2640
    %v3049 = vpack.c.b16 %v2649, %v2645
    %v3050 = vpack.c.b16 %v2650, %v2646
    %v3051 = vpack.c.b16 %v2651, %v2647
    %v3052 = vpack.c.b16 %v2652, %v2648
    %v3053 = vpack.c.b16 %v2657, %v2653
    %v3054 = vpack.c.b16 %v2658, %v2654
    %v3055 = vpack.c.b16 %v2659, %v2655
    %v3056 = vpack.c.b16 %v2660, %v2656
    %v3057 = vpack.c.b16 %v2665, %v2661
    %v3058 = vpack.c.b16 %v2666, %v2662
    %v3059 = vpack.c.b16 %v2667, %v2663
    %v3060 = vpack.c.b16 %v2668, %v2664
    %v3061 = vpack.c.b16 %v2673, %v2669
    %v3062 = vpack.c.b16 %v2674, %v2670
    %v3063 = vpack.c.b16 %v2675, %v2671
    %v3064 = vpack.c.b16 %v2676, %v2672
    %v3065 = vpack.c.b16 %v2681, %v2677
    %v3066 = vpack.c.b16 %v2682, %v2678
    %v3067 = vpack.c.b16 %v2683, %v2679
    %v3068 = vpack.c.b16 %v2684, %v2680
    %v3069 = vpack.c.b16 %v2689, %v2685
    %v3070 = vpack.c.b16 %v2690, %v2686
    %v3071 = vpack.c.b16 %v2691, %v2687
    %v3072 = vpack.c.b16 %v2692, %v2688
    %v3073 = vpack.c.b16 %v2697, %v2693
    %v3074 = vpack.c.b16 %v2698, %v2694
    %v3075 = vpack.c.b16 %v2699, %v2695
    %v3076 = vpack.c.b16 %v2700, %v2696
    %v3077 = vpack.c.b16 %v2705, %v2701
    %v3078 = vpack.c.b16 %v2706, %v2702
    %v3079 = vpack.c.b16 %v2707, %v2703
    %v3080 = vpack.c.b16 %v2708, %v2704
    %v3081 = vpack.c.b16 %v2713, %v2709
    %v3082 = vpack.c.b16 %v2714, %v2710
    %v3083 = vpack.c.b16 %v2715, %v2711
    %v3084 = vpack.c.b16 %v2716, %v2712
    %v3085 = vpack.c.b16 %v2721, %v2717
    %v3086 = vpack.c.b16 %v2722, %v2718
    %v3087 = vpack.c.b16 %v2723, %v2719
    %v3088 = vpack.c.b16 %v2724, %v2720
    %v3089 = vpack.c.b16 %v2729, %v2725
    %v3090 = vpack.c.b16 %v2730, %v2726
    %v3091 = vpack.c.b16 %v2731, %v2727
    %v3092 = vpack.c.b16 %v2732, %v2728
    %v3093 = vpack.c.b16 %v2737, %v2733
    %v3094 = vpack.c.b16 %v2738, %v2734
    %v3095 = vpack.c.b16 %v2739, %v2735
    %v3096 = vpack.c.b16 %v2740, %v2736
    %v3097 = vpack.c.b16 %v2745, %v2741
    %v3098 = vpack.c.b16 %v2746, %v2742
    %v3099 = vpack.c.b16 %v2747, %v2743
    %v3100 = vpack.c.b16 %v2748, %v2744
    %v3101 = vpack.c.b16 %v2753, %v2749
    %v3102 = vpack.c.b16 %v2754, %v2750
    %v3103 = vpack.c.b16 %v2755, %v2751
    %v3104 = vpack.c.b16 %v2756, %v2752
    %v3105 = vpack.c.b16 %v2761, %v2757
    %v3106 = vpack.c.b16 %v2762, %v2758
    %v3107 = vpack.c.b16 %v2763, %v2759
    %v3108 = vpack.c.b16 %v2764, %v2760
    %v3109 = vpack.c.b16 %v2769, %v2765
    %v3110 = vpack.c.b16 %v2770, %v2766
    %v3111 = vpack.c.b16 %v2771, %v2767
    %v3112 = vpack.c.b16 %v2772, %v2768
    %v3113 = vpack.c.b16 %v2777, %v2773
    %v3114 = vpack.c.b16 %v2778, %v2774
    %v3115 = vpack.c.b16 %v2779, %v2775
    %v3116 = vpack.c.b16 %v2780, %v2776
    %v3117 = vpack.c.b16 %v2785, %v2781
    %v3118 = vpack.c.b16 %v2786, %v2782
    %v3119 = vpack.c.b16 %v2787, %v2783
    %v3120 = vpack.c.b16 %v2788, %v2784
    %v3121 = vpack.c.b16 %v2793, %v2789
    %v3122 = vpack.c.b16 %v2794, %v2790
    %v3123 = vpack.c.b16 %v2795, %v2791
    %v3124 = vpack.c.b16 %v2796, %v2792
    %v3125 = vpack.c.b16 %v2801, %v2797
    %v3126 = vpack.c.b16 %v2802, %v2798
    %v3127 = vpack.c.b16 %v2803, %v2799
    %v3128 = vpack.c.b16 %v2804, %v2800
    %v3129 = vpack.c.b16 %v2809, %v2805
    %v3130 = vpack.c.b16 %v2810, %v2806
    %v3131 = vpack.c.b16 %v2811, %v2807
    %v3132 = vpack.c.b16 %v2812, %v2808
    %v3133 = vpack.c.b16 %v2817, %v2813
    %v3134 = vpack.c.b16 %v2818, %v2814
    %v3135 = vpack.c.b16 %v2819, %v2815
    %v3136 = vpack.c.b16 %v2820, %v2816
    %v3137 = vpack.c.b16 %v2825, %v2821
    %v3138 = vpack.c.b16 %v2826, %v2822
    %v3139 = vpack.c.b16 %v2827, %v2823
    %v3140 = vpack.c.b16 %v2828, %v2824
    %v3141 = vpack.c.b16 %v2833, %v2829
    %v3142 = vpack.c.b16 %v2834, %v2830
    %v3143 = vpack.c.b16 %v2835, %v2831
    %v3144 = vpack.c.b16 %v2836, %v2832
    %v3145 = vpack.c.b16 %v2841, %v2837
    %v3146 = vpack.c.b16 %v2842, %v2838
    %v3147 = vpack.c.b16 %v2843, %v2839
    %v3148 = vpack.c.b16 %v2844, %v2840
    %v3149 = vpack.c.b16 %v2849, %v2845
    %v3150 = vpack.c.b16 %v2850, %v2846
    %v3151 = vpack.c.b16 %v2851, %v2847
    %v3152 = vpack.c.b16 %v2852, %v2848
    %v3153 = vpack.c.b16 %v2857, %v2853
    %v3154 = vpack.c.b16 %v2858, %v2854
    %v3155 = vpack.c.b16 %v2859, %v2855
    %v3156 = vpack.c.b16 %v2860, %v2856
    %v3157 = vpack.c.b16 %v2865, %v2861
    %v3158 = vpack.c.b16 %v2866, %v2862
    %v3159 = vpack.c.b16 %v2867, %v2863
    %v3160 = vpack.c.b16 %v2868, %v2864
    %v3161 = vpack.c.b16 %v2873, %v2869
    %v3162 = vpack.c.b16 %v2874, %v2870
    %v3163 = vpack.c.b16 %v2875, %v2871
    %v3164 = vpack.c.b16 %v2876, %v2872
    %v3165 = vpack.c.b16 %v2881, %v2877
    %v3166 = vpack.c.b16 %v2882, %v2878
    %v3167 = vpack.c.b16 %v2883, %v2879
    %v3168 = vpack.c.b16 %v2884, %v2880
    %v3169 = vpack.c.b16 %v2889, %v2885
    %v3170 = vpack.c.b16 %v2890, %v2886
    %v3171 = vpack.c.b16 %v2891, %v2887
    %v3172 = vpack.c.b16 %v2892, %v2888
    %v3173 = vpack.c.b16 %v2897, %v2893
    %v3174 = vpack.c.b16 %v2898, %v2894
    %v3175 = vpack.c.b16 %v2899, %v2895
    %v3176 = vpack.c.b16 %v2900, %v2896
    %v3177 = vpack.c.b16 %v2901, %v2901
    %v3178 = vpack.c.b16 %v2902, %v2902
    %v3179 = vpack.c.b16 %v2903, %v2903
    %v3180 = vpack.c.b16 %v2904, %v2904
    %vm3453 = vcmask 556032
    %v3455 = vsel %vm3453, %v1798, 0
    %v3458 = vsel %vm1622, %v3177, 0
    %v3461 = vsel %vm1622, %v3178, 0
    %v3464 = vsel %vm1622, %v3179, 0
    %v3467 = vsel %vm1622, %v3180, 0
    %3469 = vmatpush.bf16.msra.mxu0 %v2933
    %3470 = vmatpush.bf16.msra.mxu0 %v2929
    %3471 = vmatpush.bf16.msra.mxu0 %v2925
    %3472 = vmatpush.bf16.msra.mxu0 %v2921
    %3473 = vmatpush.bf16.msra.mxu0 %v2917
    %3474 = vmatpush.bf16.msra.mxu0 %v2913
    %3475 = vmatpush.bf16.msra.mxu0 %v2909
    %3476 = vmatpush.bf16.msra.mxu0 %v2905
    %3477 = vmatmul.bf16.gmra.mxu0 %v1790
    %v3478 = vpop.f32.mrf.mxu0
    %v3479 = vadd.f32 %v2075, %v3478
    %v3480 = vpop.f32.mrf.mxu0
    %3481 = vdwg.mxu0
    %3482 = vmatpush.bf16.msra.mxu0 %v2965
    %3483 = vmatpush.bf16.msra.mxu0 %v2961
    %3484 = vmatpush.bf16.msra.mxu0 %v2957
    %3485 = vmatpush.bf16.msra.mxu0 %v2953
    %3486 = vmatpush.bf16.msra.mxu0 %v2949
    %3487 = vmatpush.bf16.msra.mxu0 %v2945
    %3488 = vmatpush.bf16.msra.mxu0 %v2941
    %3489 = vmatpush.bf16.msra.mxu0 %v2937
    %3490 = vmatmul.bf16.gmra.mxu0 %v1791
    %v3491 = vpop.f32.mrf.mxu0
    %v3492 = vadd.f32 %v3479, %v3491
    %v3493 = vpop.f32.mrf.mxu0
    %3494 = vdwg.mxu0
    %3495 = vmatpush.bf16.msra.mxu0 %v2997
    %3496 = vmatpush.bf16.msra.mxu0 %v2993
    %3497 = vmatpush.bf16.msra.mxu0 %v2989
    %3498 = vmatpush.bf16.msra.mxu0 %v2985
    %3499 = vmatpush.bf16.msra.mxu0 %v2981
    %3500 = vmatpush.bf16.msra.mxu0 %v2977
    %3501 = vmatpush.bf16.msra.mxu0 %v2973
    %3502 = vmatpush.bf16.msra.mxu0 %v2969
    %3503 = vmatmul.bf16.gmra.mxu0 %v1792
    %v3504 = vpop.f32.mrf.mxu0
    %v3505 = vadd.f32 %v3492, %v3504
    %v3506 = vpop.f32.mrf.mxu0
    %3507 = vdwg.mxu0
    %3508 = vmatpush.bf16.msra.mxu0 %v3029
    %3509 = vmatpush.bf16.msra.mxu0 %v3025
    %3510 = vmatpush.bf16.msra.mxu0 %v3021
    %3511 = vmatpush.bf16.msra.mxu0 %v3017
    %3512 = vmatpush.bf16.msra.mxu0 %v3013
    %3513 = vmatpush.bf16.msra.mxu0 %v3009
    %3514 = vmatpush.bf16.msra.mxu0 %v3005
    %3515 = vmatpush.bf16.msra.mxu0 %v3001
    %3516 = vmatmul.bf16.gmra.mxu0 %v1793
    %v3517 = vpop.f32.mrf.mxu0
    %v3518 = vadd.f32 %v3505, %v3517
    %v3519 = vpop.f32.mrf.mxu0
    %3520 = vdwg.mxu0
    %3521 = vmatpush.bf16.msra.mxu0 %v3061
    %3522 = vmatpush.bf16.msra.mxu0 %v3057
    %3523 = vmatpush.bf16.msra.mxu0 %v3053
    %3524 = vmatpush.bf16.msra.mxu0 %v3049
    %3525 = vmatpush.bf16.msra.mxu0 %v3045
    %3526 = vmatpush.bf16.msra.mxu0 %v3041
    %3527 = vmatpush.bf16.msra.mxu0 %v3037
    %3528 = vmatpush.bf16.msra.mxu0 %v3033
    %3529 = vmatmul.bf16.gmra.mxu0 %v1794
    %v3530 = vpop.f32.mrf.mxu0
    %v3531 = vadd.f32 %v3518, %v3530
    %v3532 = vpop.f32.mrf.mxu0
    %3533 = vdwg.mxu0
    %3534 = vmatpush.bf16.msra.mxu0 %v3093
    %3535 = vmatpush.bf16.msra.mxu0 %v3089
    %3536 = vmatpush.bf16.msra.mxu0 %v3085
    %3537 = vmatpush.bf16.msra.mxu0 %v3081
    %3538 = vmatpush.bf16.msra.mxu0 %v3077
    %3539 = vmatpush.bf16.msra.mxu0 %v3073
    %3540 = vmatpush.bf16.msra.mxu0 %v3069
    %3541 = vmatpush.bf16.msra.mxu0 %v3065
    %3542 = vmatmul.bf16.gmra.mxu0 %v1795
    %v3543 = vpop.f32.mrf.mxu0
    %v3544 = vadd.f32 %v3531, %v3543
    %v3545 = vpop.f32.mrf.mxu0
    %3546 = vdwg.mxu0
    %3547 = vmatpush.bf16.msra.mxu0 %v3125
    %3548 = vmatpush.bf16.msra.mxu0 %v3121
    %3549 = vmatpush.bf16.msra.mxu0 %v3117
    %3550 = vmatpush.bf16.msra.mxu0 %v3113
    %3551 = vmatpush.bf16.msra.mxu0 %v3109
    %3552 = vmatpush.bf16.msra.mxu0 %v3105
    %3553 = vmatpush.bf16.msra.mxu0 %v3101
    %3554 = vmatpush.bf16.msra.mxu0 %v3097
    %3555 = vmatmul.bf16.gmra.mxu0 %v1796
    %v3556 = vpop.f32.mrf.mxu0
    %v3557 = vadd.f32 %v3544, %v3556
    %v3558 = vpop.f32.mrf.mxu0
    %3559 = vdwg.mxu0
    %3560 = vmatpush.bf16.msra.mxu0 %v3157
    %3561 = vmatpush.bf16.msra.mxu0 %v3153
    %3562 = vmatpush.bf16.msra.mxu0 %v3149
    %3563 = vmatpush.bf16.msra.mxu0 %v3145
    %3564 = vmatpush.bf16.msra.mxu0 %v3141
    %3565 = vmatpush.bf16.msra.mxu0 %v3137
    %3566 = vmatpush.bf16.msra.mxu0 %v3133
    %3567 = vmatpush.bf16.msra.mxu0 %v3129
    %3568 = vmatmul.bf16.gmra.mxu0 %v1797
    %v3569 = vpop.f32.mrf.mxu0
    %v3570 = vadd.f32 %v3557, %v3569
    %v3571 = vpop.f32.mrf.mxu0
    %3572 = vdwg.mxu0
    %3573 = vmatpush.bf16.msra.mxu0 0
    %3574 = vmatpush.bf16.msra.mxu0 0
    %3575 = vmatpush.bf16.msra.mxu0 0
    %3576 = vmatpush.bf16.msra.mxu0 %v3458
    %3577 = vmatpush.bf16.msra.mxu0 %v3173
    %3578 = vmatpush.bf16.msra.mxu0 %v3169
    %3579 = vmatpush.bf16.msra.mxu0 %v3165
    %3580 = vmatpush.bf16.msra.mxu0 %v3161
    %3581 = vmatmul.bf16.gmra.mxu0 %v3455
    %v3582 = vpop.f32.mrf.mxu0
    %v3583 = vadd.f32 %v3570, %v3582
    %v3584 = vpop.f32.mrf.mxu0
    %3585 = vdwg.mxu0
    %3586 = vmatpush.bf16.msra.mxu0 %v2934
    %3587 = vmatpush.bf16.msra.mxu0 %v2930
    %3588 = vmatpush.bf16.msra.mxu0 %v2926
    %3589 = vmatpush.bf16.msra.mxu0 %v2922
    %3590 = vmatpush.bf16.msra.mxu0 %v2918
    %3591 = vmatpush.bf16.msra.mxu0 %v2914
    %3592 = vmatpush.bf16.msra.mxu0 %v2910
    %3593 = vmatpush.bf16.msra.mxu0 %v2906
    %3594 = vmatmul.bf16.gmra.mxu0 %v1790
    %v3595 = vpop.f32.mrf.mxu0
    %v3596 = vadd.f32 %v2076, %v3595
    %v3597 = vpop.f32.mrf.mxu0
    %3598 = vdwg.mxu0
    %3599 = vmatpush.bf16.msra.mxu0 %v2966
    %3600 = vmatpush.bf16.msra.mxu0 %v2962
    %3601 = vmatpush.bf16.msra.mxu0 %v2958
    %3602 = vmatpush.bf16.msra.mxu0 %v2954
    %3603 = vmatpush.bf16.msra.mxu0 %v2950
    %3604 = vmatpush.bf16.msra.mxu0 %v2946
    %3605 = vmatpush.bf16.msra.mxu0 %v2942
    %3606 = vmatpush.bf16.msra.mxu0 %v2938
    %3607 = vmatmul.bf16.gmra.mxu0 %v1791
    %v3608 = vpop.f32.mrf.mxu0
    %v3609 = vadd.f32 %v3596, %v3608
    %v3610 = vpop.f32.mrf.mxu0
    %3611 = vdwg.mxu0
    %3612 = vmatpush.bf16.msra.mxu0 %v2998
    %3613 = vmatpush.bf16.msra.mxu0 %v2994
    %3614 = vmatpush.bf16.msra.mxu0 %v2990
    %3615 = vmatpush.bf16.msra.mxu0 %v2986
    %3616 = vmatpush.bf16.msra.mxu0 %v2982
    %3617 = vmatpush.bf16.msra.mxu0 %v2978
    %3618 = vmatpush.bf16.msra.mxu0 %v2974
    %3619 = vmatpush.bf16.msra.mxu0 %v2970
    %3620 = vmatmul.bf16.gmra.mxu0 %v1792
    %v3621 = vpop.f32.mrf.mxu0
    %v3622 = vadd.f32 %v3609, %v3621
    %v3623 = vpop.f32.mrf.mxu0
    %3624 = vdwg.mxu0
    %3625 = vmatpush.bf16.msra.mxu0 %v3030
    %3626 = vmatpush.bf16.msra.mxu0 %v3026
    %3627 = vmatpush.bf16.msra.mxu0 %v3022
    %3628 = vmatpush.bf16.msra.mxu0 %v3018
    %3629 = vmatpush.bf16.msra.mxu0 %v3014
    %3630 = vmatpush.bf16.msra.mxu0 %v3010
    %3631 = vmatpush.bf16.msra.mxu0 %v3006
    %3632 = vmatpush.bf16.msra.mxu0 %v3002
    %3633 = vmatmul.bf16.gmra.mxu0 %v1793
    %v3634 = vpop.f32.mrf.mxu0
    %v3635 = vadd.f32 %v3622, %v3634
    %v3636 = vpop.f32.mrf.mxu0
    %3637 = vdwg.mxu0
    %3638 = vmatpush.bf16.msra.mxu0 %v3062
    %3639 = vmatpush.bf16.msra.mxu0 %v3058
    %3640 = vmatpush.bf16.msra.mxu0 %v3054
    %3641 = vmatpush.bf16.msra.mxu0 %v3050
    %3642 = vmatpush.bf16.msra.mxu0 %v3046
    %3643 = vmatpush.bf16.msra.mxu0 %v3042
    %3644 = vmatpush.bf16.msra.mxu0 %v3038
    %3645 = vmatpush.bf16.msra.mxu0 %v3034
    %3646 = vmatmul.bf16.gmra.mxu0 %v1794
    %v3647 = vpop.f32.mrf.mxu0
    %v3648 = vadd.f32 %v3635, %v3647
    %v3649 = vpop.f32.mrf.mxu0
    %3650 = vdwg.mxu0
    %3651 = vmatpush.bf16.msra.mxu0 %v3094
    %3652 = vmatpush.bf16.msra.mxu0 %v3090
    %3653 = vmatpush.bf16.msra.mxu0 %v3086
    %3654 = vmatpush.bf16.msra.mxu0 %v3082
    %3655 = vmatpush.bf16.msra.mxu0 %v3078
    %3656 = vmatpush.bf16.msra.mxu0 %v3074
    %3657 = vmatpush.bf16.msra.mxu0 %v3070
    %3658 = vmatpush.bf16.msra.mxu0 %v3066
    %3659 = vmatmul.bf16.gmra.mxu0 %v1795
    %v3660 = vpop.f32.mrf.mxu0
    %v3661 = vadd.f32 %v3648, %v3660
    %v3662 = vpop.f32.mrf.mxu0
    %3663 = vdwg.mxu0
    %3664 = vmatpush.bf16.msra.mxu0 %v3126
    %3665 = vmatpush.bf16.msra.mxu0 %v3122
    %3666 = vmatpush.bf16.msra.mxu0 %v3118
    %3667 = vmatpush.bf16.msra.mxu0 %v3114
    %3668 = vmatpush.bf16.msra.mxu0 %v3110
    %3669 = vmatpush.bf16.msra.mxu0 %v3106
    %3670 = vmatpush.bf16.msra.mxu0 %v3102
    %3671 = vmatpush.bf16.msra.mxu0 %v3098
    %3672 = vmatmul.bf16.gmra.mxu0 %v1796
    %v3673 = vpop.f32.mrf.mxu0
    %v3674 = vadd.f32 %v3661, %v3673
    %v3675 = vpop.f32.mrf.mxu0
    %3676 = vdwg.mxu0
    %3677 = vmatpush.bf16.msra.mxu0 %v3158
    %3678 = vmatpush.bf16.msra.mxu0 %v3154
    %3679 = vmatpush.bf16.msra.mxu0 %v3150
    %3680 = vmatpush.bf16.msra.mxu0 %v3146
    %3681 = vmatpush.bf16.msra.mxu0 %v3142
    %3682 = vmatpush.bf16.msra.mxu0 %v3138
    %3683 = vmatpush.bf16.msra.mxu0 %v3134
    %3684 = vmatpush.bf16.msra.mxu0 %v3130
    %3685 = vmatmul.bf16.gmra.mxu0 %v1797
    %v3686 = vpop.f32.mrf.mxu0
    %v3687 = vadd.f32 %v3674, %v3686
    %v3688 = vpop.f32.mrf.mxu0
    %3689 = vdwg.mxu0
    %3690 = vmatpush.bf16.msra.mxu0 0
    %3691 = vmatpush.bf16.msra.mxu0 0
    %3692 = vmatpush.bf16.msra.mxu0 0
    %3693 = vmatpush.bf16.msra.mxu0 %v3461
    %3694 = vmatpush.bf16.msra.mxu0 %v3174
    %3695 = vmatpush.bf16.msra.mxu0 %v3170
    %3696 = vmatpush.bf16.msra.mxu0 %v3166
    %3697 = vmatpush.bf16.msra.mxu0 %v3162
    %3698 = vmatmul.bf16.gmra.mxu0 %v3455
    %v3699 = vpop.f32.mrf.mxu0
    %v3700 = vadd.f32 %v3687, %v3699
    %v3701 = vpop.f32.mrf.mxu0
    %3702 = vdwg.mxu0
    %3703 = vmatpush.bf16.msra.mxu0 %v2935
    %3704 = vmatpush.bf16.msra.mxu0 %v2931
    %3705 = vmatpush.bf16.msra.mxu0 %v2927
    %3706 = vmatpush.bf16.msra.mxu0 %v2923
    %3707 = vmatpush.bf16.msra.mxu0 %v2919
    %3708 = vmatpush.bf16.msra.mxu0 %v2915
    %3709 = vmatpush.bf16.msra.mxu0 %v2911
    %3710 = vmatpush.bf16.msra.mxu0 %v2907
    %3711 = vmatmul.bf16.gmra.mxu0 %v1790
    %v3712 = vpop.f32.mrf.mxu0
    %v3713 = vadd.f32 %v2077, %v3712
    %v3714 = vpop.f32.mrf.mxu0
    %3715 = vdwg.mxu0
    %3716 = vmatpush.bf16.msra.mxu0 %v2967
    %3717 = vmatpush.bf16.msra.mxu0 %v2963
    %3718 = vmatpush.bf16.msra.mxu0 %v2959
    %3719 = vmatpush.bf16.msra.mxu0 %v2955
    %3720 = vmatpush.bf16.msra.mxu0 %v2951
    %3721 = vmatpush.bf16.msra.mxu0 %v2947
    %3722 = vmatpush.bf16.msra.mxu0 %v2943
    %3723 = vmatpush.bf16.msra.mxu0 %v2939
    %3724 = vmatmul.bf16.gmra.mxu0 %v1791
    %v3725 = vpop.f32.mrf.mxu0
    %v3726 = vadd.f32 %v3713, %v3725
    %v3727 = vpop.f32.mrf.mxu0
    %3728 = vdwg.mxu0
    %3729 = vmatpush.bf16.msra.mxu0 %v2999
    %3730 = vmatpush.bf16.msra.mxu0 %v2995
    %3731 = vmatpush.bf16.msra.mxu0 %v2991
    %3732 = vmatpush.bf16.msra.mxu0 %v2987
    %3733 = vmatpush.bf16.msra.mxu0 %v2983
    %3734 = vmatpush.bf16.msra.mxu0 %v2979
    %3735 = vmatpush.bf16.msra.mxu0 %v2975
    %3736 = vmatpush.bf16.msra.mxu0 %v2971
    %3737 = vmatmul.bf16.gmra.mxu0 %v1792
    %v3738 = vpop.f32.mrf.mxu0
    %v3739 = vadd.f32 %v3726, %v3738
    %v3740 = vpop.f32.mrf.mxu0
    %3741 = vdwg.mxu0
    %3742 = vmatpush.bf16.msra.mxu0 %v3031
    %3743 = vmatpush.bf16.msra.mxu0 %v3027
    %3744 = vmatpush.bf16.msra.mxu0 %v3023
    %3745 = vmatpush.bf16.msra.mxu0 %v3019
    %3746 = vmatpush.bf16.msra.mxu0 %v3015
    %3747 = vmatpush.bf16.msra.mxu0 %v3011
    %3748 = vmatpush.bf16.msra.mxu0 %v3007
    %3749 = vmatpush.bf16.msra.mxu0 %v3003
    %3750 = vmatmul.bf16.gmra.mxu0 %v1793
    %v3751 = vpop.f32.mrf.mxu0
    %v3752 = vadd.f32 %v3739, %v3751
    %v3753 = vpop.f32.mrf.mxu0
    %3754 = vdwg.mxu0
    %3755 = vmatpush.bf16.msra.mxu0 %v3063
    %3756 = vmatpush.bf16.msra.mxu0 %v3059
    %3757 = vmatpush.bf16.msra.mxu0 %v3055
    %3758 = vmatpush.bf16.msra.mxu0 %v3051
    %3759 = vmatpush.bf16.msra.mxu0 %v3047
    %3760 = vmatpush.bf16.msra.mxu0 %v3043
    %3761 = vmatpush.bf16.msra.mxu0 %v3039
    %3762 = vmatpush.bf16.msra.mxu0 %v3035
    %3763 = vmatmul.bf16.gmra.mxu0 %v1794
    %v3764 = vpop.f32.mrf.mxu0
    %v3765 = vadd.f32 %v3752, %v3764
    %v3766 = vpop.f32.mrf.mxu0
    %3767 = vdwg.mxu0
    %3768 = vmatpush.bf16.msra.mxu0 %v3095
    %3769 = vmatpush.bf16.msra.mxu0 %v3091
    %3770 = vmatpush.bf16.msra.mxu0 %v3087
    %3771 = vmatpush.bf16.msra.mxu0 %v3083
    %3772 = vmatpush.bf16.msra.mxu0 %v3079
    %3773 = vmatpush.bf16.msra.mxu0 %v3075
    %3774 = vmatpush.bf16.msra.mxu0 %v3071
    %3775 = vmatpush.bf16.msra.mxu0 %v3067
    %3776 = vmatmul.bf16.gmra.mxu0 %v1795
    %v3777 = vpop.f32.mrf.mxu0
    %v3778 = vadd.f32 %v3765, %v3777
    %v3779 = vpop.f32.mrf.mxu0
    %3780 = vdwg.mxu0
    %3781 = vmatpush.bf16.msra.mxu0 %v3127
    %3782 = vmatpush.bf16.msra.mxu0 %v3123
    %3783 = vmatpush.bf16.msra.mxu0 %v3119
    %3784 = vmatpush.bf16.msra.mxu0 %v3115
    %3785 = vmatpush.bf16.msra.mxu0 %v3111
    %3786 = vmatpush.bf16.msra.mxu0 %v3107
    %3787 = vmatpush.bf16.msra.mxu0 %v3103
    %3788 = vmatpush.bf16.msra.mxu0 %v3099
    %3789 = vmatmul.bf16.gmra.mxu0 %v1796
    %v3790 = vpop.f32.mrf.mxu0
    %v3791 = vadd.f32 %v3778, %v3790
    %v3792 = vpop.f32.mrf.mxu0
    %3793 = vdwg.mxu0
    %3794 = vmatpush.bf16.msra.mxu0 %v3159
    %3795 = vmatpush.bf16.msra.mxu0 %v3155
    %3796 = vmatpush.bf16.msra.mxu0 %v3151
    %3797 = vmatpush.bf16.msra.mxu0 %v3147
    %3798 = vmatpush.bf16.msra.mxu0 %v3143
    %3799 = vmatpush.bf16.msra.mxu0 %v3139
    %3800 = vmatpush.bf16.msra.mxu0 %v3135
    %3801 = vmatpush.bf16.msra.mxu0 %v3131
    %3802 = vmatmul.bf16.gmra.mxu0 %v1797
    %v3803 = vpop.f32.mrf.mxu0
    %v3804 = vadd.f32 %v3791, %v3803
    %v3805 = vpop.f32.mrf.mxu0
    %3806 = vdwg.mxu0
    %3807 = vmatpush.bf16.msra.mxu0 0
    %3808 = vmatpush.bf16.msra.mxu0 0
    %3809 = vmatpush.bf16.msra.mxu0 0
    %3810 = vmatpush.bf16.msra.mxu0 %v3464
    %3811 = vmatpush.bf16.msra.mxu0 %v3175
    %3812 = vmatpush.bf16.msra.mxu0 %v3171
    %3813 = vmatpush.bf16.msra.mxu0 %v3167
    %3814 = vmatpush.bf16.msra.mxu0 %v3163
    %3815 = vmatmul.bf16.gmra.mxu0 %v3455
    %v3816 = vpop.f32.mrf.mxu0
    %v3817 = vadd.f32 %v3804, %v3816
    %v3818 = vpop.f32.mrf.mxu0
    %3819 = vdwg.mxu0
    %3820 = vmatpush.bf16.msra.mxu0 %v2936
    %3821 = vmatpush.bf16.msra.mxu0 %v2932
    %3822 = vmatpush.bf16.msra.mxu0 %v2928
    %3823 = vmatpush.bf16.msra.mxu0 %v2924
    %3824 = vmatpush.bf16.msra.mxu0 %v2920
    %3825 = vmatpush.bf16.msra.mxu0 %v2916
    %3826 = vmatpush.bf16.msra.mxu0 %v2912
    %3827 = vmatpush.bf16.msra.mxu0 %v2908
    %3828 = vmatmul.bf16.gmra.mxu0 %v1790
    %v3829 = vpop.f32.mrf.mxu0
    %v3830 = vadd.f32 %v2078, %v3829
    %v3831 = vpop.f32.mrf.mxu0
    %3832 = vdwg.mxu0
    %3833 = vmatpush.bf16.msra.mxu0 %v2968
    %3834 = vmatpush.bf16.msra.mxu0 %v2964
    %3835 = vmatpush.bf16.msra.mxu0 %v2960
    %3836 = vmatpush.bf16.msra.mxu0 %v2956
    %3837 = vmatpush.bf16.msra.mxu0 %v2952
    %3838 = vmatpush.bf16.msra.mxu0 %v2948
    %3839 = vmatpush.bf16.msra.mxu0 %v2944
    %3840 = vmatpush.bf16.msra.mxu0 %v2940
    %3841 = vmatmul.bf16.gmra.mxu0 %v1791
    %v3842 = vpop.f32.mrf.mxu0
    %v3843 = vadd.f32 %v3830, %v3842
    %v3844 = vpop.f32.mrf.mxu0
    %3845 = vdwg.mxu0
    %3846 = vmatpush.bf16.msra.mxu0 %v3000
    %3847 = vmatpush.bf16.msra.mxu0 %v2996
    %3848 = vmatpush.bf16.msra.mxu0 %v2992
    %3849 = vmatpush.bf16.msra.mxu0 %v2988
    %3850 = vmatpush.bf16.msra.mxu0 %v2984
    %3851 = vmatpush.bf16.msra.mxu0 %v2980
    %3852 = vmatpush.bf16.msra.mxu0 %v2976
    %3853 = vmatpush.bf16.msra.mxu0 %v2972
    %3854 = vmatmul.bf16.gmra.mxu0 %v1792
    %v3855 = vpop.f32.mrf.mxu0
    %v3856 = vadd.f32 %v3843, %v3855
    %v3857 = vpop.f32.mrf.mxu0
    %3858 = vdwg.mxu0
    %3859 = vmatpush.bf16.msra.mxu0 %v3032
    %3860 = vmatpush.bf16.msra.mxu0 %v3028
    %3861 = vmatpush.bf16.msra.mxu0 %v3024
    %3862 = vmatpush.bf16.msra.mxu0 %v3020
    %3863 = vmatpush.bf16.msra.mxu0 %v3016
    %3864 = vmatpush.bf16.msra.mxu0 %v3012
    %3865 = vmatpush.bf16.msra.mxu0 %v3008
    %3866 = vmatpush.bf16.msra.mxu0 %v3004
    %3867 = vmatmul.bf16.gmra.mxu0 %v1793
    %v3868 = vpop.f32.mrf.mxu0
    %v3869 = vadd.f32 %v3856, %v3868
    %v3870 = vpop.f32.mrf.mxu0
    %3871 = vdwg.mxu0
    %3872 = vmatpush.bf16.msra.mxu0 %v3064
    %3873 = vmatpush.bf16.msra.mxu0 %v3060
    %3874 = vmatpush.bf16.msra.mxu0 %v3056
    %3875 = vmatpush.bf16.msra.mxu0 %v3052
    %3876 = vmatpush.bf16.msra.mxu0 %v3048
    %3877 = vmatpush.bf16.msra.mxu0 %v3044
    %3878 = vmatpush.bf16.msra.mxu0 %v3040
    %3879 = vmatpush.bf16.msra.mxu0 %v3036
    %3880 = vmatmul.bf16.gmra.mxu0 %v1794
    %v3881 = vpop.f32.mrf.mxu0
    %v3882 = vadd.f32 %v3869, %v3881
    %v3883 = vpop.f32.mrf.mxu0
    %3884 = vdwg.mxu0
    %3885 = vmatpush.bf16.msra.mxu0 %v3096
    %3886 = vmatpush.bf16.msra.mxu0 %v3092
    %3887 = vmatpush.bf16.msra.mxu0 %v3088
    %3888 = vmatpush.bf16.msra.mxu0 %v3084
    %3889 = vmatpush.bf16.msra.mxu0 %v3080
    %3890 = vmatpush.bf16.msra.mxu0 %v3076
    %3891 = vmatpush.bf16.msra.mxu0 %v3072
    %3892 = vmatpush.bf16.msra.mxu0 %v3068
    %3893 = vmatmul.bf16.gmra.mxu0 %v1795
    %v3894 = vpop.f32.mrf.mxu0
    %v3895 = vadd.f32 %v3882, %v3894
    %v3896 = vpop.f32.mrf.mxu0
    %3897 = vdwg.mxu0
    %3898 = vmatpush.bf16.msra.mxu0 %v3128
    %3899 = vmatpush.bf16.msra.mxu0 %v3124
    %3900 = vmatpush.bf16.msra.mxu0 %v3120
    %3901 = vmatpush.bf16.msra.mxu0 %v3116
    %3902 = vmatpush.bf16.msra.mxu0 %v3112
    %3903 = vmatpush.bf16.msra.mxu0 %v3108
    %3904 = vmatpush.bf16.msra.mxu0 %v3104
    %3905 = vmatpush.bf16.msra.mxu0 %v3100
    %3906 = vmatmul.bf16.gmra.mxu0 %v1796
    %v3907 = vpop.f32.mrf.mxu0
    %v3908 = vadd.f32 %v3895, %v3907
    %v3909 = vpop.f32.mrf.mxu0
    %3910 = vdwg.mxu0
    %3911 = vmatpush.bf16.msra.mxu0 %v3160
    %3912 = vmatpush.bf16.msra.mxu0 %v3156
    %3913 = vmatpush.bf16.msra.mxu0 %v3152
    %3914 = vmatpush.bf16.msra.mxu0 %v3148
    %3915 = vmatpush.bf16.msra.mxu0 %v3144
    %3916 = vmatpush.bf16.msra.mxu0 %v3140
    %3917 = vmatpush.bf16.msra.mxu0 %v3136
    %3918 = vmatpush.bf16.msra.mxu0 %v3132
    %3919 = vmatmul.bf16.gmra.mxu0 %v1797
    %v3920 = vpop.f32.mrf.mxu0
    %v3921 = vadd.f32 %v3908, %v3920
    %v3922 = vpop.f32.mrf.mxu0
    %3923 = vdwg.mxu0
    %3924 = vmatpush.bf16.msra.mxu0 0
    %3925 = vmatpush.bf16.msra.mxu0 0
    %3926 = vmatpush.bf16.msra.mxu0 0
    %3927 = vmatpush.bf16.msra.mxu0 %v3467
    %3928 = vmatpush.bf16.msra.mxu0 %v3176
    %3929 = vmatpush.bf16.msra.mxu0 %v3172
    %3930 = vmatpush.bf16.msra.mxu0 %v3168
    %3931 = vmatpush.bf16.msra.mxu0 %v3164
    %3932 = vmatmul.bf16.gmra.mxu0 %v3455
    %v3933 = vpop.f32.mrf.mxu0
    %v3934 = vadd.f32 %v3921, %v3933
    %v3935 = vpop.f32.mrf.mxu0
    %3936 = vdwg.mxu0
    %v3937 = vmax.f32 %v3583, 0.0
    %v3938 = vmax.f32 %v3700, 0.0
    %v3939 = vmax.f32 %v3817, 0.0
    %v3940 = vmax.f32 %v3934, 0.0
    %v3941 = vsel %vm1622, %v3937, 0.0
    %v3942 = vrot.slane %v3941, 4
    %v3943 = vadd.f32 %v3941, %v3942
    %v3944 = vrot.slane %v3943, 2
    %v3945 = vadd.f32 %v3943, %v3944
    %v3946 = vrot.slane %v3945, 1
    %v3947 = vadd.f32 %v3945, %v3946
    %v3948 = vsel %vm1622, %v3938, 0.0
    %v3949 = vrot.slane %v3948, 4
    %v3950 = vadd.f32 %v3948, %v3949
    %v3951 = vrot.slane %v3950, 2
    %v3952 = vadd.f32 %v3950, %v3951
    %v3953 = vrot.slane %v3952, 1
    %v3954 = vadd.f32 %v3952, %v3953
    %v3955 = vsel %vm1622, %v3939, 0.0
    %v3956 = vrot.slane %v3955, 4
    %v3957 = vadd.f32 %v3955, %v3956
    %v3958 = vrot.slane %v3957, 2
    %v3959 = vadd.f32 %v3957, %v3958
    %v3960 = vrot.slane %v3959, 1
    %v3961 = vadd.f32 %v3959, %v3960
    %v3962 = vsel %vm1622, %v3940, 0.0
    %v3963 = vrot.slane %v3962, 4
    %v3964 = vadd.f32 %v3962, %v3963
    %v3965 = vrot.slane %v3964, 2
    %v3966 = vadd.f32 %v3964, %v3965
    %v3967 = vrot.slane %v3966, 1
    %v3968 = vadd.f32 %v3966, %v3967
    %v3969 = vrcp.pop 2.0
    %v3970 = vmul.f32 2.0, %v3969
    %v3971 = vsub.f32 1.0, %v3970
    %v3972 = vmul.f32 %v3969, %v3971
    %v3973 = vadd.f32 %v3969, %v3972
    %vm3974 = vweird.f32 %v3969
    %v3975 = vsel %vm3974, %v3969, %v3973
    %v3976 = vmul.f32 %v3947, %v3975
    %v3977 = vmul.f32 %v3954, %v3975
    %v3978 = vmul.f32 %v3961, %v3975
    %v3979 = vmul.f32 %v3968, %v3975
    %v3980 = vmul.f32 %v3937, %v3937
    %v3981 = vmul.f32 %v3938, %v3938
    %v3982 = vmul.f32 %v3939, %v3939
    %v3983 = vmul.f32 %v3940, %v3940
    %v3984 = vsel %vm1622, %v3980, 0.0
    %v3985 = vrot.slane %v3984, 4
    %v3986 = vadd.f32 %v3984, %v3985
    %v3987 = vrot.slane %v3986, 2
    %v3988 = vadd.f32 %v3986, %v3987
    %v3989 = vrot.slane %v3988, 1
    %v3990 = vadd.f32 %v3988, %v3989
    %v3991 = vsel %vm1622, %v3981, 0.0
    %v3992 = vrot.slane %v3991, 4
    %v3993 = vadd.f32 %v3991, %v3992
    %v3994 = vrot.slane %v3993, 2
    %v3995 = vadd.f32 %v3993, %v3994
    %v3996 = vrot.slane %v3995, 1
    %v3997 = vadd.f32 %v3995, %v3996
    %v3998 = vsel %vm1622, %v3982, 0.0
    %v3999 = vrot.slane %v3998, 4
    %v4000 = vadd.f32 %v3998, %v3999
    %v4001 = vrot.slane %v4000, 2
    %v4002 = vadd.f32 %v4000, %v4001
    %v4003 = vrot.slane %v4002, 1
    %v4004 = vadd.f32 %v4002, %v4003
    %v4005 = vsel %vm1622, %v3983, 0.0
    %v4006 = vrot.slane %v4005, 4
    %v4007 = vadd.f32 %v4005, %v4006
    %v4008 = vrot.slane %v4007, 2
    %v4009 = vadd.f32 %v4007, %v4008
    %v4010 = vrot.slane %v4009, 1
    %v4011 = vadd.f32 %v4009, %v4010
    %v4012 = vmul.f32 %v3990, %v3975
    %v4013 = vmul.f32 %v3997, %v3975
    %v4014 = vmul.f32 %v4004, %v3975
    %v4015 = vmul.f32 %v4011, %v3975
    %v4016 = vmul.f32 %v3976, %v3976
    %v4017 = vmul.f32 %v3977, %v3977
    %v4018 = vmul.f32 %v3978, %v3978
    %v4019 = vmul.f32 %v3979, %v3979
    %v4020 = vsub.f32 %v4012, %v4016
    %v4021 = vsub.f32 %v4013, %v4017
    %v4022 = vsub.f32 %v4014, %v4018
    %v4023 = vsub.f32 %v4015, %v4019
    %v4024 = vmax.f32 %v4020, 0.0
    %v4025 = vmax.f32 %v4021, 0.0
    %v4026 = vmax.f32 %v4022, 0.0
    %v4027 = vmax.f32 %v4023, 0.0
    %v4028 = vld [vmem:[%s15] sm:$0xf]
    %v4029 = vadd.f32 %v4024, 1e-05
    %v4030 = vadd.f32 %v4025, 1e-05
    %v4031 = vadd.f32 %v4026, 1e-05
    %v4032 = vadd.f32 %v4027, 1e-05
    %v4033 = vrsqrt.pop %v4029
    %v4034 = vmul.f32 %v4033, %v4029
    %v4035 = vmul.f32 %v4034, %v4033
    %v4036 = vmul.f32 0.5, %v4035
    %v4037 = vsub.f32 1.5, %v4036
    %v4038 = vmul.f32 %v4033, %v4037
    %vm4039 = vweird.f32 %v4029
    %vm4040 = vweird.f32 %v4033
    %vm4041 = vmor %vm4039, %vm4040
    %v4042 = vsel %vm4041, %v4033, %v4038
    %v4043 = vrsqrt.pop %v4030
    %v4044 = vmul.f32 %v4043, %v4030
    %v4045 = vmul.f32 %v4044, %v4043
    %v4046 = vmul.f32 0.5, %v4045
    %v4047 = vsub.f32 1.5, %v4046
    %v4048 = vmul.f32 %v4043, %v4047
    %vm4049 = vweird.f32 %v4030
    %vm4050 = vweird.f32 %v4043
    %vm4051 = vmor %vm4049, %vm4050
    %v4052 = vsel %vm4051, %v4043, %v4048
    %v4053 = vrsqrt.pop %v4031
    %v4054 = vmul.f32 %v4053, %v4031
    %v4055 = vmul.f32 %v4054, %v4053
    %v4056 = vmul.f32 0.5, %v4055
    %v4057 = vsub.f32 1.5, %v4056
    %v4058 = vmul.f32 %v4053, %v4057
    %vm4059 = vweird.f32 %v4031
    %vm4060 = vweird.f32 %v4053
    %vm4061 = vmor %vm4059, %vm4060
    %v4062 = vsel %vm4061, %v4053, %v4058
    %v4063 = vrsqrt.pop %v4032
    %v4064 = vmul.f32 %v4063, %v4032
    %v4065 = vmul.f32 %v4064, %v4063
    %v4066 = vmul.f32 0.5, %v4065
    %v4067 = vsub.f32 1.5, %v4066
    %v4068 = vmul.f32 %v4063, %v4067
    %vm4069 = vweird.f32 %v4032
    %vm4070 = vweird.f32 %v4063
    %vm4071 = vmor %vm4069, %vm4070
    %v4072 = vsel %vm4071, %v4063, %v4068
    %v4077 = vrot.slane %v4052, 7
    %v4078 = vrot.slane %v4062, 6
    %v4079 = vrot.slane %v4072, 5
    %v4080 = vsel %vm89, %v4042, %v4077
    %vm4081 = vcmask 1042434
    %v4082 = vsel %vm4081, %v4078, %v4079
    %v4083 = vsel %vm1622, %v4080, %v4082
    %v4085 = vmul.f32 %v4028, %v4083
    %v4087 = vperm.slane %v4085, 0
    %v4088 = vperm.slane %v4085, 1
    %v4089 = vperm.slane %v4085, 2
    %v4090 = vperm.slane %v4085, 3
    %v4095 = vmul.f32 %v3937, %v4087
    %v4096 = vmul.f32 %v3938, %v4088
    %v4097 = vmul.f32 %v3939, %v4089
    %v4098 = vmul.f32 %v3940, %v4090
    %v4099 = vld [vmem:[%s16] sm:$0xf]
    %v4100 = vmul.f32 %v3976, %v4087
    %v4101 = vmul.f32 %v3977, %v4088
    %v4102 = vmul.f32 %v3978, %v4089
    %v4103 = vmul.f32 %v3979, %v4090
    %v4108 = vrot.slane %v4101, 7
    %v4109 = vrot.slane %v4102, 6
    %v4110 = vrot.slane %v4103, 5
    %v4111 = vsel %vm89, %v4100, %v4108
    %v4112 = vsel %vm4081, %v4109, %v4110
    %v4113 = vsel %vm1622, %v4111, %v4112
    %v4115 = vsub.f32 %v4099, %v4113
    %v4117 = vperm.slane %v4115, 0
    %v4118 = vperm.slane %v4115, 1
    %v4119 = vperm.slane %v4115, 2
    %v4120 = vperm.slane %v4115, 3
    %v4125 = vadd.f32 %v4095, %v4117
    %v4126 = vadd.f32 %v4096, %v4118
    %v4127 = vadd.f32 %v4097, %v4119
    %v4128 = vadd.f32 %v4098, %v4120
    %v4129 = vld [vmem:[%s17] sm:$0xff]
    %v4130 = vld [vmem:[%s17 + $0x8] sm:$0xff]
    %v4131 = vld [vmem:[%s17 + $0x10] sm:$0xff]
    %v4132 = vld [vmem:[%s17 + $0x18] sm:$0xff]
    %v4133 = vld [vmem:[%s17 + $0x20] sm:$0xff]
    %v4134 = vld [vmem:[%s17 + $0x28] sm:$0xff]
    %v4135 = vld [vmem:[%s17 + $0x30] sm:$0xff]
    %v4136 = vld [vmem:[%s17 + $0x38] sm:$0xff]
    %v4137 = vld [vmem:[%s17 + $0x40] sm:$0xff]
    %v4138 = vld [vmem:[%s17 + $0x48] sm:$0xff]
    %v4139 = vld [vmem:[%s17 + $0x50] sm:$0xff]
    %v4140 = vld [vmem:[%s17 + $0x58] sm:$0xff]
    %v4141 = vld [vmem:[%s17 + $0x60] sm:$0xff]
    %v4142 = vld [vmem:[%s17 + $0x68] sm:$0xff]
    %v4143 = vld [vmem:[%s17 + $0x70] sm:$0xff]
    %v4144 = vld [vmem:[%s17 + $0x78] sm:$0xff]
    %v4145 = vld [vmem:[%s17 + $0x80] sm:$0xff]
    %v4146 = vld [vmem:[%s17 + $0x88] sm:$0xff]
    %v4147 = vld [vmem:[%s17 + $0x90] sm:$0xff]
    %v4148 = vld [vmem:[%s17 + $0x98] sm:$0xff]
    %v4149 = vld [vmem:[%s17 + $0xa0] sm:$0xff]
    %v4150 = vld [vmem:[%s17 + $0xa8] sm:$0xff]
    %v4151 = vld [vmem:[%s17 + $0xb0] sm:$0xff]
    %v4152 = vld [vmem:[%s17 + $0xb8] sm:$0xff]
    %v4153 = vld [vmem:[%s17 + $0xc0] sm:$0xff]
    %v4154 = vld [vmem:[%s17 + $0xc8] sm:$0xff]
    %v4155 = vld [vmem:[%s17 + $0xd0] sm:$0xff]
    %v4156 = vld [vmem:[%s17 + $0xd8] sm:$0xff]
    %v4157 = vld [vmem:[%s17 + $0xe0] sm:$0xff]
    %v4158 = vld [vmem:[%s17 + $0xe8] sm:$0xff]
    %v4159 = vld [vmem:[%s17 + $0xf0] sm:$0xff]
    %v4160 = vld [vmem:[%s17 + $0xf8] sm:$0xff]
    %v4161 = vld [vmem:[%s17 + $0x100] sm:$0xff]
    %v4162 = vld [vmem:[%s17 + $0x108] sm:$0xff]
    %v4163 = vld [vmem:[%s17 + $0x110] sm:$0xff]
    %v4164 = vld [vmem:[%s17 + $0x118] sm:$0xff]
    %v4165 = vld [vmem:[%s17 + $0x120] sm:$0xff]
    %v4166 = vld [vmem:[%s17 + $0x128] sm:$0xff]
    %v4167 = vld [vmem:[%s17 + $0x130] sm:$0xff]
    %v4168 = vld [vmem:[%s17 + $0x138] sm:$0xff]
    %v4169 = vld [vmem:[%s17 + $0x140] sm:$0xff]
    %v4170 = vld [vmem:[%s17 + $0x148] sm:$0xff]
    %v4171 = vld [vmem:[%s17 + $0x150] sm:$0xff]
    %v4172 = vld [vmem:[%s17 + $0x158] sm:$0xff]
    %v4173 = vld [vmem:[%s17 + $0x160] sm:$0xff]
    %v4174 = vld [vmem:[%s17 + $0x168] sm:$0xff]
    %v4175 = vld [vmem:[%s17 + $0x170] sm:$0xff]
    %v4176 = vld [vmem:[%s17 + $0x178] sm:$0xff]
    %v4177 = vld [vmem:[%s17 + $0x180] sm:$0xff]
    %v4178 = vld [vmem:[%s17 + $0x188] sm:$0xff]
    %v4179 = vld [vmem:[%s17 + $0x190] sm:$0xff]
    %v4180 = vld [vmem:[%s17 + $0x198] sm:$0xff]
    %v4181 = vld [vmem:[%s17 + $0x1a0] sm:$0xff]
    %v4182 = vld [vmem:[%s17 + $0x1a8] sm:$0xff]
    %v4183 = vld [vmem:[%s17 + $0x1b0] sm:$0xff]
    %v4184 = vld [vmem:[%s17 + $0x1b8] sm:$0xff]
    %v4185 = vld [vmem:[%s17 + $0x1c0] sm:$0xff]
    %v4186 = vld [vmem:[%s17 + $0x1c8] sm:$0xff]
    %v4187 = vld [vmem:[%s17 + $0x1d0] sm:$0xff]
    %v4188 = vld [vmem:[%s17 + $0x1d8] sm:$0xff]
    %v4189 = vld [vmem:[%s17 + $0x1e0] sm:$0xff]
    %v4190 = vld [vmem:[%s17 + $0x1e8] sm:$0xff]
    %v4191 = vld [vmem:[%s17 + $0x1f0] sm:$0xff]
    %v4192 = vld [vmem:[%s17 + $0x1f8] sm:$0xff]
    %v4193 = vld [vmem:[%s18] sm:$0x1]
    %v4195 = vperm.slane %v4193, 0
    %4197 = vmatpush.msra.mxu0 %v4144
    %4198 = vmatpush.msra.mxu0 %v4143
    %4199 = vmatpush.msra.mxu0 %v4142
    %4200 = vmatpush.msra.mxu0 %v4141
    %4201 = vmatpush.msra.mxu0 %v4140
    %4202 = vmatpush.msra.mxu0 %v4139
    %4203 = vmatpush.msra.mxu0 %v4138
    %4204 = vmatpush.msra.mxu0 %v4137
    %4205 = vmatpush.msra.mxu0 %v4136
    %4206 = vmatpush.msra.mxu0 %v4135
    %4207 = vmatpush.msra.mxu0 %v4134
    %4208 = vmatpush.msra.mxu0 %v4133
    %4209 = vmatpush.msra.mxu0 %v4132
    %4210 = vmatpush.msra.mxu0 %v4131
    %4211 = vmatpush.msra.mxu0 %v4130
    %4212 = vmatpush.msra.mxu0 %v4129
    %4213 = vmatmul.f32.gmra.mxu0 %v4125
    %v4214 = vpop.f32.mrf.mxu0
    %v4215 = vadd.f32 %v4195, %v4214
    %4216 = vdwg.mxu0
    %4217 = vmatpush.msra.mxu0 %v4160
    %4218 = vmatpush.msra.mxu0 %v4159
    %4219 = vmatpush.msra.mxu0 %v4158
    %4220 = vmatpush.msra.mxu0 %v4157
    %4221 = vmatpush.msra.mxu0 %v4156
    %4222 = vmatpush.msra.mxu0 %v4155
    %4223 = vmatpush.msra.mxu0 %v4154
    %4224 = vmatpush.msra.mxu0 %v4153
    %4225 = vmatpush.msra.mxu0 %v4152
    %4226 = vmatpush.msra.mxu0 %v4151
    %4227 = vmatpush.msra.mxu0 %v4150
    %4228 = vmatpush.msra.mxu0 %v4149
    %4229 = vmatpush.msra.mxu0 %v4148
    %4230 = vmatpush.msra.mxu0 %v4147
    %4231 = vmatpush.msra.mxu0 %v4146
    %4232 = vmatpush.msra.mxu0 %v4145
    %4233 = vmatmul.f32.gmra.mxu0 %v4126
    %v4234 = vpop.f32.mrf.mxu0
    %v4235 = vadd.f32 %v4215, %v4234
    %4236 = vdwg.mxu0
    %4237 = vmatpush.msra.mxu0 %v4176
    %4238 = vmatpush.msra.mxu0 %v4175
    %4239 = vmatpush.msra.mxu0 %v4174
    %4240 = vmatpush.msra.mxu0 %v4173
    %4241 = vmatpush.msra.mxu0 %v4172
    %4242 = vmatpush.msra.mxu0 %v4171
    %4243 = vmatpush.msra.mxu0 %v4170
    %4244 = vmatpush.msra.mxu0 %v4169
    %4245 = vmatpush.msra.mxu0 %v4168
    %4246 = vmatpush.msra.mxu0 %v4167
    %4247 = vmatpush.msra.mxu0 %v4166
    %4248 = vmatpush.msra.mxu0 %v4165
    %4249 = vmatpush.msra.mxu0 %v4164
    %4250 = vmatpush.msra.mxu0 %v4163
    %4251 = vmatpush.msra.mxu0 %v4162
    %4252 = vmatpush.msra.mxu0 %v4161
    %4253 = vmatmul.f32.gmra.mxu0 %v4127
    %v4254 = vpop.f32.mrf.mxu0
    %v4255 = vadd.f32 %v4235, %v4254
    %4256 = vdwg.mxu0
    %4257 = vmatpush.msra.mxu0 %v4192
    %4258 = vmatpush.msra.mxu0 %v4191
    %4259 = vmatpush.msra.mxu0 %v4190
    %4260 = vmatpush.msra.mxu0 %v4189
    %4261 = vmatpush.msra.mxu0 %v4188
    %4262 = vmatpush.msra.mxu0 %v4187
    %4263 = vmatpush.msra.mxu0 %v4186
    %4264 = vmatpush.msra.mxu0 %v4185
    %4265 = vmatpush.msra.mxu0 %v4184
    %4266 = vmatpush.msra.mxu0 %v4183
    %4267 = vmatpush.msra.mxu0 %v4182
    %4268 = vmatpush.msra.mxu0 %v4181
    %4269 = vmatpush.msra.mxu0 %v4180
    %4270 = vmatpush.msra.mxu0 %v4179
    %4271 = vmatpush.msra.mxu0 %v4178
    %4272 = vmatpush.msra.mxu0 %v4177
    %4273 = vmatmul.f32.gmra.mxu0 %v4128
    %v4274 = vpop.f32.mrf.mxu0
    %v4275 = vadd.f32 %v4255, %v4274
    %4276 = vdwg.mxu0
    %vm4277 = vcmask 74752
    %4278 = vst.msk [vmem:[#allocation8] sm:$0x3] %vm4277, %v4275
    // Predicated region
    $region78: #{cnn1d_forward.1} parent=1 // pred_check
      _
    $region79: #{cnn1d_forward.1} parent=1 // pred_check_branch
      %4280 = sbr.rel (0) target = $region81
    $region80: #{cnn1d_forward.1} parent=1 // pred_region
      %4282 = vsyncadd [#allocation9], 0
      %s4284 = sshll.u32 [#allocation8], 4
      %s4285 = int_to_ptr.vmem [resolvable:$true] %s4284
      %s4286 = sshll.u32 %s19, 4
      %s4287 = int_to_ptr.hbm [resolvable:$true] %s4286
      %4289 = dma.vmem_to_hbm [thread:$0]  %s4285, 32, %s4287, [#allocation9]
    $region81: #{cnn1d_forward.1} parent=1 // pred_fallthru
      _
    // Predicated region
    $region82: #{cnn1d_forward.1} parent=1 // pred_check
      _
    $region83: #{cnn1d_forward.1} parent=1 // pred_check_branch
      %4291 = sbr.rel (0) target = $region85
    $region84: #{cnn1d_forward.1} parent=1 // pred_region
      %4293 = dma.done [#allocation9], 32
    $region85: #{cnn1d_forward.1} parent=1 // pred_fallthru
      _
    %4294 = vsyncpa [#allocation9], 1

</llo_original>
